<compile_context>
chip_gen: v7x
topology: tpu7x:2x2x1
jax: 0.10.0
libtpu: 0.0.40
codegen_flags: <defaults>
</compile_context>

<pallas_src>
import functools

import jax
import jax.numpy as jnp
from jax.experimental import pallas as pl
from jax.experimental.pallas import tpu as pltpu


# ----------------------------- Pallas kernel --------------------------------

def _resblock_kernel(x_ref, w1_ref, w2_ref, lmask_ref, rmask_ref, *rest,
                     H, W, C, eps, act, norm):
    """Fused ResBlock for one image.

    x_ref     : (H, W, C)        unpadded input (batch dim squeezed), f32
    w*_ref    : (3, 3C, C)       conv weights, bf16; [kh][kw*C + cin][cout]
    lmask_ref : (H*W, 1)         f32 0/1 mask, 0 where w == 0
    rmask_ref : (H*W, 1)         f32 0/1 mask, 0 where w == W-1
    (b1, b2)  : (1, C)           only present when norm != 'in'
    o_ref     : (H, W, C)        output, f32
    s_ref     : ((H+2)*W, 3C)    bf16 VMEM "shift slab" scratch
    """
    if norm == "in":
        o_ref, s_ref = rest
        b1_ref = b2_ref = None
    else:
        b1_ref, b2_ref, o_ref, s_ref = rest

    HW = H * W

    # Zero only the slab's 1-row top/bottom padding bands (24 KiB @ bf16).
    # Done every grid step (not under program_id==0) so the kernel is correct
    # when the "parallel" batch axis is split across TensorCores.
    zrow = jnp.zeros((W, 3 * C), jnp.bfloat16)
    s_ref[0:W, :] = zrow
    s_ref[(H + 1) * W:(H + 2) * W, :] = zrow

    lmask = lmask_ref[...]                      # (HW, 1) f32
    rmask = rmask_ref[...]                      # (HW, 1) f32

    def fill_slab(hf):
        # hf: (HW, C) f32.  Lane group kw of slab row j holds xpad[j//W, j%W+kw]
        # for the zero-padded image.  The width shift is a +/-1 roll of the
        # flattened rows; the wrapped rows are exactly the image's left/right
        # edges and are zeroed by the 0/1 masks (zero padding).  All stores are
        # sublane/lane aligned.
        left = jnp.roll(hf, 1, axis=0) * lmask
        right = jnp.roll(hf, -1, axis=0) * rmask
        s_ref[W:(H + 1) * W, 0:C] = left.astype(jnp.bfloat16)
        s_ref[W:(H + 1) * W, C:2 * C] = hf.astype(jnp.bfloat16)
        s_ref[W:(H + 1) * W, 2 * C:3 * C] = right.astype(jnp.bfloat16)

    def conv3x3(w_ref):
        # 3 chained bf16 MXU dots, K = 3C; unbroken f32 accumulation chain.
        acc = jnp.dot(s_ref[0:HW, :], w_ref[0],
                      preferred_element_type=jnp.float32)
        acc = acc + jnp.dot(s_ref[W:W + HW, :], w_ref[1],
                            preferred_element_type=jnp.float32)
        acc = acc + jnp.dot(s_ref[2 * W:2 * W + HW, :], w_ref[2],
                            preferred_element_type=jnp.float32)
        return acc                                      # (HW, C) f32

    def norm_act(acc, b_ref, activation):
        if norm == "in":
            # Single-pass instance norm; the conv bias cancels exactly under
            # the mean subtraction, so it is never added on this path.
            inv = 1.0 / HW
            mu = jnp.sum(acc, axis=0, keepdims=True) * inv
            ex2 = jnp.sum(acc * acc, axis=0, keepdims=True) * inv
            var = ex2 - mu * mu
            h = (acc - mu) * jax.lax.rsqrt(var + eps)
        else:
            h = acc + b_ref[...]
        if activation == "relu":
            h = jnp.maximum(h, 0.0)
        elif activation == "lrelu":
            h = jnp.where(h > 0.0, h, 0.2 * h)
        elif activation == "tanh":
            h = jnp.tanh(h)
        return h

    xf = x_ref[...].reshape(HW, C)      # f32; free relabel (W%8==0, C%128==0)

    # ---- Conv2dBlock #1: conv -> norm -> activation ----
    fill_slab(xf)
    h1 = norm_act(conv3x3(w1_ref), b1_ref, act)

    # ---- Conv2dBlock #2: conv -> norm (no activation) ----
    fill_slab(h1)                       # intermediate never touches HBM
    h2 = norm_act(conv3x3(w2_ref), b2_ref, "none")

    # ---- residual add (f32) ----
    o_ref[...] = (h2 + xf).reshape(H, W, C).astype(o_ref.dtype)


# ------------------------------- the module ----------------------------------

class ResBlockPallas:
    def __init__(self, dim, key, norm="in", activation="relu", pad_type="zero"):
        # TODO(synk): norms 'bn'/'ln'/'adain'/'sn' (incl. SpectralNorm power
        #             iteration) and activations 'prelu'/'selu' are not
        #             implemented in the Pallas path.
        assert norm in ("in", "none"), "only norm in {'in','none'} supported"
        assert activation in ("relu", "lrelu", "tanh", "none")
        # TODO(synk): 'reflect'/'replicate' padding needs in-kernel border
        #             fills for the second conv; only 'zero' (the ResBlock
        #             default) is implemented.
        assert pad_type == "zero", "only pad_type='zero' supported"
        self.dim = dim
        self.norm = norm
        self.activation = activation
        self.pad_type = pad_type

        k1, k2, k3, k4 = jax.random.split(key, 4)
        # f32 master weights in HWIO (used by the lax.conv reference).
        self.w1_hwio = 0.05 * jax.random.normal(k1, (3, 3, dim, dim), jnp.float32)
        self.w2_hwio = 0.05 * jax.random.normal(k2, (3, 3, dim, dim), jnp.float32)
        self.b1 = 0.05 * jax.random.normal(k3, (dim,), jnp.float32)
        self.b2 = 0.05 * jax.random.normal(k4, (dim,), jnp.float32)
        # Kernel-shaped bf16 copies stored ONCE: (3, 3*dim, dim), row layout
        # [kh][kw*C + cin][cout] — matches the slab's kw-major lane groups.
        self.w1_k = self.w1_hwio.reshape(3, 3 * dim, dim).astype(jnp.bfloat16)
        self.w2_k = self.w2_hwio.reshape(3, 3 * dim, dim).astype(jnp.bfloat16)
        self.b1_row = self.b1.reshape(1, dim)
        self.b2_row = self.b2.reshape(1, dim)

    # ---- fused Pallas forward on NHWC (no layout round-trips) ----
    def forward_nhwc(self, x_nhwc):
        x = x_nhwc.astype(jnp.float32)
        N, H, W, C = x.shape
        assert C == self.dim
        assert W % 8 == 0 and C % 128 == 0, \
            "aligned tiling requires W % 8 == 0 and C % 128 == 0"
        HW = H * W

        # 0/1 edge masks for the width shifts (tiny, grid-invariant inputs).
        w_pos = jnp.arange(HW, dtype=jnp.int32) % W
        lmask = (w_pos != 0).astype(jnp.float32).reshape(HW, 1)
        rmask = (w_pos != (W - 1)).astype(jnp.float32).reshape(HW, 1)

        # VMEM working-set estimate (bytes) and explicit limit (review item:
        # make VMEM pressure explicit; v7x scoped default is 32 MiB).
        ws = (2 * HW * C * 4 +                    # x block, double-buffered
              2 * HW * C * 4 +                    # out block, double-buffered
              2 * 2 * 3 * (3 * C) * C * 2 +       # w1, w2 (bf16), double-buffered
              2 * 2 * HW * 128 * 4 +              # edge masks (lane-padded)
              (H + 2) * W * 3 * C * 2 +           # shift-slab scratch (bf16)
              6 * HW * C * 4)                     # live f32 intermediates / spills
        assert ws < 24 * 1024 * 1024, (
            "whole-image tile exceeds the conservative VMEM budget; "
            "TODO(synk): row-block grid + two-pass instance norm")
        vmem_limit = int(min(32 * 1024 * 1024, max(16 * 1024 * 1024, 2 * ws)))

        kernel = functools.partial(
            _resblock_kernel, H=H, W=W, C=C, eps=1e-5,
            act=self.activation, norm=self.norm)

        in_specs = [
            pl.BlockSpec((None, H, W, C), lambda n: (n, 0, 0, 0)),
            pl.BlockSpec((3, 3 * C, C), lambda n: (0, 0, 0)),
            pl.BlockSpec((3, 3 * C, C), lambda n: (0, 0, 0)),
            pl.BlockSpec((HW, 1), lambda n: (0, 0)),
            pl.BlockSpec((HW, 1), lambda n: (0, 0)),
        ]
        args = [x, self.w1_k, self.w2_k, lmask, rmask]
        if self.norm != "in":
            # Bias only matters (and is only shipped) when there is no IN.
            in_specs += [pl.BlockSpec((1, C), lambda n: (0, 0)),
                         pl.BlockSpec((1, C), lambda n: (0, 0))]
            args += [self.b1_row, self.b2_row]

        out = pl.pallas_call(
            kernel,
            out_shape=jax.ShapeDtypeStruct((N, H, W, C), jnp.float32),
            grid_spec=pltpu.PrefetchScalarGridSpec(
                num_scalar_prefetch=0,
                grid=(N,),
                in_specs=in_specs,
                out_specs=pl.BlockSpec((None, H, W, C), lambda n: (n, 0, 0, 0)),
                scratch_shapes=[
                    pltpu.VMEM(((H + 2) * W, 3 * C), jnp.bfloat16)],
            ),
            compiler_params=pltpu.CompilerParams(
                dimension_semantics=("parallel",),
                vmem_limit_bytes=vmem_limit),
        )(*args)
        return out

    # ---- PyTorch-parity NCHW API (transposes kept only for parity) ----
    def __call__(self, x_nchw):
        x = jnp.transpose(x_nchw, (0, 2, 3, 1))
        return jnp.transpose(self.forward_nhwc(x), (0, 3, 1, 2))

    # ---- pure-JAX reference (lax.conv).  With bf16_inputs=True the conv
    #      operands are rounded to bf16 exactly like the kernel's MXU path
    #      (accumulation stays f32), isolating structural errors from
    #      bf16 quantization. ----
    def reference(self, x_nchw, *, bf16_inputs=False):
        x = jnp.transpose(x_nchw, (0, 2, 3, 1)).astype(jnp.float32)

        def maybe_cast(a):
            if bf16_inputs:
                return a.astype(jnp.bfloat16).astype(jnp.float32)
            return a

        def conv_block(h, w_hwio, b, act):
            hp = jnp.pad(h, ((0, 0), (1, 1), (1, 1), (0, 0)))
            o = jax.lax.conv_general_dilated(
                maybe_cast(hp), maybe_cast(w_hwio), (1, 1), "VALID",
                dimension_numbers=("NHWC", "HWIO", "NHWC"))
            o = o + b.reshape(1, 1, 1, -1)
            if self.norm == "in":
                mu = jnp.mean(o, axis=(1, 2), keepdims=True)
                var = jnp.mean((o - mu) ** 2, axis=(1, 2), keepdims=True)
                o = (o - mu) * jax.lax.rsqrt(var + 1e-5)
            if act == "relu":
                o = jnp.maximum(o, 0.0)
            elif act == "lrelu":
                o = jnp.where(o > 0, o, 0.2 * o)
            elif act == "tanh":
                o = jnp.tanh(o)
            return o

        h = conv_block(x, self.w1_hwio, self.b1, self.activation)
        h = conv_block(h, self.w2_hwio, self.b2, "none")
        return jnp.transpose(h + x, (0, 3, 1, 2))


if __name__ == "__main__":
    key = jax.random.PRNGKey(0)
    kp, kx = jax.random.split(key)

    N, dim, Hs, Ws = 2, 128, 16, 16        # C=128 keeps every access lane-dense
    block = ResBlockPallas(dim, kp)        # defaults: norm='in', relu, zero pad

    x = jax.random.normal(kx, (N, dim, Hs, Ws), jnp.float32)   # NCHW

    out = jax.block_until_ready(block(x))
    assert out.shape == (N, dim, Hs, Ws), out.shape

    # Structural check: reference using the same bf16-rounded conv operands.
    ref_bf16 = jax.block_until_ready(block.reference(x, bf16_inputs=True))
    err_bf16 = float(jnp.max(jnp.abs(out - ref_bf16)))
    assert jnp.allclose(out, ref_bf16, atol=1e-2, rtol=1e-2), err_bf16

    # End-to-end check vs. the full-f32 reference (includes bf16 MXU rounding).
    ref_f32 = jax.block_until_ready(block.reference(x))
    err_f32 = float(jnp.max(jnp.abs(out - ref_f32)))
    assert jnp.allclose(out, ref_f32, atol=5e-2, rtol=5e-2), err_f32

    print("KERNEL_OK")
</pallas_src>

<mosaic_0001>
module attributes {stable_mosaic.version = 11 : i64} {
  func.func @_resblock_kernel(%arg0: i32, %arg1: memref<1x16x16x128xf32, #tpu.memory_space<vmem>>, %arg2: memref<3x384x128xbf16, #tpu.memory_space<vmem>>, %arg3: memref<3x384x128xbf16, #tpu.memory_space<vmem>>, %arg4: memref<256x1xf32, #tpu.memory_space<vmem>>, %arg5: memref<256x1xf32, #tpu.memory_space<vmem>>, %arg6: memref<1x16x16x128xf32, #tpu.memory_space<vmem>>, %arg7: memref<288x384xbf16, #tpu.memory_space<vmem>>) attributes {dimension_semantics = [#tpu.dimension_semantics<parallel>], iteration_bounds = array<i64: 2>, scalar_prefetch = 0 : i64, scratch_operands = 1 : i64, tpu.core_type = #tpu.core_type<tc>, window_params = [{transform_indices = @transform_0, window_bounds = array<i64: 1, 16, 16, 128>}, {pipeline_mode = #tpu.pipeline_mode<synchronous>, transform_indices = @transform_1, window_bounds = array<i64: 3, 384, 128>}, {pipeline_mode = #tpu.pipeline_mode<synchronous>, transform_indices = @transform_2, window_bounds = array<i64: 3, 384, 128>}, {pipeline_mode = #tpu.pipeline_mode<synchronous>, transform_indices = @transform_3, window_bounds = array<i64: 256, 1>}, {pipeline_mode = #tpu.pipeline_mode<synchronous>, transform_indices = @transform_4, window_bounds = array<i64: 256, 1>}, {transform_indices = @transform_5, window_bounds = array<i64: 1, 16, 16, 128>}]} {
    %cst = arith.constant 0.000000e+00 : bf16
    %0 = vector.broadcast %cst : bf16 to vector<16x384xbf16>
    %c0 = arith.constant 0 : index
    %c0_0 = arith.constant 0 : index
    %1 = vector.load %arg7[%c0, %c0_0] : memref<288x384xbf16, #tpu.memory_space<vmem>>, vector<16x384xbf16>
    tpu.vector_store %arg7[%c0, %c0_0], %0 {strides = array<i32>} : memref<288x384xbf16, #tpu.memory_space<vmem>>, vector<16x384xbf16>,
    %c272 = arith.constant 272 : index
    %c0_1 = arith.constant 0 : index
    %2 = vector.load %arg7[%c272, %c0_1] : memref<288x384xbf16, #tpu.memory_space<vmem>>, vector<16x384xbf16>
    tpu.vector_store %arg7[%c272, %c0_1], %0 {strides = array<i32>} : memref<288x384xbf16, #tpu.memory_space<vmem>>, vector<16x384xbf16>,
    %c0_2 = arith.constant 0 : index
    %c0_3 = arith.constant 0 : index
    %3 = vector.load %arg4[%c0_2, %c0_3] : memref<256x1xf32, #tpu.memory_space<vmem>>, vector<256x1xf32>
    %c0_4 = arith.constant 0 : index
    %c0_5 = arith.constant 0 : index
    %4 = vector.load %arg5[%c0_4, %c0_5] : memref<256x1xf32, #tpu.memory_space<vmem>>, vector<256x1xf32>
    %c0_6 = arith.constant 0 : index
    %c0_7 = arith.constant 0 : index
    %c0_8 = arith.constant 0 : index
    %c0_9 = arith.constant 0 : index
    %5 = vector.load %arg1[%c0_6, %c0_7, %c0_8, %c0_9] : memref<1x16x16x128xf32, #tpu.memory_space<vmem>>, vector<1x16x16x128xf32>
    %6 = vector.shape_cast %5 : vector<1x16x16x128xf32> to vector<16x16x128xf32>
    %7 = vector.shape_cast %6 : vector<16x16x128xf32> to vector<256x128xf32>
    %8 = vector.extract_strided_slice %7 {offsets = [255, 0], sizes = [1, 128], strides = [1, 1]} : vector<256x128xf32> to vector<1x128xf32>
    %9 = vector.extract_strided_slice %7 {offsets = [0, 0], sizes = [255, 128], strides = [1, 1]} : vector<256x128xf32> to vector<255x128xf32>
    %10 = tpu.concatenate %8, %9 in 0 : vector<1x128xf32>, vector<255x128xf32> -> vector<256x128xf32>
    %11 = vector.broadcast %3 : vector<256x1xf32> to vector<256x128xf32>
    %12 = arith.mulf %10, %11 : vector<256x128xf32>
    %13 = vector.extract_strided_slice %7 {offsets = [1, 0], sizes = [255, 128], strides = [1, 1]} : vector<256x128xf32> to vector<255x128xf32>
    %14 = vector.extract_strided_slice %7 {offsets = [0, 0], sizes = [1, 128], strides = [1, 1]} : vector<256x128xf32> to vector<1x128xf32>
    %15 = tpu.concatenate %13, %14 in 0 : vector<255x128xf32>, vector<1x128xf32> -> vector<256x128xf32>
    %16 = vector.broadcast %4 : vector<256x1xf32> to vector<256x128xf32>
    %17 = arith.mulf %15, %16 : vector<256x128xf32>
    %18 = arith.truncf %12 : vector<256x128xf32> to vector<256x128xbf16>
    %c16 = arith.constant 16 : index
    %c0_10 = arith.constant 0 : index
    %19 = vector.load %arg7[%c16, %c0_10] : memref<288x384xbf16, #tpu.memory_space<vmem>>, vector<256x128xbf16>
    tpu.vector_store %arg7[%c16, %c0_10], %18 {strides = array<i32>} : memref<288x384xbf16, #tpu.memory_space<vmem>>, vector<256x128xbf16>,
    %20 = arith.truncf %7 : vector<256x128xf32> to vector<256x128xbf16>
    %c16_11 = arith.constant 16 : index
    %c128 = arith.constant 128 : index
    %21 = vector.load %arg7[%c16_11, %c128] : memref<288x384xbf16, #tpu.memory_space<vmem>>, vector<256x128xbf16>
    tpu.vector_store %arg7[%c16_11, %c128], %20 {strides = array<i32>} : memref<288x384xbf16, #tpu.memory_space<vmem>>, vector<256x128xbf16>,
    %22 = arith.truncf %17 : vector<256x128xf32> to vector<256x128xbf16>
    %c16_12 = arith.constant 16 : index
    %c256 = arith.constant 256 : index
    %23 = vector.load %arg7[%c16_12, %c256] : memref<288x384xbf16, #tpu.memory_space<vmem>>, vector<256x128xbf16>
    tpu.vector_store %arg7[%c16_12, %c256], %22 {strides = array<i32>} : memref<288x384xbf16, #tpu.memory_space<vmem>>, vector<256x128xbf16>,
    %c0_13 = arith.constant 0 : index
    %c0_14 = arith.constant 0 : index
    %24 = vector.load %arg7[%c0_13, %c0_14] : memref<288x384xbf16, #tpu.memory_space<vmem>>, vector<256x384xbf16>
    %c0_15 = arith.constant 0 : index
    %c0_16 = arith.constant 0 : index
    %c0_17 = arith.constant 0 : index
    %25 = vector.load %arg2[%c0_15, %c0_16, %c0_17] : memref<3x384x128xbf16, #tpu.memory_space<vmem>>, vector<1x384x128xbf16>
    %26 = vector.shape_cast %25 : vector<1x384x128xbf16> to vector<384x128xbf16>
    %cst_18 = arith.constant dense<0.000000e+00> : vector<256x128xf32>
    %27 = tpu.matmul %24, %26, %cst_18 {dimension_numbers = #tpu.dot_dimension_numbers<[1], [0], [0], [1], [0, 0, 1, 1], [], []>} : vector<256x384xbf16>, vector<384x128xbf16>, vector<256x128xf32> -> vector<256x128xf32>
    %c16_19 = arith.constant 16 : index
    %c0_20 = arith.constant 0 : index
    %28 = vector.load %arg7[%c16_19, %c0_20] : memref<288x384xbf16, #tpu.memory_space<vmem>>, vector<256x384xbf16>
    %c1 = arith.constant 1 : index
    %c0_21 = arith.constant 0 : index
    %c0_22 = arith.constant 0 : index
    %29 = vector.load %arg2[%c1, %c0_21, %c0_22] : memref<3x384x128xbf16, #tpu.memory_space<vmem>>, vector<1x384x128xbf16>
    %30 = vector.shape_cast %29 : vector<1x384x128xbf16> to vector<384x128xbf16>
    %cst_23 = arith.constant dense<0.000000e+00> : vector<256x128xf32>
    %31 = tpu.matmul %28, %30, %cst_23 {dimension_numbers = #tpu.dot_dimension_numbers<[1], [0], [0], [1], [0, 0, 1, 1], [], []>} : vector<256x384xbf16>, vector<384x128xbf16>, vector<256x128xf32> -> vector<256x128xf32>
    %32 = arith.addf %27, %31 : vector<256x128xf32>
    %c32 = arith.constant 32 : index
    %c0_24 = arith.constant 0 : index
    %33 = vector.load %arg7[%c32, %c0_24] : memref<288x384xbf16, #tpu.memory_space<vmem>>, vector<256x384xbf16>
    %c2 = arith.constant 2 : index
    %c0_25 = arith.constant 0 : index
    %c0_26 = arith.constant 0 : index
    %34 = vector.load %arg2[%c2, %c0_25, %c0_26] : memref<3x384x128xbf16, #tpu.memory_space<vmem>>, vector<1x384x128xbf16>
    %35 = vector.shape_cast %34 : vector<1x384x128xbf16> to vector<384x128xbf16>
    %cst_27 = arith.constant dense<0.000000e+00> : vector<256x128xf32>
    %36 = tpu.matmul %33, %35, %cst_27 {dimension_numbers = #tpu.dot_dimension_numbers<[1], [0], [0], [1], [0, 0, 1, 1], [], []>} : vector<256x384xbf16>, vector<384x128xbf16>, vector<256x128xf32> -> vector<256x128xf32>
    %37 = arith.addf %32, %36 : vector<256x128xf32>
    %cst_28 = arith.constant dense<0.000000e+00> : vector<128xf32>
    %38 = vector.multi_reduction <add>, %37, %cst_28 [0] : vector<256x128xf32> to vector<128xf32>
    %39 = vector.shape_cast %38 : vector<128xf32> to vector<1x128xf32>
    %cst_29 = arith.constant 3.906250e-03 : f32
    %40 = vector.broadcast %cst_29 : f32 to vector<1x128xf32>
    %41 = arith.mulf %39, %40 : vector<1x128xf32>
    %42 = arith.mulf %37, %37 : vector<256x128xf32>
    %cst_30 = arith.constant dense<0.000000e+00> : vector<128xf32>
    %43 = vector.multi_reduction <add>, %42, %cst_30 [0] : vector<256x128xf32> to vector<128xf32>
    %44 = vector.shape_cast %43 : vector<128xf32> to vector<1x128xf32>
    %cst_31 = arith.constant 3.906250e-03 : f32
    %45 = vector.broadcast %cst_31 : f32 to vector<1x128xf32>
    %46 = arith.mulf %44, %45 : vector<1x128xf32>
    %47 = arith.mulf %41, %41 : vector<1x128xf32>
    %48 = arith.subf %46, %47 : vector<1x128xf32>
    %49 = vector.broadcast %41 : vector<1x128xf32> to vector<256x128xf32>
    %50 = arith.subf %37, %49 : vector<256x128xf32>
    %cst_32 = arith.constant 9.99999974E-6 : f32
    %51 = vector.broadcast %cst_32 : f32 to vector<1x128xf32>
    %52 = arith.addf %48, %51 : vector<1x128xf32>
    %53 = math.rsqrt %52 : vector<1x128xf32>
    %54 = vector.broadcast %53 : vector<1x128xf32> to vector<256x128xf32>
    %55 = arith.mulf %50, %54 : vector<256x128xf32>
    %cst_33 = arith.constant 0.000000e+00 : f32
    %56 = vector.broadcast %cst_33 : f32 to vector<256x128xf32>
    %57 = arith.maximumf %55, %56 : vector<256x128xf32>
    %58 = vector.extract_strided_slice %57 {offsets = [255, 0], sizes = [1, 128], strides = [1, 1]} : vector<256x128xf32> to vector<1x128xf32>
    %59 = vector.extract_strided_slice %57 {offsets = [0, 0], sizes = [255, 128], strides = [1, 1]} : vector<256x128xf32> to vector<255x128xf32>
    %60 = tpu.concatenate %58, %59 in 0 : vector<1x128xf32>, vector<255x128xf32> -> vector<256x128xf32>
    %61 = vector.broadcast %3 : vector<256x1xf32> to vector<256x128xf32>
    %62 = arith.mulf %60, %61 : vector<256x128xf32>
    %63 = vector.extract_strided_slice %57 {offsets = [1, 0], sizes = [255, 128], strides = [1, 1]} : vector<256x128xf32> to vector<255x128xf32>
    %64 = vector.extract_strided_slice %57 {offsets = [0, 0], sizes = [1, 128], strides = [1, 1]} : vector<256x128xf32> to vector<1x128xf32>
    %65 = tpu.concatenate %63, %64 in 0 : vector<255x128xf32>, vector<1x128xf32> -> vector<256x128xf32>
    %66 = vector.broadcast %4 : vector<256x1xf32> to vector<256x128xf32>
    %67 = arith.mulf %65, %66 : vector<256x128xf32>
    %68 = arith.truncf %62 : vector<256x128xf32> to vector<256x128xbf16>
    %c16_34 = arith.constant 16 : index
    %c0_35 = arith.constant 0 : index
    %69 = vector.load %arg7[%c16_34, %c0_35] : memref<288x384xbf16, #tpu.memory_space<vmem>>, vector<256x128xbf16>
    tpu.vector_store %arg7[%c16_34, %c0_35], %68 {strides = array<i32>} : memref<288x384xbf16, #tpu.memory_space<vmem>>, vector<256x128xbf16>,
    %70 = arith.truncf %57 : vector<256x128xf32> to vector<256x128xbf16>
    %c16_36 = arith.constant 16 : index
    %c128_37 = arith.constant 128 : index
    %71 = vector.load %arg7[%c16_36, %c128_37] : memref<288x384xbf16, #tpu.memory_space<vmem>>, vector<256x128xbf16>
    tpu.vector_store %arg7[%c16_36, %c128_37], %70 {strides = array<i32>} : memref<288x384xbf16, #tpu.memory_space<vmem>>, vector<256x128xbf16>,
    %72 = arith.truncf %67 : vector<256x128xf32> to vector<256x128xbf16>
    %c16_38 = arith.constant 16 : index
    %c256_39 = arith.constant 256 : index
    %73 = vector.load %arg7[%c16_38, %c256_39] : memref<288x384xbf16, #tpu.memory_space<vmem>>, vector<256x128xbf16>
    tpu.vector_store %arg7[%c16_38, %c256_39], %72 {strides = array<i32>} : memref<288x384xbf16, #tpu.memory_space<vmem>>, vector<256x128xbf16>,
    %c0_40 = arith.constant 0 : index
    %c0_41 = arith.constant 0 : index
    %74 = vector.load %arg7[%c0_40, %c0_41] : memref<288x384xbf16, #tpu.memory_space<vmem>>, vector<256x384xbf16>
    %c0_42 = arith.constant 0 : index
    %c0_43 = arith.constant 0 : index
    %c0_44 = arith.constant 0 : index
    %75 = vector.load %arg3[%c0_42, %c0_43, %c0_44] : memref<3x384x128xbf16, #tpu.memory_space<vmem>>, vector<1x384x128xbf16>
    %76 = vector.shape_cast %75 : vector<1x384x128xbf16> to vector<384x128xbf16>
    %cst_45 = arith.constant dense<0.000000e+00> : vector<256x128xf32>
    %77 = tpu.matmul %74, %76, %cst_45 {dimension_numbers = #tpu.dot_dimension_numbers<[1], [0], [0], [1], [0, 0, 1, 1], [], []>} : vector<256x384xbf16>, vector<384x128xbf16>, vector<256x128xf32> -> vector<256x128xf32>
    %c16_46 = arith.constant 16 : index
    %c0_47 = arith.constant 0 : index
    %78 = vector.load %arg7[%c16_46, %c0_47] : memref<288x384xbf16, #tpu.memory_space<vmem>>, vector<256x384xbf16>
    %c1_48 = arith.constant 1 : index
    %c0_49 = arith.constant 0 : index
    %c0_50 = arith.constant 0 : index
    %79 = vector.load %arg3[%c1_48, %c0_49, %c0_50] : memref<3x384x128xbf16, #tpu.memory_space<vmem>>, vector<1x384x128xbf16>
    %80 = vector.shape_cast %79 : vector<1x384x128xbf16> to vector<384x128xbf16>
    %cst_51 = arith.constant dense<0.000000e+00> : vector<256x128xf32>
    %81 = tpu.matmul %78, %80, %cst_51 {dimension_numbers = #tpu.dot_dimension_numbers<[1], [0], [0], [1], [0, 0, 1, 1], [], []>} : vector<256x384xbf16>, vector<384x128xbf16>, vector<256x128xf32> -> vector<256x128xf32>
    %82 = arith.addf %77, %81 : vector<256x128xf32>
    %c32_52 = arith.constant 32 : index
    %c0_53 = arith.constant 0 : index
    %83 = vector.load %arg7[%c32_52, %c0_53] : memref<288x384xbf16, #tpu.memory_space<vmem>>, vector<256x384xbf16>
    %c2_54 = arith.constant 2 : index
    %c0_55 = arith.constant 0 : index
    %c0_56 = arith.constant 0 : index
    %84 = vector.load %arg3[%c2_54, %c0_55, %c0_56] : memref<3x384x128xbf16, #tpu.memory_space<vmem>>, vector<1x384x128xbf16>
    %85 = vector.shape_cast %84 : vector<1x384x128xbf16> to vector<384x128xbf16>
    %cst_57 = arith.constant dense<0.000000e+00> : vector<256x128xf32>
    %86 = tpu.matmul %83, %85, %cst_57 {dimension_numbers = #tpu.dot_dimension_numbers<[1], [0], [0], [1], [0, 0, 1, 1], [], []>} : vector<256x384xbf16>, vector<384x128xbf16>, vector<256x128xf32> -> vector<256x128xf32>
    %87 = arith.addf %82, %86 : vector<256x128xf32>
    %cst_58 = arith.constant dense<0.000000e+00> : vector<128xf32>
    %88 = vector.multi_reduction <add>, %87, %cst_58 [0] : vector<256x128xf32> to vector<128xf32>
    %89 = vector.shape_cast %88 : vector<128xf32> to vector<1x128xf32>
    %cst_59 = arith.constant 3.906250e-03 : f32
    %90 = vector.broadcast %cst_59 : f32 to vector<1x128xf32>
    %91 = arith.mulf %89, %90 : vector<1x128xf32>
    %92 = arith.mulf %87, %87 : vector<256x128xf32>
    %cst_60 = arith.constant dense<0.000000e+00> : vector<128xf32>
    %93 = vector.multi_reduction <add>, %92, %cst_60 [0] : vector<256x128xf32> to vector<128xf32>
    %94 = vector.shape_cast %93 : vector<128xf32> to vector<1x128xf32>
    %cst_61 = arith.constant 3.906250e-03 : f32
    %95 = vector.broadcast %cst_61 : f32 to vector<1x128xf32>
    %96 = arith.mulf %94, %95 : vector<1x128xf32>
    %97 = arith.mulf %91, %91 : vector<1x128xf32>
    %98 = arith.subf %96, %97 : vector<1x128xf32>
    %99 = vector.broadcast %91 : vector<1x128xf32> to vector<256x128xf32>
    %100 = arith.subf %87, %99 : vector<256x128xf32>
    %cst_62 = arith.constant 9.99999974E-6 : f32
    %101 = vector.broadcast %cst_62 : f32 to vector<1x128xf32>
    %102 = arith.addf %98, %101 : vector<1x128xf32>
    %103 = math.rsqrt %102 : vector<1x128xf32>
    %104 = vector.broadcast %103 : vector<1x128xf32> to vector<256x128xf32>
    %105 = arith.mulf %100, %104 : vector<256x128xf32>
    %106 = arith.addf %105, %7 : vector<256x128xf32>
    %107 = vector.shape_cast %106 : vector<256x128xf32> to vector<16x16x128xf32>
    %c0_63 = arith.constant 0 : index
    %c0_64 = arith.constant 0 : index
    %c0_65 = arith.constant 0 : index
    %c0_66 = arith.constant 0 : index
    %108 = vector.load %arg6[%c0_63, %c0_64, %c0_65, %c0_66] : memref<1x16x16x128xf32, #tpu.memory_space<vmem>>, vector<1x16x16x128xf32>
    %109 = vector.shape_cast %108 : vector<1x16x16x128xf32> to vector<16x16x128xf32>
    %110 = vector.shape_cast %107 : vector<16x16x128xf32> to vector<1x16x16x128xf32>
    tpu.vector_store %arg6[%c0_63, %c0_64, %c0_65, %c0_66], %110 {strides = array<i32>} : memref<1x16x16x128xf32, #tpu.memory_space<vmem>>, vector<1x16x16x128xf32>,
    return
  }
  func.func @transform_0(%arg0: i32) -> (i32, i32, i32, i32) {
    %c0_i32 = arith.constant 0 : i32
    %c0_i32_0 = arith.constant 0 : i32
    %c0_i32_1 = arith.constant 0 : i32
    %c0_i32_2 = arith.constant 0 : i32
    return %arg0, %c0_i32, %c0_i32_0, %c0_i32_1 : i32, i32, i32, i32
  }
  func.func @transform_1(%arg0: i32) -> (i32, i32, i32) {
    %c0_i32 = arith.constant 0 : i32
    %c0_i32_0 = arith.constant 0 : i32
    %c0_i32_1 = arith.constant 0 : i32
    %c0_i32_2 = arith.constant 0 : i32
    return %c0_i32, %c0_i32_0, %c0_i32_1 : i32, i32, i32
  }
  func.func @transform_2(%arg0: i32) -> (i32, i32, i32) {
    %c0_i32 = arith.constant 0 : i32
    %c0_i32_0 = arith.constant 0 : i32
    %c0_i32_1 = arith.constant 0 : i32
    %c0_i32_2 = arith.constant 0 : i32
    return %c0_i32, %c0_i32_0, %c0_i32_1 : i32, i32, i32
  }
  func.func @transform_3(%arg0: i32) -> (i32, i32) {
    %c0_i32 = arith.constant 0 : i32
    %c0_i32_0 = arith.constant 0 : i32
    %c0_i32_1 = arith.constant 0 : i32
    return %c0_i32, %c0_i32_0 : i32, i32
  }
  func.func @transform_4(%arg0: i32) -> (i32, i32) {
    %c0_i32 = arith.constant 0 : i32
    %c0_i32_0 = arith.constant 0 : i32
    %c0_i32_1 = arith.constant 0 : i32
    return %c0_i32, %c0_i32_0 : i32, i32
  }
  func.func @transform_5(%arg0: i32) -> (i32, i32, i32, i32) {
    %c0_i32 = arith.constant 0 : i32
    %c0_i32_0 = arith.constant 0 : i32
    %c0_i32_1 = arith.constant 0 : i32
    %c0_i32_2 = arith.constant 0 : i32
    return %arg0, %c0_i32, %c0_i32_0, %c0_i32_1 : i32, i32, i32, i32
  }
}

</mosaic_0001>

<llo_original>
// kernel: tpu_custom_call.1
$region0: #{tpu_custom_call.1}
  #allocation0 [shape = 'u32[]', space=smem, size = 0x4, offset = 0x4, fixed_abs, tag = 'smem constant byte address 0x4 - core index']
  #allocation1 [shape = 'u32[144,128]{1,0:T(1,128)}', space=vmem, size = 0x12000, scoped, tag = 'internal scratch']
  #allocation2 [shape = 'bf16[288,384]{1,0:T(16,128)(2,1)}', space=vmem, size = 0x36000, scoped, tag = 'scratch operand']
  %s0 = inlined_call_operand.vmem [shape: f32[2,16,16,128], index: 0, kind: input, shape index: {}]
  %s1 = inlined_call_operand.hbm [shape: bf16[3,384,128], index: 1, kind: input, shape index: {}]
  %s2 = inlined_call_operand.hbm [shape: bf16[3,384,128], index: 2, kind: input, shape index: {}]
  %s3 = inlined_call_operand.vmem [shape: f32[256,1], index: 3, kind: input, shape index: {}]
  %s4 = inlined_call_operand.vmem [shape: f32[256,1], index: 4, kind: input, shape index: {}]
  %s5 = inlined_call_operand.hbm [shape: f32[2,16,16,128], index: 5, kind: output, shape index: {}]
  %s6 = sld [smem:[#allocation0]]
  $region61: #{tpu_custom_call.1} parent=0
    _
  %s8 = ssub.s32 1, %s6
  %s9 = scalar_select 0, %s8, %s6
  $region1: #{tpu_custom_call.1} parent=0
    #allocation3 [shape = 'u8[294912]{0}', space=vmem, size = 0x48000, scoped, tag = 'input window, operand 1, single buffered']
    #allocation4 [shape = 's32[2]{0}', space=sflag, size = 0x8, scoped, tag = 'scoped memory for tpu_custom_call.1']
    #allocation5 [shape = 's32[2]{0}', space=sflag, size = 0x8, scoped, tag = 'scoped memory for tpu_custom_call.1']
    #allocation6 [shape = 'u8[294912]{0}', space=vmem, size = 0x48000, scoped, tag = 'input window, operand 2, single buffered']
    #allocation7 [shape = 's32[1]{0}', space=sflag, size = 0x4, scoped, tag = 'scoped memory for tpu_custom_call.1']
    #allocation8 [shape = 'u8[262144]{0}', space=vmem, size = 0x40000, scoped, tag = 'output window, operand 0']
    %10 = vsyncpa [#allocation4], 0
    %11 = vsyncpa [#allocation7], 0
    %12 = vsyncpa [#allocation5], 0
    %s13 = scalar_lea.sflag [#allocation5], 1
    %14 = vsyncpa %s13, 0
    loop: start=0, step=1, limit=4
    $region2: #{tpu_custom_call.1} parent=1 // loop_pre_header
      _
    $region3: #{tpu_custom_call.1} parent=1 // loop_header
      %s16 = sphi 0, %s20
      %p17 = scmp.ge.s32.totalorder %s16, 4
      %s26 = sphi 0, %s28
      %s29 = sphi 0, %s26
      %s30 = sphi 0, %s29
      %s46 = sphi 0, %s30
      %s50 = sphi 0, %s50
      %s52 = sphi 0, %s50
      %s53 = sphi 0, %s52
      %s67 = sphi 0, %s53
      %s71 = sphi 0, %s71
      %s73 = sphi 0, %s71
      %s74 = sphi 0, %s73
      %s88 = sphi 0, %s74
      %s92 = sphi 0, %s92
      %s94 = sphi 0, %s92
      %s95 = sphi 0, %s94
      %s109 = sphi 0, %s95
      %s113 = sphi 0, %s113
      %s115 = sphi 0, %s113
      %s116 = sphi 0, %s115
      %s130 = sphi 0, %s116
      %s136 = sphi 0, %s138
      %s139 = sphi 0, %s136
      %s140 = sphi 0, %s139
      %s156 = sphi 0, %s140
    $region4: #{tpu_custom_call.1} parent=1 // loop_header_branch
      %19 = sbr.rel (%p17) target = $region8
    $region5: #{tpu_custom_call.1} parent=1 // loop_body
      %s21 = ssub.s32 %s16, 1
      %s22 = ssub.s32 %s16, 2
      %s23 = sadd.s32 %s16, 1
      %s24 = ssub.s32 %s16, %s23
      %p25 = scmp.eq.s32.totalorder %s24, 0
      %s27 = sadd.s32 %s26, 1
      %s28 = scalar_select %p25, %s26, %s27
      %p31 = pneg %p25
      %p32 = scmp.eq.s32.totalorder %s16, 1
      %p33 = por %p31, %p32
      %p34 = scmp.ne.s32.totalorder %s26, %s29
      %p35 = scmp.eq.s32.totalorder %s16, 0
      %p36 = por %p34, %p35
      %p37 = scmp.ne.s32.totalorder %s26, %s29
      %p38 = scmp.eq.s32.totalorder %s21, 1
      %p39 = por %p37, %p38
      %p40 = scmp.ne.s32.totalorder %s29, %s30
      %p41 = scmp.eq.s32.totalorder %s21, 0
      %p42 = por %p40, %p41
      %p43 = scmp.ne.s32.totalorder %s29, %s30
      %p44 = scmp.eq.s32.totalorder %s22, 1
      %p45 = por %p43, %p44
      %p47 = scmp.ne.s32.totalorder %s30, %s46
      %p48 = scmp.eq.s32.totalorder %s22, 0
      %p49 = por %p47, %p48
      %s51 = sadd.s32 %s50, 1
      %p54 = scmp.eq.s32.totalorder %s16, 1
      %p55 = scmp.ne.s32.totalorder %s50, %s52
      %p56 = scmp.eq.s32.totalorder %s16, 0
      %p57 = por %p55, %p56
      %p58 = scmp.ne.s32.totalorder %s50, %s52
      %p59 = scmp.eq.s32.totalorder %s21, 1
      %p60 = por %p58, %p59
      %p61 = scmp.ne.s32.totalorder %s52, %s53
      %p62 = scmp.eq.s32.totalorder %s21, 0
      %p63 = por %p61, %p62
      %p64 = scmp.ne.s32.totalorder %s52, %s53
      %p65 = scmp.eq.s32.totalorder %s22, 1
      %p66 = por %p64, %p65
      %p68 = scmp.ne.s32.totalorder %s53, %s67
      %p69 = scmp.eq.s32.totalorder %s22, 0
      %p70 = por %p68, %p69
      %s72 = sadd.s32 %s71, 1
      %p75 = scmp.eq.s32.totalorder %s16, 1
      %p76 = scmp.ne.s32.totalorder %s71, %s73
      %p77 = scmp.eq.s32.totalorder %s16, 0
      %p78 = por %p76, %p77
      %p79 = scmp.ne.s32.totalorder %s71, %s73
      %p80 = scmp.eq.s32.totalorder %s21, 1
      %p81 = por %p79, %p80
      %p82 = scmp.ne.s32.totalorder %s73, %s74
      %p83 = scmp.eq.s32.totalorder %s21, 0
      %p84 = por %p82, %p83
      %p85 = scmp.ne.s32.totalorder %s73, %s74
      %p86 = scmp.eq.s32.totalorder %s22, 1
      %p87 = por %p85, %p86
      %p89 = scmp.ne.s32.totalorder %s74, %s88
      %p90 = scmp.eq.s32.totalorder %s22, 0
      %p91 = por %p89, %p90
      %s93 = sadd.s32 %s92, 1
      %p96 = scmp.eq.s32.totalorder %s16, 1
      %p97 = scmp.ne.s32.totalorder %s92, %s94
      %p98 = scmp.eq.s32.totalorder %s16, 0
      %p99 = por %p97, %p98
      %p100 = scmp.ne.s32.totalorder %s92, %s94
      %p101 = scmp.eq.s32.totalorder %s21, 1
      %p102 = por %p100, %p101
      %p103 = scmp.ne.s32.totalorder %s94, %s95
      %p104 = scmp.eq.s32.totalorder %s21, 0
      %p105 = por %p103, %p104
      %p106 = scmp.ne.s32.totalorder %s94, %s95
      %p107 = scmp.eq.s32.totalorder %s22, 1
      %p108 = por %p106, %p107
      %p110 = scmp.ne.s32.totalorder %s95, %s109
      %p111 = scmp.eq.s32.totalorder %s22, 0
      %p112 = por %p110, %p111
      %s114 = sadd.s32 %s113, 1
      %p117 = scmp.eq.s32.totalorder %s16, 1
      %p118 = scmp.ne.s32.totalorder %s113, %s115
      %p119 = scmp.eq.s32.totalorder %s16, 0
      %p120 = por %p118, %p119
      %p121 = scmp.ne.s32.totalorder %s113, %s115
      %p122 = scmp.eq.s32.totalorder %s21, 1
      %p123 = por %p121, %p122
      %p124 = scmp.ne.s32.totalorder %s115, %s116
      %p125 = scmp.eq.s32.totalorder %s21, 0
      %p126 = por %p124, %p125
      %p127 = scmp.ne.s32.totalorder %s115, %s116
      %p128 = scmp.eq.s32.totalorder %s22, 1
      %p129 = por %p127, %p128
      %p131 = scmp.ne.s32.totalorder %s116, %s130
      %p132 = scmp.eq.s32.totalorder %s22, 0
      %p133 = por %p131, %p132
      %s134 = ssub.s32 %s16, %s23
      %p135 = scmp.eq.s32.totalorder %s134, 0
      %s137 = sadd.s32 %s136, 1
      %s138 = scalar_select %p135, %s136, %s137
      %p141 = pneg %p135
      %p142 = scmp.eq.s32.totalorder %s16, 1
      %p143 = por %p141, %p142
      %p144 = scmp.ne.s32.totalorder %s136, %s139
      %p145 = scmp.eq.s32.totalorder %s16, 0
      %p146 = por %p144, %p145
      %p147 = scmp.ne.s32.totalorder %s136, %s139
      %p148 = scmp.eq.s32.totalorder %s21, 1
      %p149 = por %p147, %p148
      %p150 = scmp.ne.s32.totalorder %s139, %s140
      %p151 = scmp.eq.s32.totalorder %s21, 0
      %p152 = por %p150, %p151
      %p153 = scmp.ne.s32.totalorder %s139, %s140
      %p154 = scmp.eq.s32.totalorder %s22, 1
      %p155 = por %p153, %p154
      %p157 = scmp.ne.s32.totalorder %s140, %s156
      %p158 = scmp.eq.s32.totalorder %s22, 0
      %p159 = por %p157, %p158
      %p160 = scmp.le.s32.totalorder 1, %s16
      %p161 = scmp.lt.s32.totalorder %s16, 3
      %p162 = pnand %p160, %p161
      %p163 = pneg %p162
      // Predicated region
      $region9: #{tpu_custom_call.1} parent=5 // pred_check
        _
      $region10: #{tpu_custom_call.1} parent=5 // pred_check_branch
        %165 = sbr.rel (%p162) target = $region12
      $region11: #{tpu_custom_call.1} parent=5 // pred_region
        %s166 = ssub.s32 %s16, 1
        // Predicated region
        $region13: #{tpu_custom_call.1} parent=11 // pred_check
          %p167 = pneg %p63
        $region14: #{tpu_custom_call.1} parent=11 // pred_check_branch
          %169 = sbr.rel (%p167) target = $region16
        $region15: #{tpu_custom_call.1} parent=11 // pred_region
          %s171 = ssub.s32 9216, 9216
          %172 = vsyncadd [#allocation4], %s171
          %s173 = sshll.u32 [#allocation3], 4
          %s174 = int_to_ptr.vmem [resolvable:$true] %s173
          %179 = dma.hbm_to_vmem [thread:$0]  %s1, 9216, %s174, [#allocation4], 64, 64, 4
        $region16: #{tpu_custom_call.1} parent=11 // pred_fallthru
          _
        // Predicated region
        $region17: #{tpu_custom_call.1} parent=11 // pred_check
          %p180 = pneg %p84
        $region18: #{tpu_custom_call.1} parent=11 // pred_check_branch
          %182 = sbr.rel (%p180) target = $region20
        $region19: #{tpu_custom_call.1} parent=11 // pred_region
          %s184 = ssub.s32 9216, 9216
          %185 = vsyncadd [#allocation7], %s184
          %s186 = sshll.u32 [#allocation6], 4
          %s187 = int_to_ptr.vmem [resolvable:$true] %s186
          %192 = dma.hbm_to_vmem [thread:$0]  %s2, 9216, %s187, [#allocation7], 64, 64, 4
        $region20: #{tpu_custom_call.1} parent=11 // pred_fallthru
          _
        // Predicated region
        $region21: #{tpu_custom_call.1} parent=11 // pred_check
          %p193 = pneg %p105
        $region22: #{tpu_custom_call.1} parent=11 // pred_check_branch
          %195 = sbr.rel (%p193) target = $region24
        $region23: #{tpu_custom_call.1} parent=11 // pred_region
          _
        $region24: #{tpu_custom_call.1} parent=11 // pred_fallthru
          _
        // Predicated region
        $region25: #{tpu_custom_call.1} parent=11 // pred_check
          %p196 = pneg %p126
        $region26: #{tpu_custom_call.1} parent=11 // pred_check_branch
          %198 = sbr.rel (%p196) target = $region28
        $region27: #{tpu_custom_call.1} parent=11 // pred_region
          _
        $region28: #{tpu_custom_call.1} parent=11 // pred_fallthru
          _
      $region12: #{tpu_custom_call.1} parent=5 // pred_fallthru
        _
      %p199 = scmp.lt.s32.totalorder %s16, 2
      // Predicated region
      $region29: #{tpu_custom_call.1} parent=5 // pred_check
        %p200 = pneg %p199
      $region30: #{tpu_custom_call.1} parent=5 // pred_check_branch
        %202 = sbr.rel (%p200) target = $region32
      $region31: #{tpu_custom_call.1} parent=5 // pred_region
        // Predicated region
        $region33: #{tpu_custom_call.1} parent=31 // pred_check
          %p203 = pneg %p36
        $region34: #{tpu_custom_call.1} parent=31 // pred_check_branch
          %205 = sbr.rel (%p203) target = $region36
        $region35: #{tpu_custom_call.1} parent=31 // pred_region
          %p206 = scmp.lt.s32.totalorder %s16, 1
          %s207 = scalar_select %p206, %s16, 1
          %s208 = smul.addr %s207, 32
          %s209 = smul.addr %s208, 8
          %s210 = scalar_lea.vmem %s0, %s209
        $region36: #{tpu_custom_call.1} parent=31 // pred_fallthru
          _
      $region32: #{tpu_custom_call.1} parent=5 // pred_fallthru
        _
      %p211 = scmp.le.s32.totalorder 1, %s16
      %p212 = scmp.lt.s32.totalorder %s16, 3
      %p213 = pnand %p211, %p212
      %p214 = pneg %p213
      // Predicated region
      $region37: #{tpu_custom_call.1} parent=5 // pred_check
        _
      $region38: #{tpu_custom_call.1} parent=5 // pred_check_branch
        %216 = sbr.rel (%p213) target = $region40
      $region39: #{tpu_custom_call.1} parent=5 // pred_region
        %s217 = ssub.s32 %s16, 1
        // Predicated region
        $region41: #{tpu_custom_call.1} parent=39 // pred_check
          %p218 = pneg %p63
        $region42: #{tpu_custom_call.1} parent=39 // pred_check_branch
          %220 = sbr.rel (%p218) target = $region44
        $region43: #{tpu_custom_call.1} parent=39 // pred_region
          %221 = dma.done [#allocation4], 9216
        $region44: #{tpu_custom_call.1} parent=39 // pred_fallthru
          _
        // Predicated region
        $region45: #{tpu_custom_call.1} parent=39 // pred_check
          %p222 = pneg %p84
        $region46: #{tpu_custom_call.1} parent=39 // pred_check_branch
          %224 = sbr.rel (%p222) target = $region48
        $region47: #{tpu_custom_call.1} parent=39 // pred_region
          %225 = dma.done [#allocation7], 9216
        $region48: #{tpu_custom_call.1} parent=39 // pred_fallthru
          _
        %p226 = scmp.lt.s32.totalorder %s21, 1
        %s227 = scalar_select %p226, %s21, 1
        %s228 = smul.addr %s227, 32
        %s229 = smul.addr %s228, 8
        %s230 = scalar_lea.vmem %s0, %s229
        %p231 = pneg %p42
        %p232 = pneg %p39
        %p233 = pneg %p63
        %p234 = pneg %p60
        %p235 = pneg %p84
        %p236 = pneg %p81
        %p237 = pneg %p105
        %p238 = pneg %p102
        %p239 = pneg %p126
        %p240 = pneg %p123
        %p241 = pneg %p152
        %p242 = pneg %p149
        %s243 = sand.u32 %s139, 1
        %s244 = scalar_lea.sflag [#allocation5], %s243
        %s245 = sand.u32 %s139, 1
        %s246 = smul.addr %s245, 256
        %s247 = scalar_lea.vmem [#allocation8], %s246
        %p248 = scmp.lt.s32.totalorder %s21, 1
        %s249 = scalar_select %p248, %s21, 1
        %s250 = smul.addr %s249, 32
        %s251 = smul.addr %s250, 8
        %s252 = scalar_lea.vmem %s0, %s251
        %254 = vst [vmem:[#allocation2] sm:$0xff] 0
        %255 = vst [vmem:[#allocation2 + $0x8] sm:$0xff] 0
        %256 = vst [vmem:[#allocation2 + $0x10] sm:$0xff] 0
        %257 = vst [vmem:[#allocation2 + $0x198] sm:$0xff] 0
        %258 = vst [vmem:[#allocation2 + $0x1a0] sm:$0xff] 0
        %259 = vst [vmem:[#allocation2 + $0x1a8] sm:$0xff] 0
        %v260 = vld [vmem:[%s3] sm:$0xff]
        %v261 = vld [vmem:[%s3 + $0x8] sm:$0xff]
        %v262 = vld [vmem:[%s3 + $0x10] sm:$0xff]
        %v263 = vld [vmem:[%s3 + $0x18] sm:$0xff]
        %v264 = vld [vmem:[%s3 + $0x20] sm:$0xff]
        %v265 = vld [vmem:[%s3 + $0x28] sm:$0xff]
        %v266 = vld [vmem:[%s3 + $0x30] sm:$0xff]
        %v267 = vld [vmem:[%s3 + $0x38] sm:$0xff]
        %v268 = vld [vmem:[%s3 + $0x40] sm:$0xff]
        %v269 = vld [vmem:[%s3 + $0x48] sm:$0xff]
        %v270 = vld [vmem:[%s3 + $0x50] sm:$0xff]
        %v271 = vld [vmem:[%s3 + $0x58] sm:$0xff]
        %v272 = vld [vmem:[%s3 + $0x60] sm:$0xff]
        %v273 = vld [vmem:[%s3 + $0x68] sm:$0xff]
        %v274 = vld [vmem:[%s3 + $0x70] sm:$0xff]
        %v275 = vld [vmem:[%s3 + $0x78] sm:$0xff]
        %v276 = vld [vmem:[%s3 + $0x80] sm:$0xff]
        %v277 = vld [vmem:[%s3 + $0x88] sm:$0xff]
        %v278 = vld [vmem:[%s3 + $0x90] sm:$0xff]
        %v279 = vld [vmem:[%s3 + $0x98] sm:$0xff]
        %v280 = vld [vmem:[%s3 + $0xa0] sm:$0xff]
        %v281 = vld [vmem:[%s3 + $0xa8] sm:$0xff]
        %v282 = vld [vmem:[%s3 + $0xb0] sm:$0xff]
        %v283 = vld [vmem:[%s3 + $0xb8] sm:$0xff]
        %v284 = vld [vmem:[%s3 + $0xc0] sm:$0xff]
        %v285 = vld [vmem:[%s3 + $0xc8] sm:$0xff]
        %v286 = vld [vmem:[%s3 + $0xd0] sm:$0xff]
        %v287 = vld [vmem:[%s3 + $0xd8] sm:$0xff]
        %v288 = vld [vmem:[%s3 + $0xe0] sm:$0xff]
        %v289 = vld [vmem:[%s3 + $0xe8] sm:$0xff]
        %v290 = vld [vmem:[%s3 + $0xf0] sm:$0xff]
        %v291 = vld [vmem:[%s3 + $0xf8] sm:$0xff]
        %v292 = vld [vmem:[%s4] sm:$0xff]
        %v293 = vld [vmem:[%s4 + $0x8] sm:$0xff]
        %v294 = vld [vmem:[%s4 + $0x10] sm:$0xff]
        %v295 = vld [vmem:[%s4 + $0x18] sm:$0xff]
        %v296 = vld [vmem:[%s4 + $0x20] sm:$0xff]
        %v297 = vld [vmem:[%s4 + $0x28] sm:$0xff]
        %v298 = vld [vmem:[%s4 + $0x30] sm:$0xff]
        %v299 = vld [vmem:[%s4 + $0x38] sm:$0xff]
        %v300 = vld [vmem:[%s4 + $0x40] sm:$0xff]
        %v301 = vld [vmem:[%s4 + $0x48] sm:$0xff]
        %v302 = vld [vmem:[%s4 + $0x50] sm:$0xff]
        %v303 = vld [vmem:[%s4 + $0x58] sm:$0xff]
        %v304 = vld [vmem:[%s4 + $0x60] sm:$0xff]
        %v305 = vld [vmem:[%s4 + $0x68] sm:$0xff]
        %v306 = vld [vmem:[%s4 + $0x70] sm:$0xff]
        %v307 = vld [vmem:[%s4 + $0x78] sm:$0xff]
        %v308 = vld [vmem:[%s4 + $0x80] sm:$0xff]
        %v309 = vld [vmem:[%s4 + $0x88] sm:$0xff]
        %v310 = vld [vmem:[%s4 + $0x90] sm:$0xff]
        %v311 = vld [vmem:[%s4 + $0x98] sm:$0xff]
        %v312 = vld [vmem:[%s4 + $0xa0] sm:$0xff]
        %v313 = vld [vmem:[%s4 + $0xa8] sm:$0xff]
        %v314 = vld [vmem:[%s4 + $0xb0] sm:$0xff]
        %v315 = vld [vmem:[%s4 + $0xb8] sm:$0xff]
        %v316 = vld [vmem:[%s4 + $0xc0] sm:$0xff]
        %v317 = vld [vmem:[%s4 + $0xc8] sm:$0xff]
        %v318 = vld [vmem:[%s4 + $0xd0] sm:$0xff]
        %v319 = vld [vmem:[%s4 + $0xd8] sm:$0xff]
        %v320 = vld [vmem:[%s4 + $0xe0] sm:$0xff]
        %v321 = vld [vmem:[%s4 + $0xe8] sm:$0xff]
        %v322 = vld [vmem:[%s4 + $0xf0] sm:$0xff]
        %v323 = vld [vmem:[%s4 + $0xf8] sm:$0xff]
        %v324 = vld [vmem:[%s252] sm:$0xff]
        %v325 = vld [vmem:[%s252 + $0x8] sm:$0xff]
        %v326 = vld [vmem:[%s252 + $0x10] sm:$0xff]
        %v327 = vld [vmem:[%s252 + $0x18] sm:$0xff]
        %v328 = vld [vmem:[%s252 + $0x20] sm:$0xff]
        %v329 = vld [vmem:[%s252 + $0x28] sm:$0xff]
        %v330 = vld [vmem:[%s252 + $0x30] sm:$0xff]
        %v331 = vld [vmem:[%s252 + $0x38] sm:$0xff]
        %v332 = vld [vmem:[%s252 + $0x40] sm:$0xff]
        %v333 = vld [vmem:[%s252 + $0x48] sm:$0xff]
        %v334 = vld [vmem:[%s252 + $0x50] sm:$0xff]
        %v335 = vld [vmem:[%s252 + $0x58] sm:$0xff]
        %v336 = vld [vmem:[%s252 + $0x60] sm:$0xff]
        %v337 = vld [vmem:[%s252 + $0x68] sm:$0xff]
        %v338 = vld [vmem:[%s252 + $0x70] sm:$0xff]
        %v339 = vld [vmem:[%s252 + $0x78] sm:$0xff]
        %v340 = vld [vmem:[%s252 + $0x80] sm:$0xff]
        %v341 = vld [vmem:[%s252 + $0x88] sm:$0xff]
        %v342 = vld [vmem:[%s252 + $0x90] sm:$0xff]
        %v343 = vld [vmem:[%s252 + $0x98] sm:$0xff]
        %v344 = vld [vmem:[%s252 + $0xa0] sm:$0xff]
        %v345 = vld [vmem:[%s252 + $0xa8] sm:$0xff]
        %v346 = vld [vmem:[%s252 + $0xb0] sm:$0xff]
        %v347 = vld [vmem:[%s252 + $0xb8] sm:$0xff]
        %v348 = vld [vmem:[%s252 + $0xc0] sm:$0xff]
        %v349 = vld [vmem:[%s252 + $0xc8] sm:$0xff]
        %v350 = vld [vmem:[%s252 + $0xd0] sm:$0xff]
        %v351 = vld [vmem:[%s252 + $0xd8] sm:$0xff]
        %v352 = vld [vmem:[%s252 + $0xe0] sm:$0xff]
        %v353 = vld [vmem:[%s252 + $0xe8] sm:$0xff]
        %v354 = vld [vmem:[%s252 + $0xf0] sm:$0xff]
        %v355 = vld [vmem:[%s252 + $0xf8] sm:$0xff]
        %v357 = vrot.slane %v355, 7
        %vm390 = vcmask 1040384
        %v391 = vrot.slane %v324, 7
        %v392 = vrot.slane %v325, 7
        %v393 = vsel %vm390, %v391, %v392
        %v394 = vrot.slane %v326, 7
        %v395 = vsel %vm390, %v392, %v394
        %v396 = vrot.slane %v327, 7
        %v397 = vsel %vm390, %v394, %v396
        %v398 = vrot.slane %v328, 7
        %v399 = vsel %vm390, %v396, %v398
        %v400 = vrot.slane %v329, 7
        %v401 = vsel %vm390, %v398, %v400
        %v402 = vrot.slane %v330, 7
        %v403 = vsel %vm390, %v400, %v402
        %v404 = vrot.slane %v331, 7
        %v405 = vsel %vm390, %v402, %v404
        %v406 = vrot.slane %v332, 7
        %v407 = vsel %vm390, %v404, %v406
        %v408 = vrot.slane %v333, 7
        %v409 = vsel %vm390, %v406, %v408
        %v410 = vrot.slane %v334, 7
        %v411 = vsel %vm390, %v408, %v410
        %v412 = vrot.slane %v335, 7
        %v413 = vsel %vm390, %v410, %v412
        %v414 = vrot.slane %v336, 7
        %v415 = vsel %vm390, %v412, %v414
        %v416 = vrot.slane %v337, 7
        %v417 = vsel %vm390, %v414, %v416
        %v418 = vrot.slane %v338, 7
        %v419 = vsel %vm390, %v416, %v418
        %v420 = vrot.slane %v339, 7
        %v421 = vsel %vm390, %v418, %v420
        %v422 = vrot.slane %v340, 7
        %v423 = vsel %vm390, %v420, %v422
        %v424 = vrot.slane %v341, 7
        %v425 = vsel %vm390, %v422, %v424
        %v426 = vrot.slane %v342, 7
        %v427 = vsel %vm390, %v424, %v426
        %v428 = vrot.slane %v343, 7
        %v429 = vsel %vm390, %v426, %v428
        %v430 = vrot.slane %v344, 7
        %v431 = vsel %vm390, %v428, %v430
        %v432 = vrot.slane %v345, 7
        %v433 = vsel %vm390, %v430, %v432
        %v434 = vrot.slane %v346, 7
        %v435 = vsel %vm390, %v432, %v434
        %v436 = vrot.slane %v347, 7
        %v437 = vsel %vm390, %v434, %v436
        %v438 = vrot.slane %v348, 7
        %v439 = vsel %vm390, %v436, %v438
        %v440 = vrot.slane %v349, 7
        %v441 = vsel %vm390, %v438, %v440
        %v442 = vrot.slane %v350, 7
        %v443 = vsel %vm390, %v440, %v442
        %v444 = vrot.slane %v351, 7
        %v445 = vsel %vm390, %v442, %v444
        %v446 = vrot.slane %v352, 7
        %v447 = vsel %vm390, %v444, %v446
        %v448 = vrot.slane %v353, 7
        %v449 = vsel %vm390, %v446, %v448
        %v450 = vrot.slane %v354, 7
        %v451 = vsel %vm390, %v448, %v450
        %v452 = vsel %vm390, %v450, %v357
        %v485 = vsel %vm390, %v357, %v391
        %487 = vset.pattern.permute.xlu0 0
        %488 = vperm.xlu0 %487, %v260
        %v489 = vpop.permute.xlu0 %488
        %492 = vset.pattern.permute.xlu0 0
        %493 = vperm.xlu0 %492, %v261
        %v494 = vpop.permute.xlu0 %493
        %497 = vset.pattern.permute.xlu0 0
        %498 = vperm.xlu0 %497, %v262
        %v499 = vpop.permute.xlu0 %498
        %502 = vset.pattern.permute.xlu0 0
        %503 = vperm.xlu0 %502, %v263
        %v504 = vpop.permute.xlu0 %503
        %507 = vset.pattern.permute.xlu0 0
        %508 = vperm.xlu0 %507, %v264
        %v509 = vpop.permute.xlu0 %508
        %512 = vset.pattern.permute.xlu0 0
        %513 = vperm.xlu0 %512, %v265
        %v514 = vpop.permute.xlu0 %513
        %517 = vset.pattern.permute.xlu0 0
        %518 = vperm.xlu0 %517, %v266
        %v519 = vpop.permute.xlu0 %518
        %522 = vset.pattern.permute.xlu0 0
        %523 = vperm.xlu0 %522, %v267
        %v524 = vpop.permute.xlu0 %523
        %527 = vset.pattern.permute.xlu0 0
        %528 = vperm.xlu0 %527, %v268
        %v529 = vpop.permute.xlu0 %528
        %532 = vset.pattern.permute.xlu0 0
        %533 = vperm.xlu0 %532, %v269
        %v534 = vpop.permute.xlu0 %533
        %537 = vset.pattern.permute.xlu0 0
        %538 = vperm.xlu0 %537, %v270
        %v539 = vpop.permute.xlu0 %538
        %542 = vset.pattern.permute.xlu0 0
        %543 = vperm.xlu0 %542, %v271
        %v544 = vpop.permute.xlu0 %543
        %547 = vset.pattern.permute.xlu0 0
        %548 = vperm.xlu0 %547, %v272
        %v549 = vpop.permute.xlu0 %548
        %552 = vset.pattern.permute.xlu0 0
        %553 = vperm.xlu0 %552, %v273
        %v554 = vpop.permute.xlu0 %553
        %557 = vset.pattern.permute.xlu0 0
        %558 = vperm.xlu0 %557, %v274
        %v559 = vpop.permute.xlu0 %558
        %562 = vset.pattern.permute.xlu0 0
        %563 = vperm.xlu0 %562, %v275
        %v564 = vpop.permute.xlu0 %563
        %567 = vset.pattern.permute.xlu0 0
        %568 = vperm.xlu0 %567, %v276
        %v569 = vpop.permute.xlu0 %568
        %572 = vset.pattern.permute.xlu0 0
        %573 = vperm.xlu0 %572, %v277
        %v574 = vpop.permute.xlu0 %573
        %577 = vset.pattern.permute.xlu0 0
        %578 = vperm.xlu0 %577, %v278
        %v579 = vpop.permute.xlu0 %578
        %582 = vset.pattern.permute.xlu0 0
        %583 = vperm.xlu0 %582, %v279
        %v584 = vpop.permute.xlu0 %583
        %587 = vset.pattern.permute.xlu0 0
        %588 = vperm.xlu0 %587, %v280
        %v589 = vpop.permute.xlu0 %588
        %592 = vset.pattern.permute.xlu0 0
        %593 = vperm.xlu0 %592, %v281
        %v594 = vpop.permute.xlu0 %593
        %597 = vset.pattern.permute.xlu0 0
        %598 = vperm.xlu0 %597, %v282
        %v599 = vpop.permute.xlu0 %598
        %602 = vset.pattern.permute.xlu0 0
        %603 = vperm.xlu0 %602, %v283
        %v604 = vpop.permute.xlu0 %603
        %607 = vset.pattern.permute.xlu0 0
        %608 = vperm.xlu0 %607, %v284
        %v609 = vpop.permute.xlu0 %608
        %612 = vset.pattern.permute.xlu0 0
        %613 = vperm.xlu0 %612, %v285
        %v614 = vpop.permute.xlu0 %613
        %617 = vset.pattern.permute.xlu0 0
        %618 = vperm.xlu0 %617, %v286
        %v619 = vpop.permute.xlu0 %618
        %622 = vset.pattern.permute.xlu0 0
        %623 = vperm.xlu0 %622, %v287
        %v624 = vpop.permute.xlu0 %623
        %627 = vset.pattern.permute.xlu0 0
        %628 = vperm.xlu0 %627, %v288
        %v629 = vpop.permute.xlu0 %628
        %632 = vset.pattern.permute.xlu0 0
        %633 = vperm.xlu0 %632, %v289
        %v634 = vpop.permute.xlu0 %633
        %637 = vset.pattern.permute.xlu0 0
        %638 = vperm.xlu0 %637, %v290
        %v639 = vpop.permute.xlu0 %638
        %642 = vset.pattern.permute.xlu0 0
        %643 = vperm.xlu0 %642, %v291
        %v644 = vpop.permute.xlu0 %643
        %v646 = vmul.f32 %v485, %v489
        %v647 = vmul.f32 %v393, %v494
        %v648 = vmul.f32 %v395, %v499
        %v649 = vmul.f32 %v397, %v504
        %v650 = vmul.f32 %v399, %v509
        %v651 = vmul.f32 %v401, %v514
        %v652 = vmul.f32 %v403, %v519
        %v653 = vmul.f32 %v405, %v524
        %v654 = vmul.f32 %v407, %v529
        %v655 = vmul.f32 %v409, %v534
        %v656 = vmul.f32 %v411, %v539
        %v657 = vmul.f32 %v413, %v544
        %v658 = vmul.f32 %v415, %v549
        %v659 = vmul.f32 %v417, %v554
        %v660 = vmul.f32 %v419, %v559
        %v661 = vmul.f32 %v421, %v564
        %v662 = vmul.f32 %v423, %v569
        %v663 = vmul.f32 %v425, %v574
        %v664 = vmul.f32 %v427, %v579
        %v665 = vmul.f32 %v429, %v584
        %v666 = vmul.f32 %v431, %v589
        %v667 = vmul.f32 %v433, %v594
        %v668 = vmul.f32 %v435, %v599
        %v669 = vmul.f32 %v437, %v604
        %v670 = vmul.f32 %v439, %v609
        %v671 = vmul.f32 %v441, %v614
        %v672 = vmul.f32 %v443, %v619
        %v673 = vmul.f32 %v445, %v624
        %v674 = vmul.f32 %v447, %v629
        %v675 = vmul.f32 %v449, %v634
        %v676 = vmul.f32 %v451, %v639
        %v677 = vmul.f32 %v452, %v644
        %vm678 = vcmask 1046528
        %v679 = vrot.slane %v324, 1
        %v680 = vrot.slane %v325, 1
        %v681 = vsel %vm678, %v679, %v680
        %v682 = vrot.slane %v326, 1
        %v683 = vsel %vm678, %v680, %v682
        %v684 = vrot.slane %v327, 1
        %v685 = vsel %vm678, %v682, %v684
        %v686 = vrot.slane %v328, 1
        %v687 = vsel %vm678, %v684, %v686
        %v688 = vrot.slane %v329, 1
        %v689 = vsel %vm678, %v686, %v688
        %v690 = vrot.slane %v330, 1
        %v691 = vsel %vm678, %v688, %v690
        %v692 = vrot.slane %v331, 1
        %v693 = vsel %vm678, %v690, %v692
        %v694 = vrot.slane %v332, 1
        %v695 = vsel %vm678, %v692, %v694
        %v696 = vrot.slane %v333, 1
        %v697 = vsel %vm678, %v694, %v696
        %v698 = vrot.slane %v334, 1
        %v699 = vsel %vm678, %v696, %v698
        %v700 = vrot.slane %v335, 1
        %v701 = vsel %vm678, %v698, %v700
        %v702 = vrot.slane %v336, 1
        %v703 = vsel %vm678, %v700, %v702
        %v704 = vrot.slane %v337, 1
        %v705 = vsel %vm678, %v702, %v704
        %v706 = vrot.slane %v338, 1
        %v707 = vsel %vm678, %v704, %v706
        %v708 = vrot.slane %v339, 1
        %v709 = vsel %vm678, %v706, %v708
        %v710 = vrot.slane %v340, 1
        %v711 = vsel %vm678, %v708, %v710
        %v712 = vrot.slane %v341, 1
        %v713 = vsel %vm678, %v710, %v712
        %v714 = vrot.slane %v342, 1
        %v715 = vsel %vm678, %v712, %v714
        %v716 = vrot.slane %v343, 1
        %v717 = vsel %vm678, %v714, %v716
        %v718 = vrot.slane %v344, 1
        %v719 = vsel %vm678, %v716, %v718
        %v720 = vrot.slane %v345, 1
        %v721 = vsel %vm678, %v718, %v720
        %v722 = vrot.slane %v346, 1
        %v723 = vsel %vm678, %v720, %v722
        %v724 = vrot.slane %v347, 1
        %v725 = vsel %vm678, %v722, %v724
        %v726 = vrot.slane %v348, 1
        %v727 = vsel %vm678, %v724, %v726
        %v728 = vrot.slane %v349, 1
        %v729 = vsel %vm678, %v726, %v728
        %v730 = vrot.slane %v350, 1
        %v731 = vsel %vm678, %v728, %v730
        %v732 = vrot.slane %v351, 1
        %v733 = vsel %vm678, %v730, %v732
        %v734 = vrot.slane %v352, 1
        %v735 = vsel %vm678, %v732, %v734
        %v736 = vrot.slane %v353, 1
        %v737 = vsel %vm678, %v734, %v736
        %v738 = vrot.slane %v354, 1
        %v739 = vsel %vm678, %v736, %v738
        %v740 = vrot.slane %v355, 1
        %v741 = vsel %vm678, %v738, %v740
        %v775 = vsel %vm678, %v740, %v679
        %777 = vset.pattern.permute.xlu0 0
        %778 = vperm.xlu0 %777, %v292
        %v779 = vpop.permute.xlu0 %778
        %782 = vset.pattern.permute.xlu0 0
        %783 = vperm.xlu0 %782, %v293
        %v784 = vpop.permute.xlu0 %783
        %787 = vset.pattern.permute.xlu0 0
        %788 = vperm.xlu0 %787, %v294
        %v789 = vpop.permute.xlu0 %788
        %792 = vset.pattern.permute.xlu0 0
        %793 = vperm.xlu0 %792, %v295
        %v794 = vpop.permute.xlu0 %793
        %797 = vset.pattern.permute.xlu0 0
        %798 = vperm.xlu0 %797, %v296
        %v799 = vpop.permute.xlu0 %798
        %802 = vset.pattern.permute.xlu0 0
        %803 = vperm.xlu0 %802, %v297
        %v804 = vpop.permute.xlu0 %803
        %807 = vset.pattern.permute.xlu0 0
        %808 = vperm.xlu0 %807, %v298
        %v809 = vpop.permute.xlu0 %808
        %812 = vset.pattern.permute.xlu0 0
        %813 = vperm.xlu0 %812, %v299
        %v814 = vpop.permute.xlu0 %813
        %817 = vset.pattern.permute.xlu0 0
        %818 = vperm.xlu0 %817, %v300
        %v819 = vpop.permute.xlu0 %818
        %822 = vset.pattern.permute.xlu0 0
        %823 = vperm.xlu0 %822, %v301
        %v824 = vpop.permute.xlu0 %823
        %827 = vset.pattern.permute.xlu0 0
        %828 = vperm.xlu0 %827, %v302
        %v829 = vpop.permute.xlu0 %828
        %832 = vset.pattern.permute.xlu0 0
        %833 = vperm.xlu0 %832, %v303
        %v834 = vpop.permute.xlu0 %833
        %837 = vset.pattern.permute.xlu0 0
        %838 = vperm.xlu0 %837, %v304
        %v839 = vpop.permute.xlu0 %838
        %842 = vset.pattern.permute.xlu0 0
        %843 = vperm.xlu0 %842, %v305
        %v844 = vpop.permute.xlu0 %843
        %847 = vset.pattern.permute.xlu0 0
        %848 = vperm.xlu0 %847, %v306
        %v849 = vpop.permute.xlu0 %848
        %852 = vset.pattern.permute.xlu0 0
        %853 = vperm.xlu0 %852, %v307
        %v854 = vpop.permute.xlu0 %853
        %857 = vset.pattern.permute.xlu0 0
        %858 = vperm.xlu0 %857, %v308
        %v859 = vpop.permute.xlu0 %858
        %862 = vset.pattern.permute.xlu0 0
        %863 = vperm.xlu0 %862, %v309
        %v864 = vpop.permute.xlu0 %863
        %867 = vset.pattern.permute.xlu0 0
        %868 = vperm.xlu0 %867, %v310
        %v869 = vpop.permute.xlu0 %868
        %872 = vset.pattern.permute.xlu0 0
        %873 = vperm.xlu0 %872, %v311
        %v874 = vpop.permute.xlu0 %873
        %877 = vset.pattern.permute.xlu0 0
        %878 = vperm.xlu0 %877, %v312
        %v879 = vpop.permute.xlu0 %878
        %882 = vset.pattern.permute.xlu0 0
        %883 = vperm.xlu0 %882, %v313
        %v884 = vpop.permute.xlu0 %883
        %887 = vset.pattern.permute.xlu0 0
        %888 = vperm.xlu0 %887, %v314
        %v889 = vpop.permute.xlu0 %888
        %892 = vset.pattern.permute.xlu0 0
        %893 = vperm.xlu0 %892, %v315
        %v894 = vpop.permute.xlu0 %893
        %897 = vset.pattern.permute.xlu0 0
        %898 = vperm.xlu0 %897, %v316
        %v899 = vpop.permute.xlu0 %898
        %902 = vset.pattern.permute.xlu0 0
        %903 = vperm.xlu0 %902, %v317
        %v904 = vpop.permute.xlu0 %903
        %907 = vset.pattern.permute.xlu0 0
        %908 = vperm.xlu0 %907, %v318
        %v909 = vpop.permute.xlu0 %908
        %912 = vset.pattern.permute.xlu0 0
        %913 = vperm.xlu0 %912, %v319
        %v914 = vpop.permute.xlu0 %913
        %917 = vset.pattern.permute.xlu0 0
        %918 = vperm.xlu0 %917, %v320
        %v919 = vpop.permute.xlu0 %918
        %922 = vset.pattern.permute.xlu0 0
        %923 = vperm.xlu0 %922, %v321
        %v924 = vpop.permute.xlu0 %923
        %927 = vset.pattern.permute.xlu0 0
        %928 = vperm.xlu0 %927, %v322
        %v929 = vpop.permute.xlu0 %928
        %932 = vset.pattern.permute.xlu0 0
        %933 = vperm.xlu0 %932, %v323
        %v934 = vpop.permute.xlu0 %933
        %v936 = vmul.f32 %v681, %v779
        %v937 = vmul.f32 %v683, %v784
        %v938 = vmul.f32 %v685, %v789
        %v939 = vmul.f32 %v687, %v794
        %v940 = vmul.f32 %v689, %v799
        %v941 = vmul.f32 %v691, %v804
        %v942 = vmul.f32 %v693, %v809
        %v943 = vmul.f32 %v695, %v814
        %v944 = vmul.f32 %v697, %v819
        %v945 = vmul.f32 %v699, %v824
        %v946 = vmul.f32 %v701, %v829
        %v947 = vmul.f32 %v703, %v834
        %v948 = vmul.f32 %v705, %v839
        %v949 = vmul.f32 %v707, %v844
        %v950 = vmul.f32 %v709, %v849
        %v951 = vmul.f32 %v711, %v854
        %v952 = vmul.f32 %v713, %v859
        %v953 = vmul.f32 %v715, %v864
        %v954 = vmul.f32 %v717, %v869
        %v955 = vmul.f32 %v719, %v874
        %v956 = vmul.f32 %v721, %v879
        %v957 = vmul.f32 %v723, %v884
        %v958 = vmul.f32 %v725, %v889
        %v959 = vmul.f32 %v727, %v894
        %v960 = vmul.f32 %v729, %v899
        %v961 = vmul.f32 %v731, %v904
        %v962 = vmul.f32 %v733, %v909
        %v963 = vmul.f32 %v735, %v914
        %v964 = vmul.f32 %v737, %v919
        %v965 = vmul.f32 %v739, %v924
        %v966 = vmul.f32 %v741, %v929
        %v967 = vmul.f32 %v775, %v934
        %v968 = vpack.c.bf16 %v647, %v646
        %v969 = vpack.c.bf16 %v649, %v648
        %v970 = vpack.c.bf16 %v651, %v650
        %v971 = vpack.c.bf16 %v653, %v652
        %v972 = vpack.c.bf16 %v655, %v654
        %v973 = vpack.c.bf16 %v657, %v656
        %v974 = vpack.c.bf16 %v659, %v658
        %v975 = vpack.c.bf16 %v661, %v660
        %v976 = vpack.c.bf16 %v663, %v662
        %v977 = vpack.c.bf16 %v665, %v664
        %v978 = vpack.c.bf16 %v667, %v666
        %v979 = vpack.c.bf16 %v669, %v668
        %v980 = vpack.c.bf16 %v671, %v670
        %v981 = vpack.c.bf16 %v673, %v672
        %v982 = vpack.c.bf16 %v675, %v674
        %v983 = vpack.c.bf16 %v677, %v676
        %984 = vst [vmem:[#allocation2 + $0x18] sm:$0xff] %v968
        %985 = vst [vmem:[#allocation2 + $0x30] sm:$0xff] %v969
        %986 = vst [vmem:[#allocation2 + $0x48] sm:$0xff] %v970
        %987 = vst [vmem:[#allocation2 + $0x60] sm:$0xff] %v971
        %988 = vst [vmem:[#allocation2 + $0x78] sm:$0xff] %v972
        %989 = vst [vmem:[#allocation2 + $0x90] sm:$0xff] %v973
        %990 = vst [vmem:[#allocation2 + $0xa8] sm:$0xff] %v974
        %991 = vst [vmem:[#allocation2 + $0xc0] sm:$0xff] %v975
        %992 = vst [vmem:[#allocation2 + $0xd8] sm:$0xff] %v976
        %993 = vst [vmem:[#allocation2 + $0xf0] sm:$0xff] %v977
        %994 = vst [vmem:[#allocation2 + $0x108] sm:$0xff] %v978
        %995 = vst [vmem:[#allocation2 + $0x120] sm:$0xff] %v979
        %996 = vst [vmem:[#allocation2 + $0x138] sm:$0xff] %v980
        %997 = vst [vmem:[#allocation2 + $0x150] sm:$0xff] %v981
        %998 = vst [vmem:[#allocation2 + $0x168] sm:$0xff] %v982
        %999 = vst [vmem:[#allocation2 + $0x180] sm:$0xff] %v983
        %v1000 = vpack.c.bf16 %v325, %v324
        %v1001 = vpack.c.bf16 %v327, %v326
        %v1002 = vpack.c.bf16 %v329, %v328
        %v1003 = vpack.c.bf16 %v331, %v330
        %v1004 = vpack.c.bf16 %v333, %v332
        %v1005 = vpack.c.bf16 %v335, %v334
        %v1006 = vpack.c.bf16 %v337, %v336
        %v1007 = vpack.c.bf16 %v339, %v338
        %v1008 = vpack.c.bf16 %v341, %v340
        %v1009 = vpack.c.bf16 %v343, %v342
        %v1010 = vpack.c.bf16 %v345, %v344
        %v1011 = vpack.c.bf16 %v347, %v346
        %v1012 = vpack.c.bf16 %v349, %v348
        %v1013 = vpack.c.bf16 %v351, %v350
        %v1014 = vpack.c.bf16 %v353, %v352
        %v1015 = vpack.c.bf16 %v355, %v354
        %1016 = vst [vmem:[#allocation2 + $0x20] sm:$0xff] %v1000
        %1017 = vst [vmem:[#allocation2 + $0x38] sm:$0xff] %v1001
        %1018 = vst [vmem:[#allocation2 + $0x50] sm:$0xff] %v1002
        %1019 = vst [vmem:[#allocation2 + $0x68] sm:$0xff] %v1003
        %1020 = vst [vmem:[#allocation2 + $0x80] sm:$0xff] %v1004
        %1021 = vst [vmem:[#allocation2 + $0x98] sm:$0xff] %v1005
        %1022 = vst [vmem:[#allocation2 + $0xb0] sm:$0xff] %v1006
        %1023 = vst [vmem:[#allocation2 + $0xc8] sm:$0xff] %v1007
        %1024 = vst [vmem:[#allocation2 + $0xe0] sm:$0xff] %v1008
        %1025 = vst [vmem:[#allocation2 + $0xf8] sm:$0xff] %v1009
        %1026 = vst [vmem:[#allocation2 + $0x110] sm:$0xff] %v1010
        %1027 = vst [vmem:[#allocation2 + $0x128] sm:$0xff] %v1011
        %1028 = vst [vmem:[#allocation2 + $0x140] sm:$0xff] %v1012
        %1029 = vst [vmem:[#allocation2 + $0x158] sm:$0xff] %v1013
        %1030 = vst [vmem:[#allocation2 + $0x170] sm:$0xff] %v1014
        %1031 = vst [vmem:[#allocation2 + $0x188] sm:$0xff] %v1015
        %v1032 = vpack.c.bf16 %v937, %v936
        %v1033 = vpack.c.bf16 %v939, %v938
        %v1034 = vpack.c.bf16 %v941, %v940
        %v1035 = vpack.c.bf16 %v943, %v942
        %v1036 = vpack.c.bf16 %v945, %v944
        %v1037 = vpack.c.bf16 %v947, %v946
        %v1038 = vpack.c.bf16 %v949, %v948
        %v1039 = vpack.c.bf16 %v951, %v950
        %v1040 = vpack.c.bf16 %v953, %v952
        %v1041 = vpack.c.bf16 %v955, %v954
        %v1042 = vpack.c.bf16 %v957, %v956
        %v1043 = vpack.c.bf16 %v959, %v958
        %v1044 = vpack.c.bf16 %v961, %v960
        %v1045 = vpack.c.bf16 %v963, %v962
        %v1046 = vpack.c.bf16 %v965, %v964
        %v1047 = vpack.c.bf16 %v967, %v966
        %1048 = vst [vmem:[#allocation2 + $0x28] sm:$0xff] %v1032
        %1049 = vst [vmem:[#allocation2 + $0x40] sm:$0xff] %v1033
        %1050 = vst [vmem:[#allocation2 + $0x58] sm:$0xff] %v1034
        %1051 = vst [vmem:[#allocation2 + $0x70] sm:$0xff] %v1035
        %1052 = vst [vmem:[#allocation2 + $0x88] sm:$0xff] %v1036
        %1053 = vst [vmem:[#allocation2 + $0xa0] sm:$0xff] %v1037
        %1054 = vst [vmem:[#allocation2 + $0xb8] sm:$0xff] %v1038
        %1055 = vst [vmem:[#allocation2 + $0xd0] sm:$0xff] %v1039
        %1056 = vst [vmem:[#allocation2 + $0xe8] sm:$0xff] %v1040
        %1057 = vst [vmem:[#allocation2 + $0x100] sm:$0xff] %v1041
        %1058 = vst [vmem:[#allocation2 + $0x118] sm:$0xff] %v1042
        %1059 = vst [vmem:[#allocation2 + $0x130] sm:$0xff] %v1043
        %1060 = vst [vmem:[#allocation2 + $0x148] sm:$0xff] %v1044
        %1061 = vst [vmem:[#allocation2 + $0x160] sm:$0xff] %v1045
        %1062 = vst [vmem:[#allocation2 + $0x178] sm:$0xff] %v1046
        %1063 = vst [vmem:[#allocation2 + $0x190] sm:$0xff] %v1047
        %v1064 = vld [vmem:[#allocation2] sm:$0xff]
        %v1065 = vld [vmem:[#allocation2 + $0x8] sm:$0xff]
        %v1066 = vld [vmem:[#allocation2 + $0x10] sm:$0xff]
        %v1067 = vld [vmem:[#allocation2 + $0x18] sm:$0xff]
        %v1068 = vld [vmem:[#allocation2 + $0x20] sm:$0xff]
        %v1069 = vld [vmem:[#allocation2 + $0x28] sm:$0xff]
        %v1070 = vld [vmem:[#allocation2 + $0x30] sm:$0xff]
        %v1071 = vld [vmem:[#allocation2 + $0x38] sm:$0xff]
        %v1072 = vld [vmem:[#allocation2 + $0x40] sm:$0xff]
        %v1073 = vld [vmem:[#allocation2 + $0x48] sm:$0xff]
        %v1074 = vld [vmem:[#allocation2 + $0x50] sm:$0xff]
        %v1075 = vld [vmem:[#allocation2 + $0x58] sm:$0xff]
        %v1076 = vld [vmem:[#allocation2 + $0x60] sm:$0xff]
        %v1077 = vld [vmem:[#allocation2 + $0x68] sm:$0xff]
        %v1078 = vld [vmem:[#allocation2 + $0x70] sm:$0xff]
        %v1079 = vld [vmem:[#allocation2 + $0x78] sm:$0xff]
        %v1080 = vld [vmem:[#allocation2 + $0x80] sm:$0xff]
        %v1081 = vld [vmem:[#allocation2 + $0x88] sm:$0xff]
        %v1082 = vld [vmem:[#allocation2 + $0x90] sm:$0xff]
        %v1083 = vld [vmem:[#allocation2 + $0x98] sm:$0xff]
        %v1084 = vld [vmem:[#allocation2 + $0xa0] sm:$0xff]
        %v1085 = vld [vmem:[#allocation2 + $0xa8] sm:$0xff]
        %v1086 = vld [vmem:[#allocation2 + $0xb0] sm:$0xff]
        %v1087 = vld [vmem:[#allocation2 + $0xb8] sm:$0xff]
        %v1088 = vld [vmem:[#allocation2 + $0xc0] sm:$0xff]
        %v1089 = vld [vmem:[#allocation2 + $0xc8] sm:$0xff]
        %v1090 = vld [vmem:[#allocation2 + $0xd0] sm:$0xff]
        %v1091 = vld [vmem:[#allocation2 + $0xd8] sm:$0xff]
        %v1092 = vld [vmem:[#allocation2 + $0xe0] sm:$0xff]
        %v1093 = vld [vmem:[#allocation2 + $0xe8] sm:$0xff]
        %v1094 = vld [vmem:[#allocation2 + $0xf0] sm:$0xff]
        %v1095 = vld [vmem:[#allocation2 + $0xf8] sm:$0xff]
        %v1096 = vld [vmem:[#allocation2 + $0x100] sm:$0xff]
        %v1097 = vld [vmem:[#allocation2 + $0x108] sm:$0xff]
        %v1098 = vld [vmem:[#allocation2 + $0x110] sm:$0xff]
        %v1099 = vld [vmem:[#allocation2 + $0x118] sm:$0xff]
        %v1100 = vld [vmem:[#allocation2 + $0x120] sm:$0xff]
        %v1101 = vld [vmem:[#allocation2 + $0x128] sm:$0xff]
        %v1102 = vld [vmem:[#allocation2 + $0x130] sm:$0xff]
        %v1103 = vld [vmem:[#allocation2 + $0x138] sm:$0xff]
        %v1104 = vld [vmem:[#allocation2 + $0x140] sm:$0xff]
        %v1105 = vld [vmem:[#allocation2 + $0x148] sm:$0xff]
        %v1106 = vld [vmem:[#allocation2 + $0x150] sm:$0xff]
        %v1107 = vld [vmem:[#allocation2 + $0x158] sm:$0xff]
        %v1108 = vld [vmem:[#allocation2 + $0x160] sm:$0xff]
        %v1109 = vld [vmem:[#allocation2 + $0x168] sm:$0xff]
        %v1110 = vld [vmem:[#allocation2 + $0x170] sm:$0xff]
        %v1111 = vld [vmem:[#allocation2 + $0x178] sm:$0xff]
        %v1112 = vld [vmem:[#allocation3] sm:$0xf]
        %v1113 = vld [vmem:[#allocation3 + $0x4] sm:$0xf]
        %v1114 = vld [vmem:[#allocation3 + $0x8] sm:$0xf]
        %v1115 = vld [vmem:[#allocation3 + $0xc] sm:$0xf]
        %v1116 = vld [vmem:[#allocation3 + $0x10] sm:$0xf]
        %v1117 = vld [vmem:[#allocation3 + $0x14] sm:$0xf]
        %v1118 = vld [vmem:[#allocation3 + $0x18] sm:$0xf]
        %v1119 = vld [vmem:[#allocation3 + $0x1c] sm:$0xf]
        %v1120 = vld [vmem:[#allocation3 + $0x20] sm:$0xf]
        %v1121 = vld [vmem:[#allocation3 + $0x24] sm:$0xf]
        %v1122 = vld [vmem:[#allocation3 + $0x28] sm:$0xf]
        %v1123 = vld [vmem:[#allocation3 + $0x2c] sm:$0xf]
        %v1124 = vld [vmem:[#allocation3 + $0x30] sm:$0xf]
        %v1125 = vld [vmem:[#allocation3 + $0x34] sm:$0xf]
        %v1126 = vld [vmem:[#allocation3 + $0x38] sm:$0xf]
        %v1127 = vld [vmem:[#allocation3 + $0x3c] sm:$0xf]
        %v1128 = vld [vmem:[#allocation3 + $0x40] sm:$0xf]
        %v1129 = vld [vmem:[#allocation3 + $0x44] sm:$0xf]
        %v1130 = vld [vmem:[#allocation3 + $0x48] sm:$0xf]
        %v1131 = vld [vmem:[#allocation3 + $0x4c] sm:$0xf]
        %v1132 = vld [vmem:[#allocation3 + $0x50] sm:$0xf]
        %v1133 = vld [vmem:[#allocation3 + $0x54] sm:$0xf]
        %v1134 = vld [vmem:[#allocation3 + $0x58] sm:$0xf]
        %v1135 = vld [vmem:[#allocation3 + $0x5c] sm:$0xf]
        %v1136 = vld [vmem:[#allocation3 + $0x60] sm:$0xf]
        %v1137 = vld [vmem:[#allocation3 + $0x64] sm:$0xf]
        %v1138 = vld [vmem:[#allocation3 + $0x68] sm:$0xf]
        %v1139 = vld [vmem:[#allocation3 + $0x6c] sm:$0xf]
        %v1140 = vld [vmem:[#allocation3 + $0x70] sm:$0xf]
        %v1141 = vld [vmem:[#allocation3 + $0x74] sm:$0xf]
        %v1142 = vld [vmem:[#allocation3 + $0x78] sm:$0xf]
        %v1143 = vld [vmem:[#allocation3 + $0x7c] sm:$0xf]
        %v1144 = vld [vmem:[#allocation3 + $0x80] sm:$0xf]
        %v1145 = vld [vmem:[#allocation3 + $0x84] sm:$0xf]
        %v1146 = vld [vmem:[#allocation3 + $0x88] sm:$0xf]
        %v1147 = vld [vmem:[#allocation3 + $0x8c] sm:$0xf]
        %v1148 = vld [vmem:[#allocation3 + $0x90] sm:$0xf]
        %v1149 = vld [vmem:[#allocation3 + $0x94] sm:$0xf]
        %v1150 = vld [vmem:[#allocation3 + $0x98] sm:$0xf]
        %v1151 = vld [vmem:[#allocation3 + $0x9c] sm:$0xf]
        %v1152 = vld [vmem:[#allocation3 + $0xa0] sm:$0xf]
        %v1153 = vld [vmem:[#allocation3 + $0xa4] sm:$0xf]
        %v1154 = vld [vmem:[#allocation3 + $0xa8] sm:$0xf]
        %v1155 = vld [vmem:[#allocation3 + $0xac] sm:$0xf]
        %v1156 = vld [vmem:[#allocation3 + $0xb0] sm:$0xf]
        %v1157 = vld [vmem:[#allocation3 + $0xb4] sm:$0xf]
        %v1158 = vld [vmem:[#allocation3 + $0xb8] sm:$0xf]
        %v1159 = vld [vmem:[#allocation3 + $0xbc] sm:$0xf]
        %v1160 = vld [vmem:[#allocation2 + $0x180] sm:$0xff]
        %v1161 = vld [vmem:[#allocation2 + $0x188] sm:$0xff]
        %v1162 = vld [vmem:[#allocation2 + $0x190] sm:$0xff]
        %s1163 = scalar_lea.vmem [#allocation3], 192
        %v1164 = vld [vmem:[%s1163] sm:$0xf]
        %v1165 = vld [vmem:[%s1163 + $0x4] sm:$0xf]
        %v1166 = vld [vmem:[%s1163 + $0x8] sm:$0xf]
        %v1167 = vld [vmem:[%s1163 + $0xc] sm:$0xf]
        %v1168 = vld [vmem:[%s1163 + $0x10] sm:$0xf]
        %v1169 = vld [vmem:[%s1163 + $0x14] sm:$0xf]
        %v1170 = vld [vmem:[%s1163 + $0x18] sm:$0xf]
        %v1171 = vld [vmem:[%s1163 + $0x1c] sm:$0xf]
        %v1172 = vld [vmem:[%s1163 + $0x20] sm:$0xf]
        %v1173 = vld [vmem:[%s1163 + $0x24] sm:$0xf]
        %v1174 = vld [vmem:[%s1163 + $0x28] sm:$0xf]
        %v1175 = vld [vmem:[%s1163 + $0x2c] sm:$0xf]
        %v1176 = vld [vmem:[%s1163 + $0x30] sm:$0xf]
        %v1177 = vld [vmem:[%s1163 + $0x34] sm:$0xf]
        %v1178 = vld [vmem:[%s1163 + $0x38] sm:$0xf]
        %v1179 = vld [vmem:[%s1163 + $0x3c] sm:$0xf]
        %v1180 = vld [vmem:[%s1163 + $0x40] sm:$0xf]
        %v1181 = vld [vmem:[%s1163 + $0x44] sm:$0xf]
        %v1182 = vld [vmem:[%s1163 + $0x48] sm:$0xf]
        %v1183 = vld [vmem:[%s1163 + $0x4c] sm:$0xf]
        %v1184 = vld [vmem:[%s1163 + $0x50] sm:$0xf]
        %v1185 = vld [vmem:[%s1163 + $0x54] sm:$0xf]
        %v1186 = vld [vmem:[%s1163 + $0x58] sm:$0xf]
        %v1187 = vld [vmem:[%s1163 + $0x5c] sm:$0xf]
        %v1188 = vld [vmem:[%s1163 + $0x60] sm:$0xf]
        %v1189 = vld [vmem:[%s1163 + $0x64] sm:$0xf]
        %v1190 = vld [vmem:[%s1163 + $0x68] sm:$0xf]
        %v1191 = vld [vmem:[%s1163 + $0x6c] sm:$0xf]
        %v1192 = vld [vmem:[%s1163 + $0x70] sm:$0xf]
        %v1193 = vld [vmem:[%s1163 + $0x74] sm:$0xf]
        %v1194 = vld [vmem:[%s1163 + $0x78] sm:$0xf]
        %v1195 = vld [vmem:[%s1163 + $0x7c] sm:$0xf]
        %v1196 = vld [vmem:[%s1163 + $0x80] sm:$0xf]
        %v1197 = vld [vmem:[%s1163 + $0x84] sm:$0xf]
        %v1198 = vld [vmem:[%s1163 + $0x88] sm:$0xf]
        %v1199 = vld [vmem:[%s1163 + $0x8c] sm:$0xf]
        %v1200 = vld [vmem:[%s1163 + $0x90] sm:$0xf]
        %v1201 = vld [vmem:[%s1163 + $0x94] sm:$0xf]
        %v1202 = vld [vmem:[%s1163 + $0x98] sm:$0xf]
        %v1203 = vld [vmem:[%s1163 + $0x9c] sm:$0xf]
        %v1204 = vld [vmem:[%s1163 + $0xa0] sm:$0xf]
        %v1205 = vld [vmem:[%s1163 + $0xa4] sm:$0xf]
        %v1206 = vld [vmem:[%s1163 + $0xa8] sm:$0xf]
        %v1207 = vld [vmem:[%s1163 + $0xac] sm:$0xf]
        %v1208 = vld [vmem:[%s1163 + $0xb0] sm:$0xf]
        %v1209 = vld [vmem:[%s1163 + $0xb4] sm:$0xf]
        %v1210 = vld [vmem:[%s1163 + $0xb8] sm:$0xf]
        %v1211 = vld [vmem:[%s1163 + $0xbc] sm:$0xf]
        %v1260 = vunpack.c.l.b16 %v1164
        %v1261 = vunpack.c.l.b16 %v1165
        %v1262 = vunpack.c.l.b16 %v1166
        %v1263 = vunpack.c.l.b16 %v1167
        %v1264 = vunpack.c.l.b16 %v1168
        %v1265 = vunpack.c.l.b16 %v1169
        %v1266 = vunpack.c.l.b16 %v1170
        %v1267 = vunpack.c.l.b16 %v1171
        %v1268 = vunpack.c.l.b16 %v1172
        %v1269 = vunpack.c.l.b16 %v1173
        %v1270 = vunpack.c.l.b16 %v1174
        %v1271 = vunpack.c.l.b16 %v1175
        %v1272 = vunpack.c.l.b16 %v1176
        %v1273 = vunpack.c.l.b16 %v1177
        %v1274 = vunpack.c.l.b16 %v1178
        %v1275 = vunpack.c.l.b16 %v1179
        %v1276 = vunpack.c.l.b16 %v1180
        %v1277 = vunpack.c.l.b16 %v1181
        %v1278 = vunpack.c.l.b16 %v1182
        %v1279 = vunpack.c.l.b16 %v1183
        %v1280 = vunpack.c.l.b16 %v1184
        %v1281 = vunpack.c.l.b16 %v1185
        %v1282 = vunpack.c.l.b16 %v1186
        %v1283 = vunpack.c.l.b16 %v1187
        %v1284 = vunpack.c.l.b16 %v1188
        %v1285 = vunpack.c.l.b16 %v1189
        %v1286 = vunpack.c.l.b16 %v1190
        %v1287 = vunpack.c.l.b16 %v1191
        %v1288 = vunpack.c.l.b16 %v1192
        %v1289 = vunpack.c.l.b16 %v1193
        %v1290 = vunpack.c.l.b16 %v1194
        %v1291 = vunpack.c.l.b16 %v1195
        %v1292 = vunpack.c.l.b16 %v1196
        %v1293 = vunpack.c.l.b16 %v1197
        %v1294 = vunpack.c.l.b16 %v1198
        %v1295 = vunpack.c.l.b16 %v1199
        %v1296 = vunpack.c.l.b16 %v1200
        %v1297 = vunpack.c.l.b16 %v1201
        %v1298 = vunpack.c.l.b16 %v1202
        %v1299 = vunpack.c.l.b16 %v1203
        %v1300 = vunpack.c.l.b16 %v1204
        %v1301 = vunpack.c.l.b16 %v1205
        %v1302 = vunpack.c.l.b16 %v1206
        %v1303 = vunpack.c.l.b16 %v1207
        %v1304 = vunpack.c.l.b16 %v1208
        %v1305 = vunpack.c.l.b16 %v1209
        %v1306 = vunpack.c.l.b16 %v1210
        %v1307 = vunpack.c.l.b16 %v1211
        %v1308 = vpack.c.b16 %v1261, %v1260
        %v1309 = vpack.c.b16 %v1263, %v1262
        %v1310 = vpack.c.b16 %v1265, %v1264
        %v1311 = vpack.c.b16 %v1267, %v1266
        %v1312 = vpack.c.b16 %v1269, %v1268
        %v1313 = vpack.c.b16 %v1271, %v1270
        %v1314 = vpack.c.b16 %v1273, %v1272
        %v1315 = vpack.c.b16 %v1275, %v1274
        %v1316 = vpack.c.b16 %v1277, %v1276
        %v1317 = vpack.c.b16 %v1279, %v1278
        %v1318 = vpack.c.b16 %v1281, %v1280
        %v1319 = vpack.c.b16 %v1283, %v1282
        %v1320 = vpack.c.b16 %v1285, %v1284
        %v1321 = vpack.c.b16 %v1287, %v1286
        %v1322 = vpack.c.b16 %v1289, %v1288
        %v1323 = vpack.c.b16 %v1291, %v1290
        %v1324 = vpack.c.b16 %v1293, %v1292
        %v1325 = vpack.c.b16 %v1295, %v1294
        %v1326 = vpack.c.b16 %v1297, %v1296
        %v1327 = vpack.c.b16 %v1299, %v1298
        %v1328 = vpack.c.b16 %v1301, %v1300
        %v1329 = vpack.c.b16 %v1303, %v1302
        %v1330 = vpack.c.b16 %v1305, %v1304
        %v1331 = vpack.c.b16 %v1307, %v1306
        %1356 = vmatprep.subr.bf16.mxu0 0
        %1357 = vmatpush1.bf16.msra.mxu0 %v1308
        %1358 = vmatprep.subr.bf16.mxu0 0
        %1359 = vmatpush1.bf16.msra.mxu0 %v1309
        %1360 = vmatprep.subr.bf16.mxu0 0
        %1361 = vmatpush1.bf16.msra.mxu0 %v1310
        %1362 = vmatprep.subr.bf16.mxu0 0
        %1363 = vmatpush1.bf16.msra.mxu0 %v1311
        %1364 = vmatprep.subr.bf16.mxu0 0
        %1365 = vmatpush1.bf16.msra.mxu0 %v1312
        %1366 = vmatprep.subr.bf16.mxu0 0
        %1367 = vmatpush1.bf16.msra.mxu0 %v1313
        %1368 = vmatprep.subr.bf16.mxu0 0
        %1369 = vmatpush1.bf16.msra.mxu0 %v1314
        %1370 = vmatprep.subr.bf16.mxu0 0
        %1371 = vmatpush1.bf16.msra.mxu0 %v1315
        %1372 = vmatprep.subr.bf16.mxu0 0
        %1373 = vmatpush1.bf16.msra.mxu0 %v1316
        %1374 = vmatprep.subr.bf16.mxu0 0
        %1375 = vmatpush1.bf16.msra.mxu0 %v1317
        %1376 = vmatprep.subr.bf16.mxu0 0
        %1377 = vmatpush1.bf16.msra.mxu0 %v1318
        %1378 = vmatprep.subr.bf16.mxu0 0
        %1379 = vmatpush1.bf16.msra.mxu0 %v1319
        %1380 = vmatprep.subr.bf16.mxu0 0
        %1381 = vmatpush1.bf16.msra.mxu0 %v1320
        %1382 = vmatprep.subr.bf16.mxu0 0
        %1383 = vmatpush1.bf16.msra.mxu0 %v1321
        %1384 = vmatprep.subr.bf16.mxu0 0
        %1385 = vmatpush1.bf16.msra.mxu0 %v1322
        %1386 = vmatprep.subr.bf16.mxu0 0
        %1387 = vmatpush1.bf16.msra.mxu0 %v1323
        %1388 = vmatprep.mubr.bf16.mxu0 %v1068
        %1389 = vmatmul.mubr.bf16.gmra.mrb[0].mxu0 %v1067
        %v1390 = vpop.f32.mrb[0].mxu0
        %v1391 = vadd.f32 0.0, %v1390
        %v1392 = vpop.f32.mrb[0].mxu0
        %v1393 = vpop.f32.mrb[0].mxu0
        %v1394 = vadd.f32 0.0, %v1393
        %v1395 = vpop.f32.mrb[0].mxu0
        %1396 = vmatprep.mubr.bf16.mxu0 %v1071
        %1397 = vmatmul.mubr.bf16.gmra.mrb[0].mxu0 %v1070
        %v1398 = vpop.f32.mrb[0].mxu0
        %v1399 = vadd.f32 0.0, %v1398
        %v1400 = vpop.f32.mrb[0].mxu0
        %v1401 = vpop.f32.mrb[0].mxu0
        %v1402 = vadd.f32 0.0, %v1401
        %v1403 = vpop.f32.mrb[0].mxu0
        %1404 = vmatprep.mubr.bf16.mxu0 %v1074
        %1405 = vmatmul.mubr.bf16.gmra.mrb[0].mxu0 %v1073
        %v1406 = vpop.f32.mrb[0].mxu0
        %v1407 = vadd.f32 0.0, %v1406
        %v1408 = vpop.f32.mrb[0].mxu0
        %v1409 = vpop.f32.mrb[0].mxu0
        %v1410 = vadd.f32 0.0, %v1409
        %v1411 = vpop.f32.mrb[0].mxu0
        %1412 = vmatprep.mubr.bf16.mxu0 %v1077
        %1413 = vmatmul.mubr.bf16.gmra.mrb[0].mxu0 %v1076
        %v1414 = vpop.f32.mrb[0].mxu0
        %v1415 = vadd.f32 0.0, %v1414
        %v1416 = vpop.f32.mrb[0].mxu0
        %v1417 = vpop.f32.mrb[0].mxu0
        %v1418 = vadd.f32 0.0, %v1417
        %v1419 = vpop.f32.mrb[0].mxu0
        %1420 = vmatprep.mubr.bf16.mxu0 %v1080
        %1421 = vmatmul.mubr.bf16.gmra.mrb[0].mxu0 %v1079
        %v1422 = vpop.f32.mrb[0].mxu0
        %v1423 = vadd.f32 0.0, %v1422
        %v1424 = vpop.f32.mrb[0].mxu0
        %v1425 = vpop.f32.mrb[0].mxu0
        %v1426 = vadd.f32 0.0, %v1425
        %v1427 = vpop.f32.mrb[0].mxu0
        %1428 = vmatprep.mubr.bf16.mxu0 %v1083
        %1429 = vmatmul.mubr.bf16.gmra.mrb[0].mxu0 %v1082
        %v1430 = vpop.f32.mrb[0].mxu0
        %v1431 = vadd.f32 0.0, %v1430
        %v1432 = vpop.f32.mrb[0].mxu0
        %v1433 = vpop.f32.mrb[0].mxu0
        %v1434 = vadd.f32 0.0, %v1433
        %v1435 = vpop.f32.mrb[0].mxu0
        %1436 = vmatprep.mubr.bf16.mxu0 %v1086
        %1437 = vmatmul.mubr.bf16.gmra.mrb[0].mxu0 %v1085
        %v1438 = vpop.f32.mrb[0].mxu0
        %v1439 = vadd.f32 0.0, %v1438
        %v1440 = vpop.f32.mrb[0].mxu0
        %v1441 = vpop.f32.mrb[0].mxu0
        %v1442 = vadd.f32 0.0, %v1441
        %v1443 = vpop.f32.mrb[0].mxu0
        %1444 = vmatprep.mubr.bf16.mxu0 %v1089
        %1445 = vmatmul.mubr.bf16.gmra.mrb[0].mxu0 %v1088
        %v1446 = vpop.f32.mrb[0].mxu0
        %v1447 = vadd.f32 0.0, %v1446
        %v1448 = vpop.f32.mrb[0].mxu0
        %v1449 = vpop.f32.mrb[0].mxu0
        %v1450 = vadd.f32 0.0, %v1449
        %v1451 = vpop.f32.mrb[0].mxu0
        %1452 = vmatprep.mubr.bf16.mxu0 %v1092
        %1453 = vmatmul.mubr.bf16.gmra.mrb[0].mxu0 %v1091
        %v1454 = vpop.f32.mrb[0].mxu0
        %v1455 = vadd.f32 0.0, %v1454
        %v1456 = vpop.f32.mrb[0].mxu0
        %v1457 = vpop.f32.mrb[0].mxu0
        %v1458 = vadd.f32 0.0, %v1457
        %v1459 = vpop.f32.mrb[0].mxu0
        %1460 = vmatprep.mubr.bf16.mxu0 %v1095
        %1461 = vmatmul.mubr.bf16.gmra.mrb[0].mxu0 %v1094
        %v1462 = vpop.f32.mrb[0].mxu0
        %v1463 = vadd.f32 0.0, %v1462
        %v1464 = vpop.f32.mrb[0].mxu0
        %v1465 = vpop.f32.mrb[0].mxu0
        %v1466 = vadd.f32 0.0, %v1465
        %v1467 = vpop.f32.mrb[0].mxu0
        %1468 = vmatprep.mubr.bf16.mxu0 %v1098
        %1469 = vmatmul.mubr.bf16.gmra.mrb[0].mxu0 %v1097
        %v1470 = vpop.f32.mrb[0].mxu0
        %v1471 = vadd.f32 0.0, %v1470
        %v1472 = vpop.f32.mrb[0].mxu0
        %v1473 = vpop.f32.mrb[0].mxu0
        %v1474 = vadd.f32 0.0, %v1473
        %v1475 = vpop.f32.mrb[0].mxu0
        %1476 = vmatprep.mubr.bf16.mxu0 %v1101
        %1477 = vmatmul.mubr.bf16.gmra.mrb[0].mxu0 %v1100
        %v1478 = vpop.f32.mrb[0].mxu0
        %v1479 = vadd.f32 0.0, %v1478
        %v1480 = vpop.f32.mrb[0].mxu0
        %v1481 = vpop.f32.mrb[0].mxu0
        %v1482 = vadd.f32 0.0, %v1481
        %v1483 = vpop.f32.mrb[0].mxu0
        %1484 = vmatprep.mubr.bf16.mxu0 %v1104
        %1485 = vmatmul.mubr.bf16.gmra.mrb[0].mxu0 %v1103
        %v1486 = vpop.f32.mrb[0].mxu0
        %v1487 = vadd.f32 0.0, %v1486
        %v1488 = vpop.f32.mrb[0].mxu0
        %v1489 = vpop.f32.mrb[0].mxu0
        %v1490 = vadd.f32 0.0, %v1489
        %v1491 = vpop.f32.mrb[0].mxu0
        %1492 = vmatprep.mubr.bf16.mxu0 %v1107
        %1493 = vmatmul.mubr.bf16.gmra.mrb[0].mxu0 %v1106
        %v1494 = vpop.f32.mrb[0].mxu0
        %v1495 = vadd.f32 0.0, %v1494
        %v1496 = vpop.f32.mrb[0].mxu0
        %v1497 = vpop.f32.mrb[0].mxu0
        %v1498 = vadd.f32 0.0, %v1497
        %v1499 = vpop.f32.mrb[0].mxu0
        %1500 = vmatprep.mubr.bf16.mxu0 %v1110
        %1501 = vmatmul.mubr.bf16.gmra.mrb[0].mxu0 %v1109
        %v1502 = vpop.f32.mrb[0].mxu0
        %v1503 = vadd.f32 0.0, %v1502
        %v1504 = vpop.f32.mrb[0].mxu0
        %v1505 = vpop.f32.mrb[0].mxu0
        %v1506 = vadd.f32 0.0, %v1505
        %v1507 = vpop.f32.mrb[0].mxu0
        %1508 = vmatprep.mubr.bf16.mxu0 %v1161
        %1509 = vmatmul.mubr.bf16.gmra.mrb[0].mxu0 %v1160
        %v1510 = vpop.f32.mrb[0].mxu0
        %v1511 = vadd.f32 0.0, %v1510
        %v1512 = vpop.f32.mrb[0].mxu0
        %v1513 = vpop.f32.mrb[0].mxu0
        %v1514 = vadd.f32 0.0, %v1513
        %v1515 = vpop.f32.mrb[0].mxu0
        %1516 = vdwg.mxu0
        %1517 = vmatprep.subr.bf16.mxu0 0
        %1518 = vmatpush1.bf16.msra.mxu0 %v1324
        %1519 = vmatprep.subr.bf16.mxu0 0
        %1520 = vmatpush1.bf16.msra.mxu0 %v1325
        %1521 = vmatprep.subr.bf16.mxu0 0
        %1522 = vmatpush1.bf16.msra.mxu0 %v1326
        %1523 = vmatprep.subr.bf16.mxu0 0
        %1524 = vmatpush1.bf16.msra.mxu0 %v1327
        %1525 = vmatprep.subr.bf16.mxu0 0
        %1526 = vmatpush1.bf16.msra.mxu0 %v1328
        %1527 = vmatprep.subr.bf16.mxu0 0
        %1528 = vmatpush1.bf16.msra.mxu0 %v1329
        %1529 = vmatprep.subr.bf16.mxu0 0
        %1530 = vmatpush1.bf16.msra.mxu0 %v1330
        %1531 = vmatprep.subr.bf16.mxu0 0
        %1532 = vmatpush1.bf16.msra.mxu0 %v1331
        %1533 = vmatprep.subr.bf16.mxu0 0
        %1534 = vmatpush1.bf16.msra.mxu0 0
        %1535 = vmatprep.subr.bf16.mxu0 0
        %1536 = vmatpush1.bf16.msra.mxu0 0
        %1537 = vmatprep.subr.bf16.mxu0 0
        %1538 = vmatpush1.bf16.msra.mxu0 0
        %1539 = vmatprep.subr.bf16.mxu0 0
        %1540 = vmatpush1.bf16.msra.mxu0 0
        %1541 = vmatprep.subr.bf16.mxu0 0
        %1542 = vmatpush1.bf16.msra.mxu0 0
        %1543 = vmatprep.subr.bf16.mxu0 0
        %1544 = vmatpush1.bf16.msra.mxu0 0
        %1545 = vmatprep.subr.bf16.mxu0 0
        %1546 = vmatpush1.bf16.msra.mxu0 0
        %1547 = vmatprep.subr.bf16.mxu0 0
        %1548 = vmatpush1.bf16.msra.mxu0 0
        %1549 = vmatprep.mubr.bf16.mxu0 0
        %1550 = vmatmul.mubr.bf16.gmra.mrb[0].mxu0 %v1069
        %v1551 = vpop.f32.mrb[0].mxu0
        %v1552 = vadd.f32 %v1391, %v1551
        %v1553 = vpop.f32.mrb[0].mxu0
        %v1554 = vpop.f32.mrb[0].mxu0
        %v1555 = vadd.f32 %v1394, %v1554
        %v1556 = vpop.f32.mrb[0].mxu0
        %1557 = vmatprep.mubr.bf16.mxu0 0
        %1558 = vmatmul.mubr.bf16.gmra.mrb[0].mxu0 %v1072
        %v1559 = vpop.f32.mrb[0].mxu0
        %v1560 = vadd.f32 %v1399, %v1559
        %v1561 = vpop.f32.mrb[0].mxu0
        %v1562 = vpop.f32.mrb[0].mxu0
        %v1563 = vadd.f32 %v1402, %v1562
        %v1564 = vpop.f32.mrb[0].mxu0
        %1565 = vmatprep.mubr.bf16.mxu0 0
        %1566 = vmatmul.mubr.bf16.gmra.mrb[0].mxu0 %v1075
        %v1567 = vpop.f32.mrb[0].mxu0
        %v1568 = vadd.f32 %v1407, %v1567
        %v1569 = vpop.f32.mrb[0].mxu0
        %v1570 = vpop.f32.mrb[0].mxu0
        %v1571 = vadd.f32 %v1410, %v1570
        %v1572 = vpop.f32.mrb[0].mxu0
        %1573 = vmatprep.mubr.bf16.mxu0 0
        %1574 = vmatmul.mubr.bf16.gmra.mrb[0].mxu0 %v1078
        %v1575 = vpop.f32.mrb[0].mxu0
        %v1576 = vadd.f32 %v1415, %v1575
        %v1577 = vpop.f32.mrb[0].mxu0
        %v1578 = vpop.f32.mrb[0].mxu0
        %v1579 = vadd.f32 %v1418, %v1578
        %v1580 = vpop.f32.mrb[0].mxu0
        %1581 = vmatprep.mubr.bf16.mxu0 0
        %1582 = vmatmul.mubr.bf16.gmra.mrb[0].mxu0 %v1081
        %v1583 = vpop.f32.mrb[0].mxu0
        %v1584 = vadd.f32 %v1423, %v1583
        %v1585 = vpop.f32.mrb[0].mxu0
        %v1586 = vpop.f32.mrb[0].mxu0
        %v1587 = vadd.f32 %v1426, %v1586
        %v1588 = vpop.f32.mrb[0].mxu0
        %1589 = vmatprep.mubr.bf16.mxu0 0
        %1590 = vmatmul.mubr.bf16.gmra.mrb[0].mxu0 %v1084
        %v1591 = vpop.f32.mrb[0].mxu0
        %v1592 = vadd.f32 %v1431, %v1591
        %v1593 = vpop.f32.mrb[0].mxu0
        %v1594 = vpop.f32.mrb[0].mxu0
        %v1595 = vadd.f32 %v1434, %v1594
        %v1596 = vpop.f32.mrb[0].mxu0
        %1597 = vmatprep.mubr.bf16.mxu0 0
        %1598 = vmatmul.mubr.bf16.gmra.mrb[0].mxu0 %v1087
        %v1599 = vpop.f32.mrb[0].mxu0
        %v1600 = vadd.f32 %v1439, %v1599
        %v1601 = vpop.f32.mrb[0].mxu0
        %v1602 = vpop.f32.mrb[0].mxu0
        %v1603 = vadd.f32 %v1442, %v1602
        %v1604 = vpop.f32.mrb[0].mxu0
        %1605 = vmatprep.mubr.bf16.mxu0 0
        %1606 = vmatmul.mubr.bf16.gmra.mrb[0].mxu0 %v1090
        %v1607 = vpop.f32.mrb[0].mxu0
        %v1608 = vadd.f32 %v1447, %v1607
        %v1609 = vpop.f32.mrb[0].mxu0
        %v1610 = vpop.f32.mrb[0].mxu0
        %v1611 = vadd.f32 %v1450, %v1610
        %v1612 = vpop.f32.mrb[0].mxu0
        %1613 = vmatprep.mubr.bf16.mxu0 0
        %1614 = vmatmul.mubr.bf16.gmra.mrb[0].mxu0 %v1093
        %v1615 = vpop.f32.mrb[0].mxu0
        %v1616 = vadd.f32 %v1455, %v1615
        %v1617 = vpop.f32.mrb[0].mxu0
        %v1618 = vpop.f32.mrb[0].mxu0
        %v1619 = vadd.f32 %v1458, %v1618
        %v1620 = vpop.f32.mrb[0].mxu0
        %1621 = vmatprep.mubr.bf16.mxu0 0
        %1622 = vmatmul.mubr.bf16.gmra.mrb[0].mxu0 %v1096
        %v1623 = vpop.f32.mrb[0].mxu0
        %v1624 = vadd.f32 %v1463, %v1623
        %v1625 = vpop.f32.mrb[0].mxu0
        %v1626 = vpop.f32.mrb[0].mxu0
        %v1627 = vadd.f32 %v1466, %v1626
        %v1628 = vpop.f32.mrb[0].mxu0
        %1629 = vmatprep.mubr.bf16.mxu0 0
        %1630 = vmatmul.mubr.bf16.gmra.mrb[0].mxu0 %v1099
        %v1631 = vpop.f32.mrb[0].mxu0
        %v1632 = vadd.f32 %v1471, %v1631
        %v1633 = vpop.f32.mrb[0].mxu0
        %v1634 = vpop.f32.mrb[0].mxu0
        %v1635 = vadd.f32 %v1474, %v1634
        %v1636 = vpop.f32.mrb[0].mxu0
        %1637 = vmatprep.mubr.bf16.mxu0 0
        %1638 = vmatmul.mubr.bf16.gmra.mrb[0].mxu0 %v1102
        %v1639 = vpop.f32.mrb[0].mxu0
        %v1640 = vadd.f32 %v1479, %v1639
        %v1641 = vpop.f32.mrb[0].mxu0
        %v1642 = vpop.f32.mrb[0].mxu0
        %v1643 = vadd.f32 %v1482, %v1642
        %v1644 = vpop.f32.mrb[0].mxu0
        %1645 = vmatprep.mubr.bf16.mxu0 0
        %1646 = vmatmul.mubr.bf16.gmra.mrb[0].mxu0 %v1105
        %v1647 = vpop.f32.mrb[0].mxu0
        %v1648 = vadd.f32 %v1487, %v1647
        %v1649 = vpop.f32.mrb[0].mxu0
        %v1650 = vpop.f32.mrb[0].mxu0
        %v1651 = vadd.f32 %v1490, %v1650
        %v1652 = vpop.f32.mrb[0].mxu0
        %1653 = vmatprep.mubr.bf16.mxu0 0
        %1654 = vmatmul.mubr.bf16.gmra.mrb[0].mxu0 %v1108
        %v1655 = vpop.f32.mrb[0].mxu0
        %v1656 = vadd.f32 %v1495, %v1655
        %v1657 = vpop.f32.mrb[0].mxu0
        %v1658 = vpop.f32.mrb[0].mxu0
        %v1659 = vadd.f32 %v1498, %v1658
        %v1660 = vpop.f32.mrb[0].mxu0
        %1661 = vmatprep.mubr.bf16.mxu0 0
        %1662 = vmatmul.mubr.bf16.gmra.mrb[0].mxu0 %v1111
        %v1663 = vpop.f32.mrb[0].mxu0
        %v1664 = vadd.f32 %v1503, %v1663
        %v1665 = vpop.f32.mrb[0].mxu0
        %v1666 = vpop.f32.mrb[0].mxu0
        %v1667 = vadd.f32 %v1506, %v1666
        %v1668 = vpop.f32.mrb[0].mxu0
        %1669 = vmatprep.mubr.bf16.mxu0 0
        %1670 = vmatmul.mubr.bf16.gmra.mrb[0].mxu0 %v1162
        %v1671 = vpop.f32.mrb[0].mxu0
        %v1672 = vadd.f32 %v1511, %v1671
        %v1673 = vpop.f32.mrb[0].mxu0
        %v1674 = vpop.f32.mrb[0].mxu0
        %v1675 = vadd.f32 %v1514, %v1674
        %v1676 = vpop.f32.mrb[0].mxu0
        %1677 = vdwg.mxu0
        %v1726 = vunpack.c.l.b16 %v1112
        %v1727 = vunpack.c.l.b16 %v1113
        %v1728 = vunpack.c.l.b16 %v1114
        %v1729 = vunpack.c.l.b16 %v1115
        %v1730 = vunpack.c.l.b16 %v1116
        %v1731 = vunpack.c.l.b16 %v1117
        %v1732 = vunpack.c.l.b16 %v1118
        %v1733 = vunpack.c.l.b16 %v1119
        %v1734 = vunpack.c.l.b16 %v1120
        %v1735 = vunpack.c.l.b16 %v1121
        %v1736 = vunpack.c.l.b16 %v1122
        %v1737 = vunpack.c.l.b16 %v1123
        %v1738 = vunpack.c.l.b16 %v1124
        %v1739 = vunpack.c.l.b16 %v1125
        %v1740 = vunpack.c.l.b16 %v1126
        %v1741 = vunpack.c.l.b16 %v1127
        %v1742 = vunpack.c.l.b16 %v1128
        %v1743 = vunpack.c.l.b16 %v1129
        %v1744 = vunpack.c.l.b16 %v1130
        %v1745 = vunpack.c.l.b16 %v1131
        %v1746 = vunpack.c.l.b16 %v1132
        %v1747 = vunpack.c.l.b16 %v1133
        %v1748 = vunpack.c.l.b16 %v1134
        %v1749 = vunpack.c.l.b16 %v1135
        %v1750 = vunpack.c.l.b16 %v1136
        %v1751 = vunpack.c.l.b16 %v1137
        %v1752 = vunpack.c.l.b16 %v1138
        %v1753 = vunpack.c.l.b16 %v1139
        %v1754 = vunpack.c.l.b16 %v1140
        %v1755 = vunpack.c.l.b16 %v1141
        %v1756 = vunpack.c.l.b16 %v1142
        %v1757 = vunpack.c.l.b16 %v1143
        %v1758 = vunpack.c.l.b16 %v1144
        %v1759 = vunpack.c.l.b16 %v1145
        %v1760 = vunpack.c.l.b16 %v1146
        %v1761 = vunpack.c.l.b16 %v1147
        %v1762 = vunpack.c.l.b16 %v1148
        %v1763 = vunpack.c.l.b16 %v1149
        %v1764 = vunpack.c.l.b16 %v1150
        %v1765 = vunpack.c.l.b16 %v1151
        %v1766 = vunpack.c.l.b16 %v1152
        %v1767 = vunpack.c.l.b16 %v1153
        %v1768 = vunpack.c.l.b16 %v1154
        %v1769 = vunpack.c.l.b16 %v1155
        %v1770 = vunpack.c.l.b16 %v1156
        %v1771 = vunpack.c.l.b16 %v1157
        %v1772 = vunpack.c.l.b16 %v1158
        %v1773 = vunpack.c.l.b16 %v1159
        %v1774 = vpack.c.b16 %v1727, %v1726
        %v1775 = vpack.c.b16 %v1729, %v1728
        %v1776 = vpack.c.b16 %v1731, %v1730
        %v1777 = vpack.c.b16 %v1733, %v1732
        %v1778 = vpack.c.b16 %v1735, %v1734
        %v1779 = vpack.c.b16 %v1737, %v1736
        %v1780 = vpack.c.b16 %v1739, %v1738
        %v1781 = vpack.c.b16 %v1741, %v1740
        %v1782 = vpack.c.b16 %v1743, %v1742
        %v1783 = vpack.c.b16 %v1745, %v1744
        %v1784 = vpack.c.b16 %v1747, %v1746
        %v1785 = vpack.c.b16 %v1749, %v1748
        %v1786 = vpack.c.b16 %v1751, %v1750
        %v1787 = vpack.c.b16 %v1753, %v1752
        %v1788 = vpack.c.b16 %v1755, %v1754
        %v1789 = vpack.c.b16 %v1757, %v1756
        %v1790 = vpack.c.b16 %v1759, %v1758
        %v1791 = vpack.c.b16 %v1761, %v1760
        %v1792 = vpack.c.b16 %v1763, %v1762
        %v1793 = vpack.c.b16 %v1765, %v1764
        %v1794 = vpack.c.b16 %v1767, %v1766
        %v1795 = vpack.c.b16 %v1769, %v1768
        %v1796 = vpack.c.b16 %v1771, %v1770
        %v1797 = vpack.c.b16 %v1773, %v1772
        %1822 = vmatprep.subr.bf16.mxu0 0
        %1823 = vmatpush1.bf16.msra.mxu0 %v1774
        %1824 = vmatprep.subr.bf16.mxu0 0
        %1825 = vmatpush1.bf16.msra.mxu0 %v1775
        %1826 = vmatprep.subr.bf16.mxu0 0
        %1827 = vmatpush1.bf16.msra.mxu0 %v1776
        %1828 = vmatprep.subr.bf16.mxu0 0
        %1829 = vmatpush1.bf16.msra.mxu0 %v1777
        %1830 = vmatprep.subr.bf16.mxu0 0
        %1831 = vmatpush1.bf16.msra.mxu0 %v1778
        %1832 = vmatprep.subr.bf16.mxu0 0
        %1833 = vmatpush1.bf16.msra.mxu0 %v1779
        %1834 = vmatprep.subr.bf16.mxu0 0
        %1835 = vmatpush1.bf16.msra.mxu0 %v1780
        %1836 = vmatprep.subr.bf16.mxu0 0
        %1837 = vmatpush1.bf16.msra.mxu0 %v1781
        %1838 = vmatprep.subr.bf16.mxu0 0
        %1839 = vmatpush1.bf16.msra.mxu0 %v1782
        %1840 = vmatprep.subr.bf16.mxu0 0
        %1841 = vmatpush1.bf16.msra.mxu0 %v1783
        %1842 = vmatprep.subr.bf16.mxu0 0
        %1843 = vmatpush1.bf16.msra.mxu0 %v1784
        %1844 = vmatprep.subr.bf16.mxu0 0
        %1845 = vmatpush1.bf16.msra.mxu0 %v1785
        %1846 = vmatprep.subr.bf16.mxu0 0
        %1847 = vmatpush1.bf16.msra.mxu0 %v1786
        %1848 = vmatprep.subr.bf16.mxu0 0
        %1849 = vmatpush1.bf16.msra.mxu0 %v1787
        %1850 = vmatprep.subr.bf16.mxu0 0
        %1851 = vmatpush1.bf16.msra.mxu0 %v1788
        %1852 = vmatprep.subr.bf16.mxu0 0
        %1853 = vmatpush1.bf16.msra.mxu0 %v1789
        %1854 = vmatprep.mubr.bf16.mxu0 %v1065
        %1855 = vmatmul.mubr.bf16.gmra.mrb[0].mxu0 %v1064
        %v1856 = vpop.f32.mrb[0].mxu0
        %v1857 = vadd.f32 %v1552, %v1856
        %v1858 = vpop.f32.mrb[0].mxu0
        %v1859 = vpop.f32.mrb[0].mxu0
        %v1860 = vadd.f32 %v1555, %v1859
        %v1861 = vpop.f32.mrb[0].mxu0
        %1862 = vmatprep.mubr.bf16.mxu0 %v1068
        %1863 = vmatmul.mubr.bf16.gmra.mrb[0].mxu0 %v1067
        %v1864 = vpop.f32.mrb[0].mxu0
        %v1865 = vadd.f32 %v1560, %v1864
        %v1866 = vpop.f32.mrb[0].mxu0
        %v1867 = vpop.f32.mrb[0].mxu0
        %v1868 = vadd.f32 %v1563, %v1867
        %v1869 = vpop.f32.mrb[0].mxu0
        %1870 = vmatprep.mubr.bf16.mxu0 %v1071
        %1871 = vmatmul.mubr.bf16.gmra.mrb[0].mxu0 %v1070
        %v1872 = vpop.f32.mrb[0].mxu0
        %v1873 = vadd.f32 %v1568, %v1872
        %v1874 = vpop.f32.mrb[0].mxu0
        %v1875 = vpop.f32.mrb[0].mxu0
        %v1876 = vadd.f32 %v1571, %v1875
        %v1877 = vpop.f32.mrb[0].mxu0
        %1878 = vmatprep.mubr.bf16.mxu0 %v1074
        %1879 = vmatmul.mubr.bf16.gmra.mrb[0].mxu0 %v1073
        %v1880 = vpop.f32.mrb[0].mxu0
        %v1881 = vadd.f32 %v1576, %v1880
        %v1882 = vpop.f32.mrb[0].mxu0
        %v1883 = vpop.f32.mrb[0].mxu0
        %v1884 = vadd.f32 %v1579, %v1883
        %v1885 = vpop.f32.mrb[0].mxu0
        %1886 = vmatprep.mubr.bf16.mxu0 %v1077
        %1887 = vmatmul.mubr.bf16.gmra.mrb[0].mxu0 %v1076
        %v1888 = vpop.f32.mrb[0].mxu0
        %v1889 = vadd.f32 %v1584, %v1888
        %v1890 = vpop.f32.mrb[0].mxu0
        %v1891 = vpop.f32.mrb[0].mxu0
        %v1892 = vadd.f32 %v1587, %v1891
        %v1893 = vpop.f32.mrb[0].mxu0
        %1894 = vmatprep.mubr.bf16.mxu0 %v1080
        %1895 = vmatmul.mubr.bf16.gmra.mrb[0].mxu0 %v1079
        %v1896 = vpop.f32.mrb[0].mxu0
        %v1897 = vadd.f32 %v1592, %v1896
        %v1898 = vpop.f32.mrb[0].mxu0
        %v1899 = vpop.f32.mrb[0].mxu0
        %v1900 = vadd.f32 %v1595, %v1899
        %v1901 = vpop.f32.mrb[0].mxu0
        %1902 = vmatprep.mubr.bf16.mxu0 %v1083
        %1903 = vmatmul.mubr.bf16.gmra.mrb[0].mxu0 %v1082
        %v1904 = vpop.f32.mrb[0].mxu0
        %v1905 = vadd.f32 %v1600, %v1904
        %v1906 = vpop.f32.mrb[0].mxu0
        %v1907 = vpop.f32.mrb[0].mxu0
        %v1908 = vadd.f32 %v1603, %v1907
        %v1909 = vpop.f32.mrb[0].mxu0
        %1910 = vmatprep.mubr.bf16.mxu0 %v1086
        %1911 = vmatmul.mubr.bf16.gmra.mrb[0].mxu0 %v1085
        %v1912 = vpop.f32.mrb[0].mxu0
        %v1913 = vadd.f32 %v1608, %v1912
        %v1914 = vpop.f32.mrb[0].mxu0
        %v1915 = vpop.f32.mrb[0].mxu0
        %v1916 = vadd.f32 %v1611, %v1915
        %v1917 = vpop.f32.mrb[0].mxu0
        %1918 = vmatprep.mubr.bf16.mxu0 %v1089
        %1919 = vmatmul.mubr.bf16.gmra.mrb[0].mxu0 %v1088
        %v1920 = vpop.f32.mrb[0].mxu0
        %v1921 = vadd.f32 %v1616, %v1920
        %v1922 = vpop.f32.mrb[0].mxu0
        %v1923 = vpop.f32.mrb[0].mxu0
        %v1924 = vadd.f32 %v1619, %v1923
        %v1925 = vpop.f32.mrb[0].mxu0
        %1926 = vmatprep.mubr.bf16.mxu0 %v1092
        %1927 = vmatmul.mubr.bf16.gmra.mrb[0].mxu0 %v1091
        %v1928 = vpop.f32.mrb[0].mxu0
        %v1929 = vadd.f32 %v1624, %v1928
        %v1930 = vpop.f32.mrb[0].mxu0
        %v1931 = vpop.f32.mrb[0].mxu0
        %v1932 = vadd.f32 %v1627, %v1931
        %v1933 = vpop.f32.mrb[0].mxu0
        %1934 = vmatprep.mubr.bf16.mxu0 %v1095
        %1935 = vmatmul.mubr.bf16.gmra.mrb[0].mxu0 %v1094
        %v1936 = vpop.f32.mrb[0].mxu0
        %v1937 = vadd.f32 %v1632, %v1936
        %v1938 = vpop.f32.mrb[0].mxu0
        %v1939 = vpop.f32.mrb[0].mxu0
        %v1940 = vadd.f32 %v1635, %v1939
        %v1941 = vpop.f32.mrb[0].mxu0
        %1942 = vmatprep.mubr.bf16.mxu0 %v1098
        %1943 = vmatmul.mubr.bf16.gmra.mrb[0].mxu0 %v1097
        %v1944 = vpop.f32.mrb[0].mxu0
        %v1945 = vadd.f32 %v1640, %v1944
        %v1946 = vpop.f32.mrb[0].mxu0
        %v1947 = vpop.f32.mrb[0].mxu0
        %v1948 = vadd.f32 %v1643, %v1947
        %v1949 = vpop.f32.mrb[0].mxu0
        %1950 = vmatprep.mubr.bf16.mxu0 %v1101
        %1951 = vmatmul.mubr.bf16.gmra.mrb[0].mxu0 %v1100
        %v1952 = vpop.f32.mrb[0].mxu0
        %v1953 = vadd.f32 %v1648, %v1952
        %v1954 = vpop.f32.mrb[0].mxu0
        %v1955 = vpop.f32.mrb[0].mxu0
        %v1956 = vadd.f32 %v1651, %v1955
        %v1957 = vpop.f32.mrb[0].mxu0
        %1958 = vmatprep.mubr.bf16.mxu0 %v1104
        %1959 = vmatmul.mubr.bf16.gmra.mrb[0].mxu0 %v1103
        %v1960 = vpop.f32.mrb[0].mxu0
        %v1961 = vadd.f32 %v1656, %v1960
        %v1962 = vpop.f32.mrb[0].mxu0
        %v1963 = vpop.f32.mrb[0].mxu0
        %v1964 = vadd.f32 %v1659, %v1963
        %v1965 = vpop.f32.mrb[0].mxu0
        %1966 = vmatprep.mubr.bf16.mxu0 %v1107
        %1967 = vmatmul.mubr.bf16.gmra.mrb[0].mxu0 %v1106
        %v1968 = vpop.f32.mrb[0].mxu0
        %v1969 = vadd.f32 %v1664, %v1968
        %v1970 = vpop.f32.mrb[0].mxu0
        %v1971 = vpop.f32.mrb[0].mxu0
        %v1972 = vadd.f32 %v1667, %v1971
        %v1973 = vpop.f32.mrb[0].mxu0
        %1974 = vmatprep.mubr.bf16.mxu0 %v1110
        %1975 = vmatmul.mubr.bf16.gmra.mrb[0].mxu0 %v1109
        %v1976 = vpop.f32.mrb[0].mxu0
        %v1977 = vadd.f32 %v1672, %v1976
        %v1978 = vpop.f32.mrb[0].mxu0
        %v1979 = vpop.f32.mrb[0].mxu0
        %v1980 = vadd.f32 %v1675, %v1979
        %v1981 = vpop.f32.mrb[0].mxu0
        %1982 = vdwg.mxu0
        %1983 = vmatprep.subr.bf16.mxu0 0
        %1984 = vmatpush1.bf16.msra.mxu0 %v1790
        %1985 = vmatprep.subr.bf16.mxu0 0
        %1986 = vmatpush1.bf16.msra.mxu0 %v1791
        %1987 = vmatprep.subr.bf16.mxu0 0
        %1988 = vmatpush1.bf16.msra.mxu0 %v1792
        %1989 = vmatprep.subr.bf16.mxu0 0
        %1990 = vmatpush1.bf16.msra.mxu0 %v1793
        %1991 = vmatprep.subr.bf16.mxu0 0
        %1992 = vmatpush1.bf16.msra.mxu0 %v1794
        %1993 = vmatprep.subr.bf16.mxu0 0
        %1994 = vmatpush1.bf16.msra.mxu0 %v1795
        %1995 = vmatprep.subr.bf16.mxu0 0
        %1996 = vmatpush1.bf16.msra.mxu0 %v1796
        %1997 = vmatprep.subr.bf16.mxu0 0
        %1998 = vmatpush1.bf16.msra.mxu0 %v1797
        %1999 = vmatprep.subr.bf16.mxu0 0
        %2000 = vmatpush1.bf16.msra.mxu0 0
        %2001 = vmatprep.subr.bf16.mxu0 0
        %2002 = vmatpush1.bf16.msra.mxu0 0
        %2003 = vmatprep.subr.bf16.mxu0 0
        %2004 = vmatpush1.bf16.msra.mxu0 0
        %2005 = vmatprep.subr.bf16.mxu0 0
        %2006 = vmatpush1.bf16.msra.mxu0 0
        %2007 = vmatprep.subr.bf16.mxu0 0
        %2008 = vmatpush1.bf16.msra.mxu0 0
        %2009 = vmatprep.subr.bf16.mxu0 0
        %2010 = vmatpush1.bf16.msra.mxu0 0
        %2011 = vmatprep.subr.bf16.mxu0 0
        %2012 = vmatpush1.bf16.msra.mxu0 0
        %2013 = vmatprep.subr.bf16.mxu0 0
        %2014 = vmatpush1.bf16.msra.mxu0 0
        %2015 = vmatprep.mubr.bf16.mxu0 0
        %2016 = vmatmul.mubr.bf16.gmra.mrb[0].mxu0 %v1066
        %v2017 = vpop.f32.mrb[0].mxu0
        %v2018 = vadd.f32 %v1857, %v2017
        %v2019 = vpop.f32.mrb[0].mxu0
        %v2020 = vpop.f32.mrb[0].mxu0
        %v2021 = vadd.f32 %v1860, %v2020
        %v2022 = vpop.f32.mrb[0].mxu0
        %2023 = vmatprep.mubr.bf16.mxu0 0
        %2024 = vmatmul.mubr.bf16.gmra.mrb[0].mxu0 %v1069
        %v2025 = vpop.f32.mrb[0].mxu0
        %v2026 = vadd.f32 %v1865, %v2025
        %v2027 = vpop.f32.mrb[0].mxu0
        %v2028 = vpop.f32.mrb[0].mxu0
        %v2029 = vadd.f32 %v1868, %v2028
        %v2030 = vpop.f32.mrb[0].mxu0
        %2031 = vmatprep.mubr.bf16.mxu0 0
        %2032 = vmatmul.mubr.bf16.gmra.mrb[0].mxu0 %v1072
        %v2033 = vpop.f32.mrb[0].mxu0
        %v2034 = vadd.f32 %v1873, %v2033
        %v2035 = vpop.f32.mrb[0].mxu0
        %v2036 = vpop.f32.mrb[0].mxu0
        %v2037 = vadd.f32 %v1876, %v2036
        %v2038 = vpop.f32.mrb[0].mxu0
        %2039 = vmatprep.mubr.bf16.mxu0 0
        %2040 = vmatmul.mubr.bf16.gmra.mrb[0].mxu0 %v1075
        %v2041 = vpop.f32.mrb[0].mxu0
        %v2042 = vadd.f32 %v1881, %v2041
        %v2043 = vpop.f32.mrb[0].mxu0
        %v2044 = vpop.f32.mrb[0].mxu0
        %v2045 = vadd.f32 %v1884, %v2044
        %v2046 = vpop.f32.mrb[0].mxu0
        %2047 = vmatprep.mubr.bf16.mxu0 0
        %2048 = vmatmul.mubr.bf16.gmra.mrb[0].mxu0 %v1078
        %v2049 = vpop.f32.mrb[0].mxu0
        %v2050 = vadd.f32 %v1889, %v2049
        %v2051 = vpop.f32.mrb[0].mxu0
        %v2052 = vpop.f32.mrb[0].mxu0
        %v2053 = vadd.f32 %v1892, %v2052
        %v2054 = vpop.f32.mrb[0].mxu0
        %2055 = vmatprep.mubr.bf16.mxu0 0
        %2056 = vmatmul.mubr.bf16.gmra.mrb[0].mxu0 %v1081
        %v2057 = vpop.f32.mrb[0].mxu0
        %v2058 = vadd.f32 %v1897, %v2057
        %v2059 = vpop.f32.mrb[0].mxu0
        %v2060 = vpop.f32.mrb[0].mxu0
        %v2061 = vadd.f32 %v1900, %v2060
        %v2062 = vpop.f32.mrb[0].mxu0
        %2063 = vmatprep.mubr.bf16.mxu0 0
        %2064 = vmatmul.mubr.bf16.gmra.mrb[0].mxu0 %v1084
        %v2065 = vpop.f32.mrb[0].mxu0
        %v2066 = vadd.f32 %v1905, %v2065
        %v2067 = vpop.f32.mrb[0].mxu0
        %v2068 = vpop.f32.mrb[0].mxu0
        %v2069 = vadd.f32 %v1908, %v2068
        %v2070 = vpop.f32.mrb[0].mxu0
        %2071 = vmatprep.mubr.bf16.mxu0 0
        %2072 = vmatmul.mubr.bf16.gmra.mrb[0].mxu0 %v1087
        %v2073 = vpop.f32.mrb[0].mxu0
        %v2074 = vadd.f32 %v1913, %v2073
        %v2075 = vpop.f32.mrb[0].mxu0
        %v2076 = vpop.f32.mrb[0].mxu0
        %v2077 = vadd.f32 %v1916, %v2076
        %v2078 = vpop.f32.mrb[0].mxu0
        %2079 = vmatprep.mubr.bf16.mxu0 0
        %2080 = vmatmul.mubr.bf16.gmra.mrb[0].mxu0 %v1090
        %v2081 = vpop.f32.mrb[0].mxu0
        %v2082 = vadd.f32 %v1921, %v2081
        %v2083 = vpop.f32.mrb[0].mxu0
        %v2084 = vpop.f32.mrb[0].mxu0
        %v2085 = vadd.f32 %v1924, %v2084
        %v2086 = vpop.f32.mrb[0].mxu0
        %2087 = vmatprep.mubr.bf16.mxu0 0
        %2088 = vmatmul.mubr.bf16.gmra.mrb[0].mxu0 %v1093
        %v2089 = vpop.f32.mrb[0].mxu0
        %v2090 = vadd.f32 %v1929, %v2089
        %v2091 = vpop.f32.mrb[0].mxu0
        %v2092 = vpop.f32.mrb[0].mxu0
        %v2093 = vadd.f32 %v1932, %v2092
        %v2094 = vpop.f32.mrb[0].mxu0
        %2095 = vmatprep.mubr.bf16.mxu0 0
        %2096 = vmatmul.mubr.bf16.gmra.mrb[0].mxu0 %v1096
        %v2097 = vpop.f32.mrb[0].mxu0
        %v2098 = vadd.f32 %v1937, %v2097
        %v2099 = vpop.f32.mrb[0].mxu0
        %v2100 = vpop.f32.mrb[0].mxu0
        %v2101 = vadd.f32 %v1940, %v2100
        %v2102 = vpop.f32.mrb[0].mxu0
        %2103 = vmatprep.mubr.bf16.mxu0 0
        %2104 = vmatmul.mubr.bf16.gmra.mrb[0].mxu0 %v1099
        %v2105 = vpop.f32.mrb[0].mxu0
        %v2106 = vadd.f32 %v1945, %v2105
        %v2107 = vpop.f32.mrb[0].mxu0
        %v2108 = vpop.f32.mrb[0].mxu0
        %v2109 = vadd.f32 %v1948, %v2108
        %v2110 = vpop.f32.mrb[0].mxu0
        %2111 = vmatprep.mubr.bf16.mxu0 0
        %2112 = vmatmul.mubr.bf16.gmra.mrb[0].mxu0 %v1102
        %v2113 = vpop.f32.mrb[0].mxu0
        %v2114 = vadd.f32 %v1953, %v2113
        %v2115 = vpop.f32.mrb[0].mxu0
        %v2116 = vpop.f32.mrb[0].mxu0
        %v2117 = vadd.f32 %v1956, %v2116
        %v2118 = vpop.f32.mrb[0].mxu0
        %2119 = vmatprep.mubr.bf16.mxu0 0
        %2120 = vmatmul.mubr.bf16.gmra.mrb[0].mxu0 %v1105
        %v2121 = vpop.f32.mrb[0].mxu0
        %v2122 = vadd.f32 %v1961, %v2121
        %v2123 = vpop.f32.mrb[0].mxu0
        %v2124 = vpop.f32.mrb[0].mxu0
        %v2125 = vadd.f32 %v1964, %v2124
        %v2126 = vpop.f32.mrb[0].mxu0
        %2127 = vmatprep.mubr.bf16.mxu0 0
        %2128 = vmatmul.mubr.bf16.gmra.mrb[0].mxu0 %v1108
        %v2129 = vpop.f32.mrb[0].mxu0
        %v2130 = vadd.f32 %v1969, %v2129
        %v2131 = vpop.f32.mrb[0].mxu0
        %v2132 = vpop.f32.mrb[0].mxu0
        %v2133 = vadd.f32 %v1972, %v2132
        %v2134 = vpop.f32.mrb[0].mxu0
        %2135 = vmatprep.mubr.bf16.mxu0 0
        %2136 = vmatmul.mubr.bf16.gmra.mrb[0].mxu0 %v1111
        %v2137 = vpop.f32.mrb[0].mxu0
        %v2138 = vadd.f32 %v1977, %v2137
        %v2139 = vpop.f32.mrb[0].mxu0
        %v2140 = vpop.f32.mrb[0].mxu0
        %v2141 = vadd.f32 %v1980, %v2140
        %v2142 = vpop.f32.mrb[0].mxu0
        %2143 = vdwg.mxu0
        %v2144 = vld [vmem:[#allocation2 + $0x30] sm:$0xff]
        %v2145 = vld [vmem:[#allocation2 + $0x38] sm:$0xff]
        %v2146 = vld [vmem:[#allocation2 + $0x40] sm:$0xff]
        %v2147 = vld [vmem:[#allocation2 + $0x48] sm:$0xff]
        %v2148 = vld [vmem:[#allocation2 + $0x50] sm:$0xff]
        %v2149 = vld [vmem:[#allocation2 + $0x58] sm:$0xff]
        %v2150 = vld [vmem:[#allocation2 + $0x60] sm:$0xff]
        %v2151 = vld [vmem:[#allocation2 + $0x68] sm:$0xff]
        %v2152 = vld [vmem:[#allocation2 + $0x70] sm:$0xff]
        %v2153 = vld [vmem:[#allocation2 + $0x78] sm:$0xff]
        %v2154 = vld [vmem:[#allocation2 + $0x80] sm:$0xff]
        %v2155 = vld [vmem:[#allocation2 + $0x88] sm:$0xff]
        %v2156 = vld [vmem:[#allocation2 + $0x90] sm:$0xff]
        %v2157 = vld [vmem:[#allocation2 + $0x98] sm:$0xff]
        %v2158 = vld [vmem:[#allocation2 + $0xa0] sm:$0xff]
        %v2159 = vld [vmem:[#allocation2 + $0xa8] sm:$0xff]
        %v2160 = vld [vmem:[#allocation2 + $0xb0] sm:$0xff]
        %v2161 = vld [vmem:[#allocation2 + $0xb8] sm:$0xff]
        %v2162 = vld [vmem:[#allocation2 + $0xc0] sm:$0xff]
        %v2163 = vld [vmem:[#allocation2 + $0xc8] sm:$0xff]
        %v2164 = vld [vmem:[#allocation2 + $0xd0] sm:$0xff]
        %v2165 = vld [vmem:[#allocation2 + $0xd8] sm:$0xff]
        %v2166 = vld [vmem:[#allocation2 + $0xe0] sm:$0xff]
        %v2167 = vld [vmem:[#allocation2 + $0xe8] sm:$0xff]
        %v2168 = vld [vmem:[#allocation2 + $0xf0] sm:$0xff]
        %v2169 = vld [vmem:[#allocation2 + $0xf8] sm:$0xff]
        %v2170 = vld [vmem:[#allocation2 + $0x100] sm:$0xff]
        %v2171 = vld [vmem:[#allocation2 + $0x108] sm:$0xff]
        %v2172 = vld [vmem:[#allocation2 + $0x110] sm:$0xff]
        %v2173 = vld [vmem:[#allocation2 + $0x118] sm:$0xff]
        %v2174 = vld [vmem:[#allocation2 + $0x120] sm:$0xff]
        %v2175 = vld [vmem:[#allocation2 + $0x128] sm:$0xff]
        %v2176 = vld [vmem:[#allocation2 + $0x130] sm:$0xff]
        %v2177 = vld [vmem:[#allocation2 + $0x138] sm:$0xff]
        %v2178 = vld [vmem:[#allocation2 + $0x140] sm:$0xff]
        %v2179 = vld [vmem:[#allocation2 + $0x148] sm:$0xff]
        %v2180 = vld [vmem:[#allocation2 + $0x150] sm:$0xff]
        %v2181 = vld [vmem:[#allocation2 + $0x158] sm:$0xff]
        %v2182 = vld [vmem:[#allocation2 + $0x160] sm:$0xff]
        %v2183 = vld [vmem:[#allocation2 + $0x168] sm:$0xff]
        %v2184 = vld [vmem:[#allocation2 + $0x170] sm:$0xff]
        %v2185 = vld [vmem:[#allocation2 + $0x178] sm:$0xff]
        %v2186 = vld [vmem:[#allocation2 + $0x180] sm:$0xff]
        %v2187 = vld [vmem:[#allocation2 + $0x188] sm:$0xff]
        %v2188 = vld [vmem:[#allocation2 + $0x190] sm:$0xff]
        %v2189 = vld [vmem:[#allocation2 + $0x198] sm:$0xff]
        %v2190 = vld [vmem:[#allocation2 + $0x1a0] sm:$0xff]
        %v2191 = vld [vmem:[#allocation2 + $0x1a8] sm:$0xff]
        %s2192 = scalar_lea.vmem [#allocation3], 384
        %v2193 = vld [vmem:[%s2192] sm:$0xf]
        %v2194 = vld [vmem:[%s2192 + $0x4] sm:$0xf]
        %v2195 = vld [vmem:[%s2192 + $0x8] sm:$0xf]
        %v2196 = vld [vmem:[%s2192 + $0xc] sm:$0xf]
        %v2197 = vld [vmem:[%s2192 + $0x10] sm:$0xf]
        %v2198 = vld [vmem:[%s2192 + $0x14] sm:$0xf]
        %v2199 = vld [vmem:[%s2192 + $0x18] sm:$0xf]
        %v2200 = vld [vmem:[%s2192 + $0x1c] sm:$0xf]
        %v2201 = vld [vmem:[%s2192 + $0x20] sm:$0xf]
        %v2202 = vld [vmem:[%s2192 + $0x24] sm:$0xf]
        %v2203 = vld [vmem:[%s2192 + $0x28] sm:$0xf]
        %v2204 = vld [vmem:[%s2192 + $0x2c] sm:$0xf]
        %v2205 = vld [vmem:[%s2192 + $0x30] sm:$0xf]
        %v2206 = vld [vmem:[%s2192 + $0x34] sm:$0xf]
        %v2207 = vld [vmem:[%s2192 + $0x38] sm:$0xf]
        %v2208 = vld [vmem:[%s2192 + $0x3c] sm:$0xf]
        %v2209 = vld [vmem:[%s2192 + $0x40] sm:$0xf]
        %v2210 = vld [vmem:[%s2192 + $0x44] sm:$0xf]
        %v2211 = vld [vmem:[%s2192 + $0x48] sm:$0xf]
        %v2212 = vld [vmem:[%s2192 + $0x4c] sm:$0xf]
        %v2213 = vld [vmem:[%s2192 + $0x50] sm:$0xf]
        %v2214 = vld [vmem:[%s2192 + $0x54] sm:$0xf]
        %v2215 = vld [vmem:[%s2192 + $0x58] sm:$0xf]
        %v2216 = vld [vmem:[%s2192 + $0x5c] sm:$0xf]
        %v2217 = vld [vmem:[%s2192 + $0x60] sm:$0xf]
        %v2218 = vld [vmem:[%s2192 + $0x64] sm:$0xf]
        %v2219 = vld [vmem:[%s2192 + $0x68] sm:$0xf]
        %v2220 = vld [vmem:[%s2192 + $0x6c] sm:$0xf]
        %v2221 = vld [vmem:[%s2192 + $0x70] sm:$0xf]
        %v2222 = vld [vmem:[%s2192 + $0x74] sm:$0xf]
        %v2223 = vld [vmem:[%s2192 + $0x78] sm:$0xf]
        %v2224 = vld [vmem:[%s2192 + $0x7c] sm:$0xf]
        %v2225 = vld [vmem:[%s2192 + $0x80] sm:$0xf]
        %v2226 = vld [vmem:[%s2192 + $0x84] sm:$0xf]
        %v2227 = vld [vmem:[%s2192 + $0x88] sm:$0xf]
        %v2228 = vld [vmem:[%s2192 + $0x8c] sm:$0xf]
        %v2229 = vld [vmem:[%s2192 + $0x90] sm:$0xf]
        %v2230 = vld [vmem:[%s2192 + $0x94] sm:$0xf]
        %v2231 = vld [vmem:[%s2192 + $0x98] sm:$0xf]
        %v2232 = vld [vmem:[%s2192 + $0x9c] sm:$0xf]
        %v2233 = vld [vmem:[%s2192 + $0xa0] sm:$0xf]
        %v2234 = vld [vmem:[%s2192 + $0xa4] sm:$0xf]
        %v2235 = vld [vmem:[%s2192 + $0xa8] sm:$0xf]
        %v2236 = vld [vmem:[%s2192 + $0xac] sm:$0xf]
        %v2237 = vld [vmem:[%s2192 + $0xb0] sm:$0xf]
        %v2238 = vld [vmem:[%s2192 + $0xb4] sm:$0xf]
        %v2239 = vld [vmem:[%s2192 + $0xb8] sm:$0xf]
        %v2240 = vld [vmem:[%s2192 + $0xbc] sm:$0xf]
        %v2289 = vunpack.c.l.b16 %v2193
        %v2290 = vunpack.c.l.b16 %v2194
        %v2291 = vunpack.c.l.b16 %v2195
        %v2292 = vunpack.c.l.b16 %v2196
        %v2293 = vunpack.c.l.b16 %v2197
        %v2294 = vunpack.c.l.b16 %v2198
        %v2295 = vunpack.c.l.b16 %v2199
        %v2296 = vunpack.c.l.b16 %v2200
        %v2297 = vunpack.c.l.b16 %v2201
        %v2298 = vunpack.c.l.b16 %v2202
        %v2299 = vunpack.c.l.b16 %v2203
        %v2300 = vunpack.c.l.b16 %v2204
        %v2301 = vunpack.c.l.b16 %v2205
        %v2302 = vunpack.c.l.b16 %v2206
        %v2303 = vunpack.c.l.b16 %v2207
        %v2304 = vunpack.c.l.b16 %v2208
        %v2305 = vunpack.c.l.b16 %v2209
        %v2306 = vunpack.c.l.b16 %v2210
        %v2307 = vunpack.c.l.b16 %v2211
        %v2308 = vunpack.c.l.b16 %v2212
        %v2309 = vunpack.c.l.b16 %v2213
        %v2310 = vunpack.c.l.b16 %v2214
        %v2311 = vunpack.c.l.b16 %v2215
        %v2312 = vunpack.c.l.b16 %v2216
        %v2313 = vunpack.c.l.b16 %v2217
        %v2314 = vunpack.c.l.b16 %v2218
        %v2315 = vunpack.c.l.b16 %v2219
        %v2316 = vunpack.c.l.b16 %v2220
        %v2317 = vunpack.c.l.b16 %v2221
        %v2318 = vunpack.c.l.b16 %v2222
        %v2319 = vunpack.c.l.b16 %v2223
        %v2320 = vunpack.c.l.b16 %v2224
        %v2321 = vunpack.c.l.b16 %v2225
        %v2322 = vunpack.c.l.b16 %v2226
        %v2323 = vunpack.c.l.b16 %v2227
        %v2324 = vunpack.c.l.b16 %v2228
        %v2325 = vunpack.c.l.b16 %v2229
        %v2326 = vunpack.c.l.b16 %v2230
        %v2327 = vunpack.c.l.b16 %v2231
        %v2328 = vunpack.c.l.b16 %v2232
        %v2329 = vunpack.c.l.b16 %v2233
        %v2330 = vunpack.c.l.b16 %v2234
        %v2331 = vunpack.c.l.b16 %v2235
        %v2332 = vunpack.c.l.b16 %v2236
        %v2333 = vunpack.c.l.b16 %v2237
        %v2334 = vunpack.c.l.b16 %v2238
        %v2335 = vunpack.c.l.b16 %v2239
        %v2336 = vunpack.c.l.b16 %v2240
        %v2337 = vpack.c.b16 %v2290, %v2289
        %v2338 = vpack.c.b16 %v2292, %v2291
        %v2339 = vpack.c.b16 %v2294, %v2293
        %v2340 = vpack.c.b16 %v2296, %v2295
        %v2341 = vpack.c.b16 %v2298, %v2297
        %v2342 = vpack.c.b16 %v2300, %v2299
        %v2343 = vpack.c.b16 %v2302, %v2301
        %v2344 = vpack.c.b16 %v2304, %v2303
        %v2345 = vpack.c.b16 %v2306, %v2305
        %v2346 = vpack.c.b16 %v2308, %v2307
        %v2347 = vpack.c.b16 %v2310, %v2309
        %v2348 = vpack.c.b16 %v2312, %v2311
        %v2349 = vpack.c.b16 %v2314, %v2313
        %v2350 = vpack.c.b16 %v2316, %v2315
        %v2351 = vpack.c.b16 %v2318, %v2317
        %v2352 = vpack.c.b16 %v2320, %v2319
        %v2353 = vpack.c.b16 %v2322, %v2321
        %v2354 = vpack.c.b16 %v2324, %v2323
        %v2355 = vpack.c.b16 %v2326, %v2325
        %v2356 = vpack.c.b16 %v2328, %v2327
        %v2357 = vpack.c.b16 %v2330, %v2329
        %v2358 = vpack.c.b16 %v2332, %v2331
        %v2359 = vpack.c.b16 %v2334, %v2333
        %v2360 = vpack.c.b16 %v2336, %v2335
        %2385 = vmatprep.subr.bf16.mxu0 0
        %2386 = vmatpush1.bf16.msra.mxu0 %v2337
        %2387 = vmatprep.subr.bf16.mxu0 0
        %2388 = vmatpush1.bf16.msra.mxu0 %v2338
        %2389 = vmatprep.subr.bf16.mxu0 0
        %2390 = vmatpush1.bf16.msra.mxu0 %v2339
        %2391 = vmatprep.subr.bf16.mxu0 0
        %2392 = vmatpush1.bf16.msra.mxu0 %v2340
        %2393 = vmatprep.subr.bf16.mxu0 0
        %2394 = vmatpush1.bf16.msra.mxu0 %v2341
        %2395 = vmatprep.subr.bf16.mxu0 0
        %2396 = vmatpush1.bf16.msra.mxu0 %v2342
        %2397 = vmatprep.subr.bf16.mxu0 0
        %2398 = vmatpush1.bf16.msra.mxu0 %v2343
        %2399 = vmatprep.subr.bf16.mxu0 0
        %2400 = vmatpush1.bf16.msra.mxu0 %v2344
        %2401 = vmatprep.subr.bf16.mxu0 0
        %2402 = vmatpush1.bf16.msra.mxu0 %v2345
        %2403 = vmatprep.subr.bf16.mxu0 0
        %2404 = vmatpush1.bf16.msra.mxu0 %v2346
        %2405 = vmatprep.subr.bf16.mxu0 0
        %2406 = vmatpush1.bf16.msra.mxu0 %v2347
        %2407 = vmatprep.subr.bf16.mxu0 0
        %2408 = vmatpush1.bf16.msra.mxu0 %v2348
        %2409 = vmatprep.subr.bf16.mxu0 0
        %2410 = vmatpush1.bf16.msra.mxu0 %v2349
        %2411 = vmatprep.subr.bf16.mxu0 0
        %2412 = vmatpush1.bf16.msra.mxu0 %v2350
        %2413 = vmatprep.subr.bf16.mxu0 0
        %2414 = vmatpush1.bf16.msra.mxu0 %v2351
        %2415 = vmatprep.subr.bf16.mxu0 0
        %2416 = vmatpush1.bf16.msra.mxu0 %v2352
        %2417 = vmatprep.mubr.bf16.mxu0 %v2145
        %2418 = vmatmul.mubr.bf16.gmra.mrb[0].mxu0 %v2144
        %v2419 = vpop.f32.mrb[0].mxu0
        %v2420 = vadd.f32 0.0, %v2419
        %v2421 = vpop.f32.mrb[0].mxu0
        %v2422 = vpop.f32.mrb[0].mxu0
        %v2423 = vadd.f32 0.0, %v2422
        %v2424 = vpop.f32.mrb[0].mxu0
        %2425 = vmatprep.mubr.bf16.mxu0 %v2148
        %2426 = vmatmul.mubr.bf16.gmra.mrb[0].mxu0 %v2147
        %v2427 = vpop.f32.mrb[0].mxu0
        %v2428 = vadd.f32 0.0, %v2427
        %v2429 = vpop.f32.mrb[0].mxu0
        %v2430 = vpop.f32.mrb[0].mxu0
        %v2431 = vadd.f32 0.0, %v2430
        %v2432 = vpop.f32.mrb[0].mxu0
        %2433 = vmatprep.mubr.bf16.mxu0 %v2151
        %2434 = vmatmul.mubr.bf16.gmra.mrb[0].mxu0 %v2150
        %v2435 = vpop.f32.mrb[0].mxu0
        %v2436 = vadd.f32 0.0, %v2435
        %v2437 = vpop.f32.mrb[0].mxu0
        %v2438 = vpop.f32.mrb[0].mxu0
        %v2439 = vadd.f32 0.0, %v2438
        %v2440 = vpop.f32.mrb[0].mxu0
        %2441 = vmatprep.mubr.bf16.mxu0 %v2154
        %2442 = vmatmul.mubr.bf16.gmra.mrb[0].mxu0 %v2153
        %v2443 = vpop.f32.mrb[0].mxu0
        %v2444 = vadd.f32 0.0, %v2443
        %v2445 = vpop.f32.mrb[0].mxu0
        %v2446 = vpop.f32.mrb[0].mxu0
        %v2447 = vadd.f32 0.0, %v2446
        %v2448 = vpop.f32.mrb[0].mxu0
        %2449 = vmatprep.mubr.bf16.mxu0 %v2157
        %2450 = vmatmul.mubr.bf16.gmra.mrb[0].mxu0 %v2156
        %v2451 = vpop.f32.mrb[0].mxu0
        %v2452 = vadd.f32 0.0, %v2451
        %v2453 = vpop.f32.mrb[0].mxu0
        %v2454 = vpop.f32.mrb[0].mxu0
        %v2455 = vadd.f32 0.0, %v2454
        %v2456 = vpop.f32.mrb[0].mxu0
        %2457 = vmatprep.mubr.bf16.mxu0 %v2160
        %2458 = vmatmul.mubr.bf16.gmra.mrb[0].mxu0 %v2159
        %v2459 = vpop.f32.mrb[0].mxu0
        %v2460 = vadd.f32 0.0, %v2459
        %v2461 = vpop.f32.mrb[0].mxu0
        %v2462 = vpop.f32.mrb[0].mxu0
        %v2463 = vadd.f32 0.0, %v2462
        %v2464 = vpop.f32.mrb[0].mxu0
        %2465 = vmatprep.mubr.bf16.mxu0 %v2163
        %2466 = vmatmul.mubr.bf16.gmra.mrb[0].mxu0 %v2162
        %v2467 = vpop.f32.mrb[0].mxu0
        %v2468 = vadd.f32 0.0, %v2467
        %v2469 = vpop.f32.mrb[0].mxu0
        %v2470 = vpop.f32.mrb[0].mxu0
        %v2471 = vadd.f32 0.0, %v2470
        %v2472 = vpop.f32.mrb[0].mxu0
        %2473 = vmatprep.mubr.bf16.mxu0 %v2166
        %2474 = vmatmul.mubr.bf16.gmra.mrb[0].mxu0 %v2165
        %v2475 = vpop.f32.mrb[0].mxu0
        %v2476 = vadd.f32 0.0, %v2475
        %v2477 = vpop.f32.mrb[0].mxu0
        %v2478 = vpop.f32.mrb[0].mxu0
        %v2479 = vadd.f32 0.0, %v2478
        %v2480 = vpop.f32.mrb[0].mxu0
        %2481 = vmatprep.mubr.bf16.mxu0 %v2169
        %2482 = vmatmul.mubr.bf16.gmra.mrb[0].mxu0 %v2168
        %v2483 = vpop.f32.mrb[0].mxu0
        %v2484 = vadd.f32 0.0, %v2483
        %v2485 = vpop.f32.mrb[0].mxu0
        %v2486 = vpop.f32.mrb[0].mxu0
        %v2487 = vadd.f32 0.0, %v2486
        %v2488 = vpop.f32.mrb[0].mxu0
        %2489 = vmatprep.mubr.bf16.mxu0 %v2172
        %2490 = vmatmul.mubr.bf16.gmra.mrb[0].mxu0 %v2171
        %v2491 = vpop.f32.mrb[0].mxu0
        %v2492 = vadd.f32 0.0, %v2491
        %v2493 = vpop.f32.mrb[0].mxu0
        %v2494 = vpop.f32.mrb[0].mxu0
        %v2495 = vadd.f32 0.0, %v2494
        %v2496 = vpop.f32.mrb[0].mxu0
        %2497 = vmatprep.mubr.bf16.mxu0 %v2175
        %2498 = vmatmul.mubr.bf16.gmra.mrb[0].mxu0 %v2174
        %v2499 = vpop.f32.mrb[0].mxu0
        %v2500 = vadd.f32 0.0, %v2499
        %v2501 = vpop.f32.mrb[0].mxu0
        %v2502 = vpop.f32.mrb[0].mxu0
        %v2503 = vadd.f32 0.0, %v2502
        %v2504 = vpop.f32.mrb[0].mxu0
        %2505 = vmatprep.mubr.bf16.mxu0 %v2178
        %2506 = vmatmul.mubr.bf16.gmra.mrb[0].mxu0 %v2177
        %v2507 = vpop.f32.mrb[0].mxu0
        %v2508 = vadd.f32 0.0, %v2507
        %v2509 = vpop.f32.mrb[0].mxu0
        %v2510 = vpop.f32.mrb[0].mxu0
        %v2511 = vadd.f32 0.0, %v2510
        %v2512 = vpop.f32.mrb[0].mxu0
        %2513 = vmatprep.mubr.bf16.mxu0 %v2181
        %2514 = vmatmul.mubr.bf16.gmra.mrb[0].mxu0 %v2180
        %v2515 = vpop.f32.mrb[0].mxu0
        %v2516 = vadd.f32 0.0, %v2515
        %v2517 = vpop.f32.mrb[0].mxu0
        %v2518 = vpop.f32.mrb[0].mxu0
        %v2519 = vadd.f32 0.0, %v2518
        %v2520 = vpop.f32.mrb[0].mxu0
        %2521 = vmatprep.mubr.bf16.mxu0 %v2184
        %2522 = vmatmul.mubr.bf16.gmra.mrb[0].mxu0 %v2183
        %v2523 = vpop.f32.mrb[0].mxu0
        %v2524 = vadd.f32 0.0, %v2523
        %v2525 = vpop.f32.mrb[0].mxu0
        %v2526 = vpop.f32.mrb[0].mxu0
        %v2527 = vadd.f32 0.0, %v2526
        %v2528 = vpop.f32.mrb[0].mxu0
        %2529 = vmatprep.mubr.bf16.mxu0 %v2187
        %2530 = vmatmul.mubr.bf16.gmra.mrb[0].mxu0 %v2186
        %v2531 = vpop.f32.mrb[0].mxu0
        %v2532 = vadd.f32 0.0, %v2531
        %v2533 = vpop.f32.mrb[0].mxu0
        %v2534 = vpop.f32.mrb[0].mxu0
        %v2535 = vadd.f32 0.0, %v2534
        %v2536 = vpop.f32.mrb[0].mxu0
        %2537 = vmatprep.mubr.bf16.mxu0 %v2190
        %2538 = vmatmul.mubr.bf16.gmra.mrb[0].mxu0 %v2189
        %v2539 = vpop.f32.mrb[0].mxu0
        %v2540 = vadd.f32 0.0, %v2539
        %v2541 = vpop.f32.mrb[0].mxu0
        %v2542 = vpop.f32.mrb[0].mxu0
        %v2543 = vadd.f32 0.0, %v2542
        %v2544 = vpop.f32.mrb[0].mxu0
        %2545 = vdwg.mxu0
        %2546 = vmatprep.subr.bf16.mxu0 0
        %2547 = vmatpush1.bf16.msra.mxu0 %v2353
        %2548 = vmatprep.subr.bf16.mxu0 0
        %2549 = vmatpush1.bf16.msra.mxu0 %v2354
        %2550 = vmatprep.subr.bf16.mxu0 0
        %2551 = vmatpush1.bf16.msra.mxu0 %v2355
        %2552 = vmatprep.subr.bf16.mxu0 0
        %2553 = vmatpush1.bf16.msra.mxu0 %v2356
        %2554 = vmatprep.subr.bf16.mxu0 0
        %2555 = vmatpush1.bf16.msra.mxu0 %v2357
        %2556 = vmatprep.subr.bf16.mxu0 0
        %2557 = vmatpush1.bf16.msra.mxu0 %v2358
        %2558 = vmatprep.subr.bf16.mxu0 0
        %2559 = vmatpush1.bf16.msra.mxu0 %v2359
        %2560 = vmatprep.subr.bf16.mxu0 0
        %2561 = vmatpush1.bf16.msra.mxu0 %v2360
        %2562 = vmatprep.subr.bf16.mxu0 0
        %2563 = vmatpush1.bf16.msra.mxu0 0
        %2564 = vmatprep.subr.bf16.mxu0 0
        %2565 = vmatpush1.bf16.msra.mxu0 0
        %2566 = vmatprep.subr.bf16.mxu0 0
        %2567 = vmatpush1.bf16.msra.mxu0 0
        %2568 = vmatprep.subr.bf16.mxu0 0
        %2569 = vmatpush1.bf16.msra.mxu0 0
        %2570 = vmatprep.subr.bf16.mxu0 0
        %2571 = vmatpush1.bf16.msra.mxu0 0
        %2572 = vmatprep.subr.bf16.mxu0 0
        %2573 = vmatpush1.bf16.msra.mxu0 0
        %2574 = vmatprep.subr.bf16.mxu0 0
        %2575 = vmatpush1.bf16.msra.mxu0 0
        %2576 = vmatprep.subr.bf16.mxu0 0
        %2577 = vmatpush1.bf16.msra.mxu0 0
        %2578 = vmatprep.mubr.bf16.mxu0 0
        %2579 = vmatmul.mubr.bf16.gmra.mrb[0].mxu0 %v2146
        %v2580 = vpop.f32.mrb[0].mxu0
        %v2581 = vadd.f32 %v2420, %v2580
        %v2582 = vpop.f32.mrb[0].mxu0
        %v2583 = vpop.f32.mrb[0].mxu0
        %v2584 = vadd.f32 %v2423, %v2583
        %v2585 = vpop.f32.mrb[0].mxu0
        %2586 = vmatprep.mubr.bf16.mxu0 0
        %2587 = vmatmul.mubr.bf16.gmra.mrb[0].mxu0 %v2149
        %v2588 = vpop.f32.mrb[0].mxu0
        %v2589 = vadd.f32 %v2428, %v2588
        %v2590 = vpop.f32.mrb[0].mxu0
        %v2591 = vpop.f32.mrb[0].mxu0
        %v2592 = vadd.f32 %v2431, %v2591
        %v2593 = vpop.f32.mrb[0].mxu0
        %2594 = vmatprep.mubr.bf16.mxu0 0
        %2595 = vmatmul.mubr.bf16.gmra.mrb[0].mxu0 %v2152
        %v2596 = vpop.f32.mrb[0].mxu0
        %v2597 = vadd.f32 %v2436, %v2596
        %v2598 = vpop.f32.mrb[0].mxu0
        %v2599 = vpop.f32.mrb[0].mxu0
        %v2600 = vadd.f32 %v2439, %v2599
        %v2601 = vpop.f32.mrb[0].mxu0
        %2602 = vmatprep.mubr.bf16.mxu0 0
        %2603 = vmatmul.mubr.bf16.gmra.mrb[0].mxu0 %v2155
        %v2604 = vpop.f32.mrb[0].mxu0
        %v2605 = vadd.f32 %v2444, %v2604
        %v2606 = vpop.f32.mrb[0].mxu0
        %v2607 = vpop.f32.mrb[0].mxu0
        %v2608 = vadd.f32 %v2447, %v2607
        %v2609 = vpop.f32.mrb[0].mxu0
        %2610 = vmatprep.mubr.bf16.mxu0 0
        %2611 = vmatmul.mubr.bf16.gmra.mrb[0].mxu0 %v2158
        %v2612 = vpop.f32.mrb[0].mxu0
        %v2613 = vadd.f32 %v2452, %v2612
        %v2614 = vpop.f32.mrb[0].mxu0
        %v2615 = vpop.f32.mrb[0].mxu0
        %v2616 = vadd.f32 %v2455, %v2615
        %v2617 = vpop.f32.mrb[0].mxu0
        %2618 = vmatprep.mubr.bf16.mxu0 0
        %2619 = vmatmul.mubr.bf16.gmra.mrb[0].mxu0 %v2161
        %v2620 = vpop.f32.mrb[0].mxu0
        %v2621 = vadd.f32 %v2460, %v2620
        %v2622 = vpop.f32.mrb[0].mxu0
        %v2623 = vpop.f32.mrb[0].mxu0
        %v2624 = vadd.f32 %v2463, %v2623
        %v2625 = vpop.f32.mrb[0].mxu0
        %2626 = vmatprep.mubr.bf16.mxu0 0
        %2627 = vmatmul.mubr.bf16.gmra.mrb[0].mxu0 %v2164
        %v2628 = vpop.f32.mrb[0].mxu0
        %v2629 = vadd.f32 %v2468, %v2628
        %v2630 = vpop.f32.mrb[0].mxu0
        %v2631 = vpop.f32.mrb[0].mxu0
        %v2632 = vadd.f32 %v2471, %v2631
        %v2633 = vpop.f32.mrb[0].mxu0
        %2634 = vmatprep.mubr.bf16.mxu0 0
        %2635 = vmatmul.mubr.bf16.gmra.mrb[0].mxu0 %v2167
        %v2636 = vpop.f32.mrb[0].mxu0
        %v2637 = vadd.f32 %v2476, %v2636
        %v2638 = vpop.f32.mrb[0].mxu0
        %v2639 = vpop.f32.mrb[0].mxu0
        %v2640 = vadd.f32 %v2479, %v2639
        %v2641 = vpop.f32.mrb[0].mxu0
        %2642 = vmatprep.mubr.bf16.mxu0 0
        %2643 = vmatmul.mubr.bf16.gmra.mrb[0].mxu0 %v2170
        %v2644 = vpop.f32.mrb[0].mxu0
        %v2645 = vadd.f32 %v2484, %v2644
        %v2646 = vpop.f32.mrb[0].mxu0
        %v2647 = vpop.f32.mrb[0].mxu0
        %v2648 = vadd.f32 %v2487, %v2647
        %v2649 = vpop.f32.mrb[0].mxu0
        %2650 = vmatprep.mubr.bf16.mxu0 0
        %2651 = vmatmul.mubr.bf16.gmra.mrb[0].mxu0 %v2173
        %v2652 = vpop.f32.mrb[0].mxu0
        %v2653 = vadd.f32 %v2492, %v2652
        %v2654 = vpop.f32.mrb[0].mxu0
        %v2655 = vpop.f32.mrb[0].mxu0
        %v2656 = vadd.f32 %v2495, %v2655
        %v2657 = vpop.f32.mrb[0].mxu0
        %2658 = vmatprep.mubr.bf16.mxu0 0
        %2659 = vmatmul.mubr.bf16.gmra.mrb[0].mxu0 %v2176
        %v2660 = vpop.f32.mrb[0].mxu0
        %v2661 = vadd.f32 %v2500, %v2660
        %v2662 = vpop.f32.mrb[0].mxu0
        %v2663 = vpop.f32.mrb[0].mxu0
        %v2664 = vadd.f32 %v2503, %v2663
        %v2665 = vpop.f32.mrb[0].mxu0
        %2666 = vmatprep.mubr.bf16.mxu0 0
        %2667 = vmatmul.mubr.bf16.gmra.mrb[0].mxu0 %v2179
        %v2668 = vpop.f32.mrb[0].mxu0
        %v2669 = vadd.f32 %v2508, %v2668
        %v2670 = vpop.f32.mrb[0].mxu0
        %v2671 = vpop.f32.mrb[0].mxu0
        %v2672 = vadd.f32 %v2511, %v2671
        %v2673 = vpop.f32.mrb[0].mxu0
        %2674 = vmatprep.mubr.bf16.mxu0 0
        %2675 = vmatmul.mubr.bf16.gmra.mrb[0].mxu0 %v2182
        %v2676 = vpop.f32.mrb[0].mxu0
        %v2677 = vadd.f32 %v2516, %v2676
        %v2678 = vpop.f32.mrb[0].mxu0
        %v2679 = vpop.f32.mrb[0].mxu0
        %v2680 = vadd.f32 %v2519, %v2679
        %v2681 = vpop.f32.mrb[0].mxu0
        %2682 = vmatprep.mubr.bf16.mxu0 0
        %2683 = vmatmul.mubr.bf16.gmra.mrb[0].mxu0 %v2185
        %v2684 = vpop.f32.mrb[0].mxu0
        %v2685 = vadd.f32 %v2524, %v2684
        %v2686 = vpop.f32.mrb[0].mxu0
        %v2687 = vpop.f32.mrb[0].mxu0
        %v2688 = vadd.f32 %v2527, %v2687
        %v2689 = vpop.f32.mrb[0].mxu0
        %2690 = vmatprep.mubr.bf16.mxu0 0
        %2691 = vmatmul.mubr.bf16.gmra.mrb[0].mxu0 %v2188
        %v2692 = vpop.f32.mrb[0].mxu0
        %v2693 = vadd.f32 %v2532, %v2692
        %v2694 = vpop.f32.mrb[0].mxu0
        %v2695 = vpop.f32.mrb[0].mxu0
        %v2696 = vadd.f32 %v2535, %v2695
        %v2697 = vpop.f32.mrb[0].mxu0
        %2698 = vmatprep.mubr.bf16.mxu0 0
        %2699 = vmatmul.mubr.bf16.gmra.mrb[0].mxu0 %v2191
        %v2700 = vpop.f32.mrb[0].mxu0
        %v2701 = vadd.f32 %v2540, %v2700
        %v2702 = vpop.f32.mrb[0].mxu0
        %v2703 = vpop.f32.mrb[0].mxu0
        %v2704 = vadd.f32 %v2543, %v2703
        %v2705 = vpop.f32.mrb[0].mxu0
        %2706 = vdwg.mxu0
        %v2707 = vadd.f32 %v2018, %v2581
        %v2708 = vadd.f32 %v2021, %v2584
        %v2709 = vadd.f32 %v2026, %v2589
        %v2710 = vadd.f32 %v2029, %v2592
        %v2711 = vadd.f32 %v2034, %v2597
        %v2712 = vadd.f32 %v2037, %v2600
        %v2713 = vadd.f32 %v2042, %v2605
        %v2714 = vadd.f32 %v2045, %v2608
        %v2715 = vadd.f32 %v2050, %v2613
        %v2716 = vadd.f32 %v2053, %v2616
        %v2717 = vadd.f32 %v2058, %v2621
        %v2718 = vadd.f32 %v2061, %v2624
        %v2719 = vadd.f32 %v2066, %v2629
        %v2720 = vadd.f32 %v2069, %v2632
        %v2721 = vadd.f32 %v2074, %v2637
        %v2722 = vadd.f32 %v2077, %v2640
        %v2723 = vadd.f32 %v2082, %v2645
        %v2724 = vadd.f32 %v2085, %v2648
        %v2725 = vadd.f32 %v2090, %v2653
        %v2726 = vadd.f32 %v2093, %v2656
        %v2727 = vadd.f32 %v2098, %v2661
        %v2728 = vadd.f32 %v2101, %v2664
        %v2729 = vadd.f32 %v2106, %v2669
        %v2730 = vadd.f32 %v2109, %v2672
        %v2731 = vadd.f32 %v2114, %v2677
        %v2732 = vadd.f32 %v2117, %v2680
        %v2733 = vadd.f32 %v2122, %v2685
        %v2734 = vadd.f32 %v2125, %v2688
        %v2735 = vadd.f32 %v2130, %v2693
        %v2736 = vadd.f32 %v2133, %v2696
        %v2737 = vadd.f32 %v2138, %v2701
        %v2738 = vadd.f32 %v2141, %v2704
        %v2739 = vadd.f32 %v2707, %v2708
        %v2740 = vadd.f32 %v2739, %v2709
        %v2741 = vadd.f32 %v2740, %v2710
        %v2742 = vadd.f32 %v2741, %v2711
        %v2743 = vadd.f32 %v2742, %v2712
        %v2744 = vadd.f32 %v2743, %v2713
        %v2745 = vadd.f32 %v2744, %v2714
        %v2746 = vadd.f32 %v2745, %v2715
        %v2747 = vadd.f32 %v2746, %v2716
        %v2748 = vadd.f32 %v2747, %v2717
        %v2749 = vadd.f32 %v2748, %v2718
        %v2750 = vadd.f32 %v2749, %v2719
        %v2751 = vadd.f32 %v2750, %v2720
        %v2752 = vadd.f32 %v2751, %v2721
        %v2753 = vadd.f32 %v2752, %v2722
        %v2754 = vadd.f32 %v2753, %v2723
        %v2755 = vadd.f32 %v2754, %v2724
        %v2756 = vadd.f32 %v2755, %v2725
        %v2757 = vadd.f32 %v2756, %v2726
        %v2758 = vadd.f32 %v2757, %v2727
        %v2759 = vadd.f32 %v2758, %v2728
        %v2760 = vadd.f32 %v2759, %v2729
        %v2761 = vadd.f32 %v2760, %v2730
        %v2762 = vadd.f32 %v2761, %v2731
        %v2763 = vadd.f32 %v2762, %v2732
        %v2764 = vadd.f32 %v2763, %v2733
        %v2765 = vadd.f32 %v2764, %v2734
        %v2766 = vadd.f32 %v2765, %v2735
        %v2767 = vadd.f32 %v2766, %v2736
        %v2768 = vadd.f32 %v2767, %v2737
        %v2769 = vadd.f32 %v2768, %v2738
        %v2770 = vrot.slane %v2769, 4
        %v2771 = vadd.f32 %v2769, %v2770
        %v2772 = vrot.slane %v2771, 2
        %v2773 = vadd.f32 %v2771, %v2772
        %v2774 = vrot.slane %v2773, 1
        %v2775 = vadd.f32 %v2773, %v2774
        %v2776 = vmul.f32 %v2775, 0.00390625
        %v2777 = vmul.f32 %v2707, %v2707
        %v2778 = vmul.f32 %v2708, %v2708
        %v2779 = vmul.f32 %v2709, %v2709
        %v2780 = vmul.f32 %v2710, %v2710
        %v2781 = vmul.f32 %v2711, %v2711
        %v2782 = vmul.f32 %v2712, %v2712
        %v2783 = vmul.f32 %v2713, %v2713
        %v2784 = vmul.f32 %v2714, %v2714
        %v2785 = vmul.f32 %v2715, %v2715
        %v2786 = vmul.f32 %v2716, %v2716
        %v2787 = vmul.f32 %v2717, %v2717
        %v2788 = vmul.f32 %v2718, %v2718
        %v2789 = vmul.f32 %v2719, %v2719
        %v2790 = vmul.f32 %v2720, %v2720
        %v2791 = vmul.f32 %v2721, %v2721
        %v2792 = vmul.f32 %v2722, %v2722
        %v2793 = vmul.f32 %v2723, %v2723
        %v2794 = vmul.f32 %v2724, %v2724
        %v2795 = vmul.f32 %v2725, %v2725
        %v2796 = vmul.f32 %v2726, %v2726
        %v2797 = vmul.f32 %v2727, %v2727
        %v2798 = vmul.f32 %v2728, %v2728
        %v2799 = vmul.f32 %v2729, %v2729
        %v2800 = vmul.f32 %v2730, %v2730
        %v2801 = vmul.f32 %v2731, %v2731
        %v2802 = vmul.f32 %v2732, %v2732
        %v2803 = vmul.f32 %v2733, %v2733
        %v2804 = vmul.f32 %v2734, %v2734
        %v2805 = vmul.f32 %v2735, %v2735
        %v2806 = vmul.f32 %v2736, %v2736
        %v2807 = vmul.f32 %v2737, %v2737
        %v2808 = vmul.f32 %v2738, %v2738
        %v2809 = vadd.f32 %v2777, %v2778
        %v2810 = vadd.f32 %v2809, %v2779
        %v2811 = vadd.f32 %v2810, %v2780
        %v2812 = vadd.f32 %v2811, %v2781
        %v2813 = vadd.f32 %v2812, %v2782
        %v2814 = vadd.f32 %v2813, %v2783
        %v2815 = vadd.f32 %v2814, %v2784
        %v2816 = vadd.f32 %v2815, %v2785
        %v2817 = vadd.f32 %v2816, %v2786
        %v2818 = vadd.f32 %v2817, %v2787
        %v2819 = vadd.f32 %v2818, %v2788
        %v2820 = vadd.f32 %v2819, %v2789
        %v2821 = vadd.f32 %v2820, %v2790
        %v2822 = vadd.f32 %v2821, %v2791
        %v2823 = vadd.f32 %v2822, %v2792
        %v2824 = vadd.f32 %v2823, %v2793
        %v2825 = vadd.f32 %v2824, %v2794
        %v2826 = vadd.f32 %v2825, %v2795
        %v2827 = vadd.f32 %v2826, %v2796
        %v2828 = vadd.f32 %v2827, %v2797
        %v2829 = vadd.f32 %v2828, %v2798
        %v2830 = vadd.f32 %v2829, %v2799
        %v2831 = vadd.f32 %v2830, %v2800
        %v2832 = vadd.f32 %v2831, %v2801
        %v2833 = vadd.f32 %v2832, %v2802
        %v2834 = vadd.f32 %v2833, %v2803
        %v2835 = vadd.f32 %v2834, %v2804
        %v2836 = vadd.f32 %v2835, %v2805
        %v2837 = vadd.f32 %v2836, %v2806
        %v2838 = vadd.f32 %v2837, %v2807
        %v2839 = vadd.f32 %v2838, %v2808
        %v2840 = vrot.slane %v2839, 4
        %v2841 = vadd.f32 %v2839, %v2840
        %v2842 = vrot.slane %v2841, 2
        %v2843 = vadd.f32 %v2841, %v2842
        %v2844 = vrot.slane %v2843, 1
        %v2845 = vadd.f32 %v2843, %v2844
        %v2846 = vmul.f32 %v2845, 0.00390625
        %v2847 = vmul.f32 %v2776, %v2776
        %v2848 = vsub.f32 %v2846, %v2847
        %v2849 = vsub.f32 %v2707, %v2776
        %v2850 = vsub.f32 %v2708, %v2776
        %v2851 = vsub.f32 %v2709, %v2776
        %v2852 = vsub.f32 %v2710, %v2776
        %v2853 = vsub.f32 %v2711, %v2776
        %v2854 = vsub.f32 %v2712, %v2776
        %v2855 = vsub.f32 %v2713, %v2776
        %v2856 = vsub.f32 %v2714, %v2776
        %v2857 = vsub.f32 %v2715, %v2776
        %v2858 = vsub.f32 %v2716, %v2776
        %v2859 = vsub.f32 %v2717, %v2776
        %v2860 = vsub.f32 %v2718, %v2776
        %v2861 = vsub.f32 %v2719, %v2776
        %v2862 = vsub.f32 %v2720, %v2776
        %v2863 = vsub.f32 %v2721, %v2776
        %v2864 = vsub.f32 %v2722, %v2776
        %v2865 = vsub.f32 %v2723, %v2776
        %v2866 = vsub.f32 %v2724, %v2776
        %v2867 = vsub.f32 %v2725, %v2776
        %v2868 = vsub.f32 %v2726, %v2776
        %v2869 = vsub.f32 %v2727, %v2776
        %v2870 = vsub.f32 %v2728, %v2776
        %v2871 = vsub.f32 %v2729, %v2776
        %v2872 = vsub.f32 %v2730, %v2776
        %v2873 = vsub.f32 %v2731, %v2776
        %v2874 = vsub.f32 %v2732, %v2776
        %v2875 = vsub.f32 %v2733, %v2776
        %v2876 = vsub.f32 %v2734, %v2776
        %v2877 = vsub.f32 %v2735, %v2776
        %v2878 = vsub.f32 %v2736, %v2776
        %v2879 = vsub.f32 %v2737, %v2776
        %v2880 = vsub.f32 %v2738, %v2776
        %v2881 = vadd.f32 %v2848, 1e-05
        %v2882 = vrsqrt.pop %v2881
        %v2883 = vmul.f32 %v2849, %v2882
        %v2884 = vmul.f32 %v2850, %v2882
        %v2885 = vmul.f32 %v2851, %v2882
        %v2886 = vmul.f32 %v2852, %v2882
        %v2887 = vmul.f32 %v2853, %v2882
        %v2888 = vmul.f32 %v2854, %v2882
        %v2889 = vmul.f32 %v2855, %v2882
        %v2890 = vmul.f32 %v2856, %v2882
        %v2891 = vmul.f32 %v2857, %v2882
        %v2892 = vmul.f32 %v2858, %v2882
        %v2893 = vmul.f32 %v2859, %v2882
        %v2894 = vmul.f32 %v2860, %v2882
        %v2895 = vmul.f32 %v2861, %v2882
        %v2896 = vmul.f32 %v2862, %v2882
        %v2897 = vmul.f32 %v2863, %v2882
        %v2898 = vmul.f32 %v2864, %v2882
        %v2899 = vmul.f32 %v2865, %v2882
        %v2900 = vmul.f32 %v2866, %v2882
        %v2901 = vmul.f32 %v2867, %v2882
        %v2902 = vmul.f32 %v2868, %v2882
        %v2903 = vmul.f32 %v2869, %v2882
        %v2904 = vmul.f32 %v2870, %v2882
        %v2905 = vmul.f32 %v2871, %v2882
        %v2906 = vmul.f32 %v2872, %v2882
        %v2907 = vmul.f32 %v2873, %v2882
        %v2908 = vmul.f32 %v2874, %v2882
        %v2909 = vmul.f32 %v2875, %v2882
        %v2910 = vmul.f32 %v2876, %v2882
        %v2911 = vmul.f32 %v2877, %v2882
        %v2912 = vmul.f32 %v2878, %v2882
        %v2913 = vmul.f32 %v2879, %v2882
        %v2914 = vmul.f32 %v2880, %v2882
        %v2915 = vmax.f32 %v2883, 0.0
        %v2916 = vmax.f32 %v2884, 0.0
        %v2917 = vmax.f32 %v2885, 0.0
        %v2918 = vmax.f32 %v2886, 0.0
        %v2919 = vmax.f32 %v2887, 0.0
        %v2920 = vmax.f32 %v2888, 0.0
        %v2921 = vmax.f32 %v2889, 0.0
        %v2922 = vmax.f32 %v2890, 0.0
        %v2923 = vmax.f32 %v2891, 0.0
        %v2924 = vmax.f32 %v2892, 0.0
        %v2925 = vmax.f32 %v2893, 0.0
        %v2926 = vmax.f32 %v2894, 0.0
        %v2927 = vmax.f32 %v2895, 0.0
        %v2928 = vmax.f32 %v2896, 0.0
        %v2929 = vmax.f32 %v2897, 0.0
        %v2930 = vmax.f32 %v2898, 0.0
        %v2931 = vmax.f32 %v2899, 0.0
        %v2932 = vmax.f32 %v2900, 0.0
        %v2933 = vmax.f32 %v2901, 0.0
        %v2934 = vmax.f32 %v2902, 0.0
        %v2935 = vmax.f32 %v2903, 0.0
        %v2936 = vmax.f32 %v2904, 0.0
        %v2937 = vmax.f32 %v2905, 0.0
        %v2938 = vmax.f32 %v2906, 0.0
        %v2939 = vmax.f32 %v2907, 0.0
        %v2940 = vmax.f32 %v2908, 0.0
        %v2941 = vmax.f32 %v2909, 0.0
        %v2942 = vmax.f32 %v2910, 0.0
        %v2943 = vmax.f32 %v2911, 0.0
        %v2944 = vmax.f32 %v2912, 0.0
        %v2945 = vmax.f32 %v2913, 0.0
        %v2946 = vmax.f32 %v2914, 0.0
        %v2948 = vrot.slane %v2946, 7
        %v2981 = vrot.slane %v2915, 7
        %v2982 = vrot.slane %v2916, 7
        %v2983 = vsel %vm390, %v2981, %v2982
        %v2984 = vrot.slane %v2917, 7
        %v2985 = vsel %vm390, %v2982, %v2984
        %v2986 = vrot.slane %v2918, 7
        %v2987 = vsel %vm390, %v2984, %v2986
        %v2988 = vrot.slane %v2919, 7
        %v2989 = vsel %vm390, %v2986, %v2988
        %v2990 = vrot.slane %v2920, 7
        %v2991 = vsel %vm390, %v2988, %v2990
        %v2992 = vrot.slane %v2921, 7
        %v2993 = vsel %vm390, %v2990, %v2992
        %v2994 = vrot.slane %v2922, 7
        %v2995 = vsel %vm390, %v2992, %v2994
        %v2996 = vrot.slane %v2923, 7
        %v2997 = vsel %vm390, %v2994, %v2996
        %v2998 = vrot.slane %v2924, 7
        %v2999 = vsel %vm390, %v2996, %v2998
        %v3000 = vrot.slane %v2925, 7
        %v3001 = vsel %vm390, %v2998, %v3000
        %v3002 = vrot.slane %v2926, 7
        %v3003 = vsel %vm390, %v3000, %v3002
        %v3004 = vrot.slane %v2927, 7
        %v3005 = vsel %vm390, %v3002, %v3004
        %v3006 = vrot.slane %v2928, 7
        %v3007 = vsel %vm390, %v3004, %v3006
        %v3008 = vrot.slane %v2929, 7
        %v3009 = vsel %vm390, %v3006, %v3008
        %v3010 = vrot.slane %v2930, 7
        %v3011 = vsel %vm390, %v3008, %v3010
        %v3012 = vrot.slane %v2931, 7
        %v3013 = vsel %vm390, %v3010, %v3012
        %v3014 = vrot.slane %v2932, 7
        %v3015 = vsel %vm390, %v3012, %v3014
        %v3016 = vrot.slane %v2933, 7
        %v3017 = vsel %vm390, %v3014, %v3016
        %v3018 = vrot.slane %v2934, 7
        %v3019 = vsel %vm390, %v3016, %v3018
        %v3020 = vrot.slane %v2935, 7
        %v3021 = vsel %vm390, %v3018, %v3020
        %v3022 = vrot.slane %v2936, 7
        %v3023 = vsel %vm390, %v3020, %v3022
        %v3024 = vrot.slane %v2937, 7
        %v3025 = vsel %vm390, %v3022, %v3024
        %v3026 = vrot.slane %v2938, 7
        %v3027 = vsel %vm390, %v3024, %v3026
        %v3028 = vrot.slane %v2939, 7
        %v3029 = vsel %vm390, %v3026, %v3028
        %v3030 = vrot.slane %v2940, 7
        %v3031 = vsel %vm390, %v3028, %v3030
        %v3032 = vrot.slane %v2941, 7
        %v3033 = vsel %vm390, %v3030, %v3032
        %v3034 = vrot.slane %v2942, 7
        %v3035 = vsel %vm390, %v3032, %v3034
        %v3036 = vrot.slane %v2943, 7
        %v3037 = vsel %vm390, %v3034, %v3036
        %v3038 = vrot.slane %v2944, 7
        %v3039 = vsel %vm390, %v3036, %v3038
        %v3040 = vrot.slane %v2945, 7
        %v3041 = vsel %vm390, %v3038, %v3040
        %v3042 = vsel %vm390, %v3040, %v2948
        %v3075 = vsel %vm390, %v2948, %v2981
        %v3076 = vmul.f32 %v3075, %v489
        %v3077 = vmul.f32 %v2983, %v494
        %v3078 = vmul.f32 %v2985, %v499
        %v3079 = vmul.f32 %v2987, %v504
        %v3080 = vmul.f32 %v2989, %v509
        %v3081 = vmul.f32 %v2991, %v514
        %v3082 = vmul.f32 %v2993, %v519
        %v3083 = vmul.f32 %v2995, %v524
        %v3084 = vmul.f32 %v2997, %v529
        %v3085 = vmul.f32 %v2999, %v534
        %v3086 = vmul.f32 %v3001, %v539
        %v3087 = vmul.f32 %v3003, %v544
        %v3088 = vmul.f32 %v3005, %v549
        %v3089 = vmul.f32 %v3007, %v554
        %v3090 = vmul.f32 %v3009, %v559
        %v3091 = vmul.f32 %v3011, %v564
        %v3092 = vmul.f32 %v3013, %v569
        %v3093 = vmul.f32 %v3015, %v574
        %v3094 = vmul.f32 %v3017, %v579
        %v3095 = vmul.f32 %v3019, %v584
        %v3096 = vmul.f32 %v3021, %v589
        %v3097 = vmul.f32 %v3023, %v594
        %v3098 = vmul.f32 %v3025, %v599
        %v3099 = vmul.f32 %v3027, %v604
        %v3100 = vmul.f32 %v3029, %v609
        %v3101 = vmul.f32 %v3031, %v614
        %v3102 = vmul.f32 %v3033, %v619
        %v3103 = vmul.f32 %v3035, %v624
        %v3104 = vmul.f32 %v3037, %v629
        %v3105 = vmul.f32 %v3039, %v634
        %v3106 = vmul.f32 %v3041, %v639
        %v3107 = vmul.f32 %v3042, %v644
        %v3108 = vrot.slane %v2915, 1
        %v3109 = vrot.slane %v2916, 1
        %v3110 = vsel %vm678, %v3108, %v3109
        %v3111 = vrot.slane %v2917, 1
        %v3112 = vsel %vm678, %v3109, %v3111
        %v3113 = vrot.slane %v2918, 1
        %v3114 = vsel %vm678, %v3111, %v3113
        %v3115 = vrot.slane %v2919, 1
        %v3116 = vsel %vm678, %v3113, %v3115
        %v3117 = vrot.slane %v2920, 1
        %v3118 = vsel %vm678, %v3115, %v3117
        %v3119 = vrot.slane %v2921, 1
        %v3120 = vsel %vm678, %v3117, %v3119
        %v3121 = vrot.slane %v2922, 1
        %v3122 = vsel %vm678, %v3119, %v3121
        %v3123 = vrot.slane %v2923, 1
        %v3124 = vsel %vm678, %v3121, %v3123
        %v3125 = vrot.slane %v2924, 1
        %v3126 = vsel %vm678, %v3123, %v3125
        %v3127 = vrot.slane %v2925, 1
        %v3128 = vsel %vm678, %v3125, %v3127
        %v3129 = vrot.slane %v2926, 1
        %v3130 = vsel %vm678, %v3127, %v3129
        %v3131 = vrot.slane %v2927, 1
        %v3132 = vsel %vm678, %v3129, %v3131
        %v3133 = vrot.slane %v2928, 1
        %v3134 = vsel %vm678, %v3131, %v3133
        %v3135 = vrot.slane %v2929, 1
        %v3136 = vsel %vm678, %v3133, %v3135
        %v3137 = vrot.slane %v2930, 1
        %v3138 = vsel %vm678, %v3135, %v3137
        %v3139 = vrot.slane %v2931, 1
        %v3140 = vsel %vm678, %v3137, %v3139
        %v3141 = vrot.slane %v2932, 1
        %v3142 = vsel %vm678, %v3139, %v3141
        %v3143 = vrot.slane %v2933, 1
        %v3144 = vsel %vm678, %v3141, %v3143
        %v3145 = vrot.slane %v2934, 1
        %v3146 = vsel %vm678, %v3143, %v3145
        %v3147 = vrot.slane %v2935, 1
        %v3148 = vsel %vm678, %v3145, %v3147
        %v3149 = vrot.slane %v2936, 1
        %v3150 = vsel %vm678, %v3147, %v3149
        %v3151 = vrot.slane %v2937, 1
        %v3152 = vsel %vm678, %v3149, %v3151
        %v3153 = vrot.slane %v2938, 1
        %v3154 = vsel %vm678, %v3151, %v3153
        %v3155 = vrot.slane %v2939, 1
        %v3156 = vsel %vm678, %v3153, %v3155
        %v3157 = vrot.slane %v2940, 1
        %v3158 = vsel %vm678, %v3155, %v3157
        %v3159 = vrot.slane %v2941, 1
        %v3160 = vsel %vm678, %v3157, %v3159
        %v3161 = vrot.slane %v2942, 1
        %v3162 = vsel %vm678, %v3159, %v3161
        %v3163 = vrot.slane %v2943, 1
        %v3164 = vsel %vm678, %v3161, %v3163
        %v3165 = vrot.slane %v2944, 1
        %v3166 = vsel %vm678, %v3163, %v3165
        %v3167 = vrot.slane %v2945, 1
        %v3168 = vsel %vm678, %v3165, %v3167
        %v3169 = vrot.slane %v2946, 1
        %v3170 = vsel %vm678, %v3167, %v3169
        %v3204 = vsel %vm678, %v3169, %v3108
        %v3205 = vmul.f32 %v3110, %v779
        %v3206 = vmul.f32 %v3112, %v784
        %v3207 = vmul.f32 %v3114, %v789
        %v3208 = vmul.f32 %v3116, %v794
        %v3209 = vmul.f32 %v3118, %v799
        %v3210 = vmul.f32 %v3120, %v804
        %v3211 = vmul.f32 %v3122, %v809
        %v3212 = vmul.f32 %v3124, %v814
        %v3213 = vmul.f32 %v3126, %v819
        %v3214 = vmul.f32 %v3128, %v824
        %v3215 = vmul.f32 %v3130, %v829
        %v3216 = vmul.f32 %v3132, %v834
        %v3217 = vmul.f32 %v3134, %v839
        %v3218 = vmul.f32 %v3136, %v844
        %v3219 = vmul.f32 %v3138, %v849
        %v3220 = vmul.f32 %v3140, %v854
        %v3221 = vmul.f32 %v3142, %v859
        %v3222 = vmul.f32 %v3144, %v864
        %v3223 = vmul.f32 %v3146, %v869
        %v3224 = vmul.f32 %v3148, %v874
        %v3225 = vmul.f32 %v3150, %v879
        %v3226 = vmul.f32 %v3152, %v884
        %v3227 = vmul.f32 %v3154, %v889
        %v3228 = vmul.f32 %v3156, %v894
        %v3229 = vmul.f32 %v3158, %v899
        %v3230 = vmul.f32 %v3160, %v904
        %v3231 = vmul.f32 %v3162, %v909
        %v3232 = vmul.f32 %v3164, %v914
        %v3233 = vmul.f32 %v3166, %v919
        %v3234 = vmul.f32 %v3168, %v924
        %v3235 = vmul.f32 %v3170, %v929
        %v3236 = vmul.f32 %v3204, %v934
        %v3237 = vpack.c.bf16 %v3077, %v3076
        %v3238 = vpack.c.bf16 %v3079, %v3078
        %v3239 = vpack.c.bf16 %v3081, %v3080
        %v3240 = vpack.c.bf16 %v3083, %v3082
        %v3241 = vpack.c.bf16 %v3085, %v3084
        %v3242 = vpack.c.bf16 %v3087, %v3086
        %v3243 = vpack.c.bf16 %v3089, %v3088
        %v3244 = vpack.c.bf16 %v3091, %v3090
        %v3245 = vpack.c.bf16 %v3093, %v3092
        %v3246 = vpack.c.bf16 %v3095, %v3094
        %v3247 = vpack.c.bf16 %v3097, %v3096
        %v3248 = vpack.c.bf16 %v3099, %v3098
        %v3249 = vpack.c.bf16 %v3101, %v3100
        %v3250 = vpack.c.bf16 %v3103, %v3102
        %v3251 = vpack.c.bf16 %v3105, %v3104
        %v3252 = vpack.c.bf16 %v3107, %v3106
        %3253 = vst [vmem:[#allocation2 + $0x18] sm:$0xff] %v3237
        %3254 = vst [vmem:[#allocation2 + $0x30] sm:$0xff] %v3238
        %3255 = vst [vmem:[#allocation2 + $0x48] sm:$0xff] %v3239
        %3256 = vst [vmem:[#allocation2 + $0x60] sm:$0xff] %v3240
        %3257 = vst [vmem:[#allocation2 + $0x78] sm:$0xff] %v3241
        %3258 = vst [vmem:[#allocation2 + $0x90] sm:$0xff] %v3242
        %3259 = vst [vmem:[#allocation2 + $0xa8] sm:$0xff] %v3243
        %3260 = vst [vmem:[#allocation2 + $0xc0] sm:$0xff] %v3244
        %3261 = vst [vmem:[#allocation2 + $0xd8] sm:$0xff] %v3245
        %3262 = vst [vmem:[#allocation2 + $0xf0] sm:$0xff] %v3246
        %3263 = vst [vmem:[#allocation2 + $0x108] sm:$0xff] %v3247
        %3264 = vst [vmem:[#allocation2 + $0x120] sm:$0xff] %v3248
        %3265 = vst [vmem:[#allocation2 + $0x138] sm:$0xff] %v3249
        %3266 = vst [vmem:[#allocation2 + $0x150] sm:$0xff] %v3250
        %3267 = vst [vmem:[#allocation2 + $0x168] sm:$0xff] %v3251
        %3268 = vst [vmem:[#allocation2 + $0x180] sm:$0xff] %v3252
        %v3269 = vpack.c.bf16 %v2916, %v2915
        %v3270 = vpack.c.bf16 %v2918, %v2917
        %v3271 = vpack.c.bf16 %v2920, %v2919
        %v3272 = vpack.c.bf16 %v2922, %v2921
        %v3273 = vpack.c.bf16 %v2924, %v2923
        %v3274 = vpack.c.bf16 %v2926, %v2925
        %v3275 = vpack.c.bf16 %v2928, %v2927
        %v3276 = vpack.c.bf16 %v2930, %v2929
        %v3277 = vpack.c.bf16 %v2932, %v2931
        %v3278 = vpack.c.bf16 %v2934, %v2933
        %v3279 = vpack.c.bf16 %v2936, %v2935
        %v3280 = vpack.c.bf16 %v2938, %v2937
        %v3281 = vpack.c.bf16 %v2940, %v2939
        %v3282 = vpack.c.bf16 %v2942, %v2941
        %v3283 = vpack.c.bf16 %v2944, %v2943
        %v3284 = vpack.c.bf16 %v2946, %v2945
        %3285 = vst [vmem:[#allocation2 + $0x20] sm:$0xff] %v3269
        %3286 = vst [vmem:[#allocation2 + $0x38] sm:$0xff] %v3270
        %3287 = vst [vmem:[#allocation2 + $0x50] sm:$0xff] %v3271
        %3288 = vst [vmem:[#allocation2 + $0x68] sm:$0xff] %v3272
        %3289 = vst [vmem:[#allocation2 + $0x80] sm:$0xff] %v3273
        %3290 = vst [vmem:[#allocation2 + $0x98] sm:$0xff] %v3274
        %3291 = vst [vmem:[#allocation2 + $0xb0] sm:$0xff] %v3275
        %3292 = vst [vmem:[#allocation2 + $0xc8] sm:$0xff] %v3276
        %3293 = vst [vmem:[#allocation2 + $0xe0] sm:$0xff] %v3277
        %3294 = vst [vmem:[#allocation2 + $0xf8] sm:$0xff] %v3278
        %3295 = vst [vmem:[#allocation2 + $0x110] sm:$0xff] %v3279
        %3296 = vst [vmem:[#allocation2 + $0x128] sm:$0xff] %v3280
        %3297 = vst [vmem:[#allocation2 + $0x140] sm:$0xff] %v3281
        %3298 = vst [vmem:[#allocation2 + $0x158] sm:$0xff] %v3282
        %3299 = vst [vmem:[#allocation2 + $0x170] sm:$0xff] %v3283
        %3300 = vst [vmem:[#allocation2 + $0x188] sm:$0xff] %v3284
        %v3301 = vpack.c.bf16 %v3206, %v3205
        %v3302 = vpack.c.bf16 %v3208, %v3207
        %v3303 = vpack.c.bf16 %v3210, %v3209
        %v3304 = vpack.c.bf16 %v3212, %v3211
        %v3305 = vpack.c.bf16 %v3214, %v3213
        %v3306 = vpack.c.bf16 %v3216, %v3215
        %v3307 = vpack.c.bf16 %v3218, %v3217
        %v3308 = vpack.c.bf16 %v3220, %v3219
        %v3309 = vpack.c.bf16 %v3222, %v3221
        %v3310 = vpack.c.bf16 %v3224, %v3223
        %v3311 = vpack.c.bf16 %v3226, %v3225
        %v3312 = vpack.c.bf16 %v3228, %v3227
        %v3313 = vpack.c.bf16 %v3230, %v3229
        %v3314 = vpack.c.bf16 %v3232, %v3231
        %v3315 = vpack.c.bf16 %v3234, %v3233
        %v3316 = vpack.c.bf16 %v3236, %v3235
        %3317 = vst [vmem:[#allocation2 + $0x28] sm:$0xff] %v3301
        %3318 = vst [vmem:[#allocation2 + $0x40] sm:$0xff] %v3302
        %3319 = vst [vmem:[#allocation2 + $0x58] sm:$0xff] %v3303
        %3320 = vst [vmem:[#allocation2 + $0x70] sm:$0xff] %v3304
        %3321 = vst [vmem:[#allocation2 + $0x88] sm:$0xff] %v3305
        %3322 = vst [vmem:[#allocation2 + $0xa0] sm:$0xff] %v3306
        %3323 = vst [vmem:[#allocation2 + $0xb8] sm:$0xff] %v3307
        %3324 = vst [vmem:[#allocation2 + $0xd0] sm:$0xff] %v3308
        %3325 = vst [vmem:[#allocation2 + $0xe8] sm:$0xff] %v3309
        %3326 = vst [vmem:[#allocation2 + $0x100] sm:$0xff] %v3310
        %3327 = vst [vmem:[#allocation2 + $0x118] sm:$0xff] %v3311
        %3328 = vst [vmem:[#allocation2 + $0x130] sm:$0xff] %v3312
        %3329 = vst [vmem:[#allocation2 + $0x148] sm:$0xff] %v3313
        %3330 = vst [vmem:[#allocation2 + $0x160] sm:$0xff] %v3314
        %3331 = vst [vmem:[#allocation2 + $0x178] sm:$0xff] %v3315
        %3332 = vst [vmem:[#allocation2 + $0x190] sm:$0xff] %v3316
        %v3333 = vld [vmem:[#allocation2] sm:$0xff]
        %v3334 = vld [vmem:[#allocation2 + $0x8] sm:$0xff]
        %v3335 = vld [vmem:[#allocation2 + $0x10] sm:$0xff]
        %v3336 = vld [vmem:[#allocation2 + $0x18] sm:$0xff]
        %v3337 = vld [vmem:[#allocation2 + $0x20] sm:$0xff]
        %v3338 = vld [vmem:[#allocation2 + $0x28] sm:$0xff]
        %v3339 = vld [vmem:[#allocation2 + $0x30] sm:$0xff]
        %v3340 = vld [vmem:[#allocation2 + $0x38] sm:$0xff]
        %v3341 = vld [vmem:[#allocation2 + $0x40] sm:$0xff]
        %v3342 = vld [vmem:[#allocation2 + $0x48] sm:$0xff]
        %v3343 = vld [vmem:[#allocation2 + $0x50] sm:$0xff]
        %v3344 = vld [vmem:[#allocation2 + $0x58] sm:$0xff]
        %v3345 = vld [vmem:[#allocation2 + $0x60] sm:$0xff]
        %v3346 = vld [vmem:[#allocation2 + $0x68] sm:$0xff]
        %v3347 = vld [vmem:[#allocation2 + $0x70] sm:$0xff]
        %v3348 = vld [vmem:[#allocation2 + $0x78] sm:$0xff]
        %v3349 = vld [vmem:[#allocation2 + $0x80] sm:$0xff]
        %v3350 = vld [vmem:[#allocation2 + $0x88] sm:$0xff]
        %v3351 = vld [vmem:[#allocation2 + $0x90] sm:$0xff]
        %v3352 = vld [vmem:[#allocation2 + $0x98] sm:$0xff]
        %v3353 = vld [vmem:[#allocation2 + $0xa0] sm:$0xff]
        %v3354 = vld [vmem:[#allocation2 + $0xa8] sm:$0xff]
        %v3355 = vld [vmem:[#allocation2 + $0xb0] sm:$0xff]
        %v3356 = vld [vmem:[#allocation2 + $0xb8] sm:$0xff]
        %v3357 = vld [vmem:[#allocation2 + $0xc0] sm:$0xff]
        %v3358 = vld [vmem:[#allocation2 + $0xc8] sm:$0xff]
        %v3359 = vld [vmem:[#allocation2 + $0xd0] sm:$0xff]
        %v3360 = vld [vmem:[#allocation2 + $0xd8] sm:$0xff]
        %v3361 = vld [vmem:[#allocation2 + $0xe0] sm:$0xff]
        %v3362 = vld [vmem:[#allocation2 + $0xe8] sm:$0xff]
        %v3363 = vld [vmem:[#allocation2 + $0xf0] sm:$0xff]
        %v3364 = vld [vmem:[#allocation2 + $0xf8] sm:$0xff]
        %v3365 = vld [vmem:[#allocation2 + $0x100] sm:$0xff]
        %v3366 = vld [vmem:[#allocation2 + $0x108] sm:$0xff]
        %v3367 = vld [vmem:[#allocation2 + $0x110] sm:$0xff]
        %v3368 = vld [vmem:[#allocation2 + $0x118] sm:$0xff]
        %v3369 = vld [vmem:[#allocation2 + $0x120] sm:$0xff]
        %v3370 = vld [vmem:[#allocation2 + $0x128] sm:$0xff]
        %v3371 = vld [vmem:[#allocation2 + $0x130] sm:$0xff]
        %v3372 = vld [vmem:[#allocation2 + $0x138] sm:$0xff]
        %v3373 = vld [vmem:[#allocation2 + $0x140] sm:$0xff]
        %v3374 = vld [vmem:[#allocation2 + $0x148] sm:$0xff]
        %v3375 = vld [vmem:[#allocation2 + $0x150] sm:$0xff]
        %v3376 = vld [vmem:[#allocation2 + $0x158] sm:$0xff]
        %v3377 = vld [vmem:[#allocation2 + $0x160] sm:$0xff]
        %v3378 = vld [vmem:[#allocation2 + $0x168] sm:$0xff]
        %v3379 = vld [vmem:[#allocation2 + $0x170] sm:$0xff]
        %v3380 = vld [vmem:[#allocation2 + $0x178] sm:$0xff]
        %v3381 = vld [vmem:[#allocation6] sm:$0xf]
        %v3382 = vld [vmem:[#allocation6 + $0x4] sm:$0xf]
        %v3383 = vld [vmem:[#allocation6 + $0x8] sm:$0xf]
        %v3384 = vld [vmem:[#allocation6 + $0xc] sm:$0xf]
        %v3385 = vld [vmem:[#allocation6 + $0x10] sm:$0xf]
        %v3386 = vld [vmem:[#allocation6 + $0x14] sm:$0xf]
        %v3387 = vld [vmem:[#allocation6 + $0x18] sm:$0xf]
        %v3388 = vld [vmem:[#allocation6 + $0x1c] sm:$0xf]
        %v3389 = vld [vmem:[#allocation6 + $0x20] sm:$0xf]
        %v3390 = vld [vmem:[#allocation6 + $0x24] sm:$0xf]
        %v3391 = vld [vmem:[#allocation6 + $0x28] sm:$0xf]
        %v3392 = vld [vmem:[#allocation6 + $0x2c] sm:$0xf]
        %v3393 = vld [vmem:[#allocation6 + $0x30] sm:$0xf]
        %v3394 = vld [vmem:[#allocation6 + $0x34] sm:$0xf]
        %v3395 = vld [vmem:[#allocation6 + $0x38] sm:$0xf]
        %v3396 = vld [vmem:[#allocation6 + $0x3c] sm:$0xf]
        %v3397 = vld [vmem:[#allocation6 + $0x40] sm:$0xf]
        %v3398 = vld [vmem:[#allocation6 + $0x44] sm:$0xf]
        %v3399 = vld [vmem:[#allocation6 + $0x48] sm:$0xf]
        %v3400 = vld [vmem:[#allocation6 + $0x4c] sm:$0xf]
        %v3401 = vld [vmem:[#allocation6 + $0x50] sm:$0xf]
        %v3402 = vld [vmem:[#allocation6 + $0x54] sm:$0xf]
        %v3403 = vld [vmem:[#allocation6 + $0x58] sm:$0xf]
        %v3404 = vld [vmem:[#allocation6 + $0x5c] sm:$0xf]
        %v3405 = vld [vmem:[#allocation6 + $0x60] sm:$0xf]
        %v3406 = vld [vmem:[#allocation6 + $0x64] sm:$0xf]
        %v3407 = vld [vmem:[#allocation6 + $0x68] sm:$0xf]
        %v3408 = vld [vmem:[#allocation6 + $0x6c] sm:$0xf]
        %v3409 = vld [vmem:[#allocation6 + $0x70] sm:$0xf]
        %v3410 = vld [vmem:[#allocation6 + $0x74] sm:$0xf]
        %v3411 = vld [vmem:[#allocation6 + $0x78] sm:$0xf]
        %v3412 = vld [vmem:[#allocation6 + $0x7c] sm:$0xf]
        %v3413 = vld [vmem:[#allocation6 + $0x80] sm:$0xf]
        %v3414 = vld [vmem:[#allocation6 + $0x84] sm:$0xf]
        %v3415 = vld [vmem:[#allocation6 + $0x88] sm:$0xf]
        %v3416 = vld [vmem:[#allocation6 + $0x8c] sm:$0xf]
        %v3417 = vld [vmem:[#allocation6 + $0x90] sm:$0xf]
        %v3418 = vld [vmem:[#allocation6 + $0x94] sm:$0xf]
        %v3419 = vld [vmem:[#allocation6 + $0x98] sm:$0xf]
        %v3420 = vld [vmem:[#allocation6 + $0x9c] sm:$0xf]
        %v3421 = vld [vmem:[#allocation6 + $0xa0] sm:$0xf]
        %v3422 = vld [vmem:[#allocation6 + $0xa4] sm:$0xf]
        %v3423 = vld [vmem:[#allocation6 + $0xa8] sm:$0xf]
        %v3424 = vld [vmem:[#allocation6 + $0xac] sm:$0xf]
        %v3425 = vld [vmem:[#allocation6 + $0xb0] sm:$0xf]
        %v3426 = vld [vmem:[#allocation6 + $0xb4] sm:$0xf]
        %v3427 = vld [vmem:[#allocation6 + $0xb8] sm:$0xf]
        %v3428 = vld [vmem:[#allocation6 + $0xbc] sm:$0xf]
        %v3429 = vld [vmem:[#allocation2 + $0x180] sm:$0xff]
        %v3430 = vld [vmem:[#allocation2 + $0x188] sm:$0xff]
        %v3431 = vld [vmem:[#allocation2 + $0x190] sm:$0xff]
        %s3432 = scalar_lea.vmem [#allocation6], 192
        %v3433 = vld [vmem:[%s3432] sm:$0xf]
        %v3434 = vld [vmem:[%s3432 + $0x4] sm:$0xf]
        %v3435 = vld [vmem:[%s3432 + $0x8] sm:$0xf]
        %v3436 = vld [vmem:[%s3432 + $0xc] sm:$0xf]
        %v3437 = vld [vmem:[%s3432 + $0x10] sm:$0xf]
        %v3438 = vld [vmem:[%s3432 + $0x14] sm:$0xf]
        %v3439 = vld [vmem:[%s3432 + $0x18] sm:$0xf]
        %v3440 = vld [vmem:[%s3432 + $0x1c] sm:$0xf]
        %v3441 = vld [vmem:[%s3432 + $0x20] sm:$0xf]
        %v3442 = vld [vmem:[%s3432 + $0x24] sm:$0xf]
        %v3443 = vld [vmem:[%s3432 + $0x28] sm:$0xf]
        %v3444 = vld [vmem:[%s3432 + $0x2c] sm:$0xf]
        %v3445 = vld [vmem:[%s3432 + $0x30] sm:$0xf]
        %v3446 = vld [vmem:[%s3432 + $0x34] sm:$0xf]
        %v3447 = vld [vmem:[%s3432 + $0x38] sm:$0xf]
        %v3448 = vld [vmem:[%s3432 + $0x3c] sm:$0xf]
        %v3449 = vld [vmem:[%s3432 + $0x40] sm:$0xf]
        %v3450 = vld [vmem:[%s3432 + $0x44] sm:$0xf]
        %v3451 = vld [vmem:[%s3432 + $0x48] sm:$0xf]
        %v3452 = vld [vmem:[%s3432 + $0x4c] sm:$0xf]
        %v3453 = vld [vmem:[%s3432 + $0x50] sm:$0xf]
        %v3454 = vld [vmem:[%s3432 + $0x54] sm:$0xf]
        %v3455 = vld [vmem:[%s3432 + $0x58] sm:$0xf]
        %v3456 = vld [vmem:[%s3432 + $0x5c] sm:$0xf]
        %v3457 = vld [vmem:[%s3432 + $0x60] sm:$0xf]
        %v3458 = vld [vmem:[%s3432 + $0x64] sm:$0xf]
        %v3459 = vld [vmem:[%s3432 + $0x68] sm:$0xf]
        %v3460 = vld [vmem:[%s3432 + $0x6c] sm:$0xf]
        %v3461 = vld [vmem:[%s3432 + $0x70] sm:$0xf]
        %v3462 = vld [vmem:[%s3432 + $0x74] sm:$0xf]
        %v3463 = vld [vmem:[%s3432 + $0x78] sm:$0xf]
        %v3464 = vld [vmem:[%s3432 + $0x7c] sm:$0xf]
        %v3465 = vld [vmem:[%s3432 + $0x80] sm:$0xf]
        %v3466 = vld [vmem:[%s3432 + $0x84] sm:$0xf]
        %v3467 = vld [vmem:[%s3432 + $0x88] sm:$0xf]
        %v3468 = vld [vmem:[%s3432 + $0x8c] sm:$0xf]
        %v3469 = vld [vmem:[%s3432 + $0x90] sm:$0xf]
        %v3470 = vld [vmem:[%s3432 + $0x94] sm:$0xf]
        %v3471 = vld [vmem:[%s3432 + $0x98] sm:$0xf]
        %v3472 = vld [vmem:[%s3432 + $0x9c] sm:$0xf]
        %v3473 = vld [vmem:[%s3432 + $0xa0] sm:$0xf]
        %v3474 = vld [vmem:[%s3432 + $0xa4] sm:$0xf]
        %v3475 = vld [vmem:[%s3432 + $0xa8] sm:$0xf]
        %v3476 = vld [vmem:[%s3432 + $0xac] sm:$0xf]
        %v3477 = vld [vmem:[%s3432 + $0xb0] sm:$0xf]
        %v3478 = vld [vmem:[%s3432 + $0xb4] sm:$0xf]
        %v3479 = vld [vmem:[%s3432 + $0xb8] sm:$0xf]
        %v3480 = vld [vmem:[%s3432 + $0xbc] sm:$0xf]
        %v3529 = vunpack.c.l.b16 %v3433
        %v3530 = vunpack.c.l.b16 %v3434
        %v3531 = vunpack.c.l.b16 %v3435
        %v3532 = vunpack.c.l.b16 %v3436
        %v3533 = vunpack.c.l.b16 %v3437
        %v3534 = vunpack.c.l.b16 %v3438
        %v3535 = vunpack.c.l.b16 %v3439
        %v3536 = vunpack.c.l.b16 %v3440
        %v3537 = vunpack.c.l.b16 %v3441
        %v3538 = vunpack.c.l.b16 %v3442
        %v3539 = vunpack.c.l.b16 %v3443
        %v3540 = vunpack.c.l.b16 %v3444
        %v3541 = vunpack.c.l.b16 %v3445
        %v3542 = vunpack.c.l.b16 %v3446
        %v3543 = vunpack.c.l.b16 %v3447
        %v3544 = vunpack.c.l.b16 %v3448
        %v3545 = vunpack.c.l.b16 %v3449
        %v3546 = vunpack.c.l.b16 %v3450
        %v3547 = vunpack.c.l.b16 %v3451
        %v3548 = vunpack.c.l.b16 %v3452
        %v3549 = vunpack.c.l.b16 %v3453
        %v3550 = vunpack.c.l.b16 %v3454
        %v3551 = vunpack.c.l.b16 %v3455
        %v3552 = vunpack.c.l.b16 %v3456
        %v3553 = vunpack.c.l.b16 %v3457
        %v3554 = vunpack.c.l.b16 %v3458
        %v3555 = vunpack.c.l.b16 %v3459
        %v3556 = vunpack.c.l.b16 %v3460
        %v3557 = vunpack.c.l.b16 %v3461
        %v3558 = vunpack.c.l.b16 %v3462
        %v3559 = vunpack.c.l.b16 %v3463
        %v3560 = vunpack.c.l.b16 %v3464
        %v3561 = vunpack.c.l.b16 %v3465
        %v3562 = vunpack.c.l.b16 %v3466
        %v3563 = vunpack.c.l.b16 %v3467
        %v3564 = vunpack.c.l.b16 %v3468
        %v3565 = vunpack.c.l.b16 %v3469
        %v3566 = vunpack.c.l.b16 %v3470
        %v3567 = vunpack.c.l.b16 %v3471
        %v3568 = vunpack.c.l.b16 %v3472
        %v3569 = vunpack.c.l.b16 %v3473
        %v3570 = vunpack.c.l.b16 %v3474
        %v3571 = vunpack.c.l.b16 %v3475
        %v3572 = vunpack.c.l.b16 %v3476
        %v3573 = vunpack.c.l.b16 %v3477
        %v3574 = vunpack.c.l.b16 %v3478
        %v3575 = vunpack.c.l.b16 %v3479
        %v3576 = vunpack.c.l.b16 %v3480
        %v3577 = vpack.c.b16 %v3530, %v3529
        %v3578 = vpack.c.b16 %v3532, %v3531
        %v3579 = vpack.c.b16 %v3534, %v3533
        %v3580 = vpack.c.b16 %v3536, %v3535
        %v3581 = vpack.c.b16 %v3538, %v3537
        %v3582 = vpack.c.b16 %v3540, %v3539
        %v3583 = vpack.c.b16 %v3542, %v3541
        %v3584 = vpack.c.b16 %v3544, %v3543
        %v3585 = vpack.c.b16 %v3546, %v3545
        %v3586 = vpack.c.b16 %v3548, %v3547
        %v3587 = vpack.c.b16 %v3550, %v3549
        %v3588 = vpack.c.b16 %v3552, %v3551
        %v3589 = vpack.c.b16 %v3554, %v3553
        %v3590 = vpack.c.b16 %v3556, %v3555
        %v3591 = vpack.c.b16 %v3558, %v3557
        %v3592 = vpack.c.b16 %v3560, %v3559
        %v3593 = vpack.c.b16 %v3562, %v3561
        %v3594 = vpack.c.b16 %v3564, %v3563
        %v3595 = vpack.c.b16 %v3566, %v3565
        %v3596 = vpack.c.b16 %v3568, %v3567
        %v3597 = vpack.c.b16 %v3570, %v3569
        %v3598 = vpack.c.b16 %v3572, %v3571
        %v3599 = vpack.c.b16 %v3574, %v3573
        %v3600 = vpack.c.b16 %v3576, %v3575
        %3625 = vmatprep.subr.bf16.mxu0 0
        %3626 = vmatpush1.bf16.msra.mxu0 %v3577
        %3627 = vmatprep.subr.bf16.mxu0 0
        %3628 = vmatpush1.bf16.msra.mxu0 %v3578
        %3629 = vmatprep.subr.bf16.mxu0 0
        %3630 = vmatpush1.bf16.msra.mxu0 %v3579
        %3631 = vmatprep.subr.bf16.mxu0 0
        %3632 = vmatpush1.bf16.msra.mxu0 %v3580
        %3633 = vmatprep.subr.bf16.mxu0 0
        %3634 = vmatpush1.bf16.msra.mxu0 %v3581
        %3635 = vmatprep.subr.bf16.mxu0 0
        %3636 = vmatpush1.bf16.msra.mxu0 %v3582
        %3637 = vmatprep.subr.bf16.mxu0 0
        %3638 = vmatpush1.bf16.msra.mxu0 %v3583
        %3639 = vmatprep.subr.bf16.mxu0 0
        %3640 = vmatpush1.bf16.msra.mxu0 %v3584
        %3641 = vmatprep.subr.bf16.mxu0 0
        %3642 = vmatpush1.bf16.msra.mxu0 %v3585
        %3643 = vmatprep.subr.bf16.mxu0 0
        %3644 = vmatpush1.bf16.msra.mxu0 %v3586
        %3645 = vmatprep.subr.bf16.mxu0 0
        %3646 = vmatpush1.bf16.msra.mxu0 %v3587
        %3647 = vmatprep.subr.bf16.mxu0 0
        %3648 = vmatpush1.bf16.msra.mxu0 %v3588
        %3649 = vmatprep.subr.bf16.mxu0 0
        %3650 = vmatpush1.bf16.msra.mxu0 %v3589
        %3651 = vmatprep.subr.bf16.mxu0 0
        %3652 = vmatpush1.bf16.msra.mxu0 %v3590
        %3653 = vmatprep.subr.bf16.mxu0 0
        %3654 = vmatpush1.bf16.msra.mxu0 %v3591
        %3655 = vmatprep.subr.bf16.mxu0 0
        %3656 = vmatpush1.bf16.msra.mxu0 %v3592
        %3657 = vmatprep.mubr.bf16.mxu0 %v3337
        %3658 = vmatmul.mubr.bf16.gmra.mrb[0].mxu0 %v3336
        %v3659 = vpop.f32.mrb[0].mxu0
        %v3660 = vadd.f32 0.0, %v3659
        %v3661 = vpop.f32.mrb[0].mxu0
        %v3662 = vpop.f32.mrb[0].mxu0
        %v3663 = vadd.f32 0.0, %v3662
        %v3664 = vpop.f32.mrb[0].mxu0
        %3665 = vmatprep.mubr.bf16.mxu0 %v3340
        %3666 = vmatmul.mubr.bf16.gmra.mrb[0].mxu0 %v3339
        %v3667 = vpop.f32.mrb[0].mxu0
        %v3668 = vadd.f32 0.0, %v3667
        %v3669 = vpop.f32.mrb[0].mxu0
        %v3670 = vpop.f32.mrb[0].mxu0
        %v3671 = vadd.f32 0.0, %v3670
        %v3672 = vpop.f32.mrb[0].mxu0
        %3673 = vmatprep.mubr.bf16.mxu0 %v3343
        %3674 = vmatmul.mubr.bf16.gmra.mrb[0].mxu0 %v3342
        %v3675 = vpop.f32.mrb[0].mxu0
        %v3676 = vadd.f32 0.0, %v3675
        %v3677 = vpop.f32.mrb[0].mxu0
        %v3678 = vpop.f32.mrb[0].mxu0
        %v3679 = vadd.f32 0.0, %v3678
        %v3680 = vpop.f32.mrb[0].mxu0
        %3681 = vmatprep.mubr.bf16.mxu0 %v3346
        %3682 = vmatmul.mubr.bf16.gmra.mrb[0].mxu0 %v3345
        %v3683 = vpop.f32.mrb[0].mxu0
        %v3684 = vadd.f32 0.0, %v3683
        %v3685 = vpop.f32.mrb[0].mxu0
        %v3686 = vpop.f32.mrb[0].mxu0
        %v3687 = vadd.f32 0.0, %v3686
        %v3688 = vpop.f32.mrb[0].mxu0
        %3689 = vmatprep.mubr.bf16.mxu0 %v3349
        %3690 = vmatmul.mubr.bf16.gmra.mrb[0].mxu0 %v3348
        %v3691 = vpop.f32.mrb[0].mxu0
        %v3692 = vadd.f32 0.0, %v3691
        %v3693 = vpop.f32.mrb[0].mxu0
        %v3694 = vpop.f32.mrb[0].mxu0
        %v3695 = vadd.f32 0.0, %v3694
        %v3696 = vpop.f32.mrb[0].mxu0
        %3697 = vmatprep.mubr.bf16.mxu0 %v3352
        %3698 = vmatmul.mubr.bf16.gmra.mrb[0].mxu0 %v3351
        %v3699 = vpop.f32.mrb[0].mxu0
        %v3700 = vadd.f32 0.0, %v3699
        %v3701 = vpop.f32.mrb[0].mxu0
        %v3702 = vpop.f32.mrb[0].mxu0
        %v3703 = vadd.f32 0.0, %v3702
        %v3704 = vpop.f32.mrb[0].mxu0
        %3705 = vmatprep.mubr.bf16.mxu0 %v3355
        %3706 = vmatmul.mubr.bf16.gmra.mrb[0].mxu0 %v3354
        %v3707 = vpop.f32.mrb[0].mxu0
        %v3708 = vadd.f32 0.0, %v3707
        %v3709 = vpop.f32.mrb[0].mxu0
        %v3710 = vpop.f32.mrb[0].mxu0
        %v3711 = vadd.f32 0.0, %v3710
        %v3712 = vpop.f32.mrb[0].mxu0
        %3713 = vmatprep.mubr.bf16.mxu0 %v3358
        %3714 = vmatmul.mubr.bf16.gmra.mrb[0].mxu0 %v3357
        %v3715 = vpop.f32.mrb[0].mxu0
        %v3716 = vadd.f32 0.0, %v3715
        %v3717 = vpop.f32.mrb[0].mxu0
        %v3718 = vpop.f32.mrb[0].mxu0
        %v3719 = vadd.f32 0.0, %v3718
        %v3720 = vpop.f32.mrb[0].mxu0
        %3721 = vmatprep.mubr.bf16.mxu0 %v3361
        %3722 = vmatmul.mubr.bf16.gmra.mrb[0].mxu0 %v3360
        %v3723 = vpop.f32.mrb[0].mxu0
        %v3724 = vadd.f32 0.0, %v3723
        %v3725 = vpop.f32.mrb[0].mxu0
        %v3726 = vpop.f32.mrb[0].mxu0
        %v3727 = vadd.f32 0.0, %v3726
        %v3728 = vpop.f32.mrb[0].mxu0
        %3729 = vmatprep.mubr.bf16.mxu0 %v3364
        %3730 = vmatmul.mubr.bf16.gmra.mrb[0].mxu0 %v3363
        %v3731 = vpop.f32.mrb[0].mxu0
        %v3732 = vadd.f32 0.0, %v3731
        %v3733 = vpop.f32.mrb[0].mxu0
        %v3734 = vpop.f32.mrb[0].mxu0
        %v3735 = vadd.f32 0.0, %v3734
        %v3736 = vpop.f32.mrb[0].mxu0
        %3737 = vmatprep.mubr.bf16.mxu0 %v3367
        %3738 = vmatmul.mubr.bf16.gmra.mrb[0].mxu0 %v3366
        %v3739 = vpop.f32.mrb[0].mxu0
        %v3740 = vadd.f32 0.0, %v3739
        %v3741 = vpop.f32.mrb[0].mxu0
        %v3742 = vpop.f32.mrb[0].mxu0
        %v3743 = vadd.f32 0.0, %v3742
        %v3744 = vpop.f32.mrb[0].mxu0
        %3745 = vmatprep.mubr.bf16.mxu0 %v3370
        %3746 = vmatmul.mubr.bf16.gmra.mrb[0].mxu0 %v3369
        %v3747 = vpop.f32.mrb[0].mxu0
        %v3748 = vadd.f32 0.0, %v3747
        %v3749 = vpop.f32.mrb[0].mxu0
        %v3750 = vpop.f32.mrb[0].mxu0
        %v3751 = vadd.f32 0.0, %v3750
        %v3752 = vpop.f32.mrb[0].mxu0
        %3753 = vmatprep.mubr.bf16.mxu0 %v3373
        %3754 = vmatmul.mubr.bf16.gmra.mrb[0].mxu0 %v3372
        %v3755 = vpop.f32.mrb[0].mxu0
        %v3756 = vadd.f32 0.0, %v3755
        %v3757 = vpop.f32.mrb[0].mxu0
        %v3758 = vpop.f32.mrb[0].mxu0
        %v3759 = vadd.f32 0.0, %v3758
        %v3760 = vpop.f32.mrb[0].mxu0
        %3761 = vmatprep.mubr.bf16.mxu0 %v3376
        %3762 = vmatmul.mubr.bf16.gmra.mrb[0].mxu0 %v3375
        %v3763 = vpop.f32.mrb[0].mxu0
        %v3764 = vadd.f32 0.0, %v3763
        %v3765 = vpop.f32.mrb[0].mxu0
        %v3766 = vpop.f32.mrb[0].mxu0
        %v3767 = vadd.f32 0.0, %v3766
        %v3768 = vpop.f32.mrb[0].mxu0
        %3769 = vmatprep.mubr.bf16.mxu0 %v3379
        %3770 = vmatmul.mubr.bf16.gmra.mrb[0].mxu0 %v3378
        %v3771 = vpop.f32.mrb[0].mxu0
        %v3772 = vadd.f32 0.0, %v3771
        %v3773 = vpop.f32.mrb[0].mxu0
        %v3774 = vpop.f32.mrb[0].mxu0
        %v3775 = vadd.f32 0.0, %v3774
        %v3776 = vpop.f32.mrb[0].mxu0
        %3777 = vmatprep.mubr.bf16.mxu0 %v3430
        %3778 = vmatmul.mubr.bf16.gmra.mrb[0].mxu0 %v3429
        %v3779 = vpop.f32.mrb[0].mxu0
        %v3780 = vadd.f32 0.0, %v3779
        %v3781 = vpop.f32.mrb[0].mxu0
        %v3782 = vpop.f32.mrb[0].mxu0
        %v3783 = vadd.f32 0.0, %v3782
        %v3784 = vpop.f32.mrb[0].mxu0
        %3785 = vdwg.mxu0
        %3786 = vmatprep.subr.bf16.mxu0 0
        %3787 = vmatpush1.bf16.msra.mxu0 %v3593
        %3788 = vmatprep.subr.bf16.mxu0 0
        %3789 = vmatpush1.bf16.msra.mxu0 %v3594
        %3790 = vmatprep.subr.bf16.mxu0 0
        %3791 = vmatpush1.bf16.msra.mxu0 %v3595
        %3792 = vmatprep.subr.bf16.mxu0 0
        %3793 = vmatpush1.bf16.msra.mxu0 %v3596
        %3794 = vmatprep.subr.bf16.mxu0 0
        %3795 = vmatpush1.bf16.msra.mxu0 %v3597
        %3796 = vmatprep.subr.bf16.mxu0 0
        %3797 = vmatpush1.bf16.msra.mxu0 %v3598
        %3798 = vmatprep.subr.bf16.mxu0 0
        %3799 = vmatpush1.bf16.msra.mxu0 %v3599
        %3800 = vmatprep.subr.bf16.mxu0 0
        %3801 = vmatpush1.bf16.msra.mxu0 %v3600
        %3802 = vmatprep.subr.bf16.mxu0 0
        %3803 = vmatpush1.bf16.msra.mxu0 0
        %3804 = vmatprep.subr.bf16.mxu0 0
        %3805 = vmatpush1.bf16.msra.mxu0 0
        %3806 = vmatprep.subr.bf16.mxu0 0
        %3807 = vmatpush1.bf16.msra.mxu0 0
        %3808 = vmatprep.subr.bf16.mxu0 0
        %3809 = vmatpush1.bf16.msra.mxu0 0
        %3810 = vmatprep.subr.bf16.mxu0 0
        %3811 = vmatpush1.bf16.msra.mxu0 0
        %3812 = vmatprep.subr.bf16.mxu0 0
        %3813 = vmatpush1.bf16.msra.mxu0 0
        %3814 = vmatprep.subr.bf16.mxu0 0
        %3815 = vmatpush1.bf16.msra.mxu0 0
        %3816 = vmatprep.subr.bf16.mxu0 0
        %3817 = vmatpush1.bf16.msra.mxu0 0
        %3818 = vmatprep.mubr.bf16.mxu0 0
        %3819 = vmatmul.mubr.bf16.gmra.mrb[0].mxu0 %v3338
        %v3820 = vpop.f32.mrb[0].mxu0
        %v3821 = vadd.f32 %v3660, %v3820
        %v3822 = vpop.f32.mrb[0].mxu0
        %v3823 = vpop.f32.mrb[0].mxu0
        %v3824 = vadd.f32 %v3663, %v3823
        %v3825 = vpop.f32.mrb[0].mxu0
        %3826 = vmatprep.mubr.bf16.mxu0 0
        %3827 = vmatmul.mubr.bf16.gmra.mrb[0].mxu0 %v3341
        %v3828 = vpop.f32.mrb[0].mxu0
        %v3829 = vadd.f32 %v3668, %v3828
        %v3830 = vpop.f32.mrb[0].mxu0
        %v3831 = vpop.f32.mrb[0].mxu0
        %v3832 = vadd.f32 %v3671, %v3831
        %v3833 = vpop.f32.mrb[0].mxu0
        %3834 = vmatprep.mubr.bf16.mxu0 0
        %3835 = vmatmul.mubr.bf16.gmra.mrb[0].mxu0 %v3344
        %v3836 = vpop.f32.mrb[0].mxu0
        %v3837 = vadd.f32 %v3676, %v3836
        %v3838 = vpop.f32.mrb[0].mxu0
        %v3839 = vpop.f32.mrb[0].mxu0
        %v3840 = vadd.f32 %v3679, %v3839
        %v3841 = vpop.f32.mrb[0].mxu0
        %3842 = vmatprep.mubr.bf16.mxu0 0
        %3843 = vmatmul.mubr.bf16.gmra.mrb[0].mxu0 %v3347
        %v3844 = vpop.f32.mrb[0].mxu0
        %v3845 = vadd.f32 %v3684, %v3844
        %v3846 = vpop.f32.mrb[0].mxu0
        %v3847 = vpop.f32.mrb[0].mxu0
        %v3848 = vadd.f32 %v3687, %v3847
        %v3849 = vpop.f32.mrb[0].mxu0
        %3850 = vmatprep.mubr.bf16.mxu0 0
        %3851 = vmatmul.mubr.bf16.gmra.mrb[0].mxu0 %v3350
        %v3852 = vpop.f32.mrb[0].mxu0
        %v3853 = vadd.f32 %v3692, %v3852
        %v3854 = vpop.f32.mrb[0].mxu0
        %v3855 = vpop.f32.mrb[0].mxu0
        %v3856 = vadd.f32 %v3695, %v3855
        %v3857 = vpop.f32.mrb[0].mxu0
        %3858 = vmatprep.mubr.bf16.mxu0 0
        %3859 = vmatmul.mubr.bf16.gmra.mrb[0].mxu0 %v3353
        %v3860 = vpop.f32.mrb[0].mxu0
        %v3861 = vadd.f32 %v3700, %v3860
        %v3862 = vpop.f32.mrb[0].mxu0
        %v3863 = vpop.f32.mrb[0].mxu0
        %v3864 = vadd.f32 %v3703, %v3863
        %v3865 = vpop.f32.mrb[0].mxu0
        %3866 = vmatprep.mubr.bf16.mxu0 0
        %3867 = vmatmul.mubr.bf16.gmra.mrb[0].mxu0 %v3356
        %v3868 = vpop.f32.mrb[0].mxu0
        %v3869 = vadd.f32 %v3708, %v3868
        %v3870 = vpop.f32.mrb[0].mxu0
        %v3871 = vpop.f32.mrb[0].mxu0
        %v3872 = vadd.f32 %v3711, %v3871
        %v3873 = vpop.f32.mrb[0].mxu0
        %3874 = vmatprep.mubr.bf16.mxu0 0
        %3875 = vmatmul.mubr.bf16.gmra.mrb[0].mxu0 %v3359
        %v3876 = vpop.f32.mrb[0].mxu0
        %v3877 = vadd.f32 %v3716, %v3876
        %v3878 = vpop.f32.mrb[0].mxu0
        %v3879 = vpop.f32.mrb[0].mxu0
        %v3880 = vadd.f32 %v3719, %v3879
        %v3881 = vpop.f32.mrb[0].mxu0
        %3882 = vmatprep.mubr.bf16.mxu0 0
        %3883 = vmatmul.mubr.bf16.gmra.mrb[0].mxu0 %v3362
        %v3884 = vpop.f32.mrb[0].mxu0
        %v3885 = vadd.f32 %v3724, %v3884
        %v3886 = vpop.f32.mrb[0].mxu0
        %v3887 = vpop.f32.mrb[0].mxu0
        %v3888 = vadd.f32 %v3727, %v3887
        %v3889 = vpop.f32.mrb[0].mxu0
        %3890 = vmatprep.mubr.bf16.mxu0 0
        %3891 = vmatmul.mubr.bf16.gmra.mrb[0].mxu0 %v3365
        %v3892 = vpop.f32.mrb[0].mxu0
        %v3893 = vadd.f32 %v3732, %v3892
        %v3894 = vpop.f32.mrb[0].mxu0
        %v3895 = vpop.f32.mrb[0].mxu0
        %v3896 = vadd.f32 %v3735, %v3895
        %v3897 = vpop.f32.mrb[0].mxu0
        %3898 = vmatprep.mubr.bf16.mxu0 0
        %3899 = vmatmul.mubr.bf16.gmra.mrb[0].mxu0 %v3368
        %v3900 = vpop.f32.mrb[0].mxu0
        %v3901 = vadd.f32 %v3740, %v3900
        %v3902 = vpop.f32.mrb[0].mxu0
        %v3903 = vpop.f32.mrb[0].mxu0
        %v3904 = vadd.f32 %v3743, %v3903
        %v3905 = vpop.f32.mrb[0].mxu0
        %3906 = vmatprep.mubr.bf16.mxu0 0
        %3907 = vmatmul.mubr.bf16.gmra.mrb[0].mxu0 %v3371
        %v3908 = vpop.f32.mrb[0].mxu0
        %v3909 = vadd.f32 %v3748, %v3908
        %v3910 = vpop.f32.mrb[0].mxu0
        %v3911 = vpop.f32.mrb[0].mxu0
        %v3912 = vadd.f32 %v3751, %v3911
        %v3913 = vpop.f32.mrb[0].mxu0
        %3914 = vmatprep.mubr.bf16.mxu0 0
        %3915 = vmatmul.mubr.bf16.gmra.mrb[0].mxu0 %v3374
        %v3916 = vpop.f32.mrb[0].mxu0
        %v3917 = vadd.f32 %v3756, %v3916
        %v3918 = vpop.f32.mrb[0].mxu0
        %v3919 = vpop.f32.mrb[0].mxu0
        %v3920 = vadd.f32 %v3759, %v3919
        %v3921 = vpop.f32.mrb[0].mxu0
        %3922 = vmatprep.mubr.bf16.mxu0 0
        %3923 = vmatmul.mubr.bf16.gmra.mrb[0].mxu0 %v3377
        %v3924 = vpop.f32.mrb[0].mxu0
        %v3925 = vadd.f32 %v3764, %v3924
        %v3926 = vpop.f32.mrb[0].mxu0
        %v3927 = vpop.f32.mrb[0].mxu0
        %v3928 = vadd.f32 %v3767, %v3927
        %v3929 = vpop.f32.mrb[0].mxu0
        %3930 = vmatprep.mubr.bf16.mxu0 0
        %3931 = vmatmul.mubr.bf16.gmra.mrb[0].mxu0 %v3380
        %v3932 = vpop.f32.mrb[0].mxu0
        %v3933 = vadd.f32 %v3772, %v3932
        %v3934 = vpop.f32.mrb[0].mxu0
        %v3935 = vpop.f32.mrb[0].mxu0
        %v3936 = vadd.f32 %v3775, %v3935
        %v3937 = vpop.f32.mrb[0].mxu0
        %3938 = vmatprep.mubr.bf16.mxu0 0
        %3939 = vmatmul.mubr.bf16.gmra.mrb[0].mxu0 %v3431
        %v3940 = vpop.f32.mrb[0].mxu0
        %v3941 = vadd.f32 %v3780, %v3940
        %v3942 = vpop.f32.mrb[0].mxu0
        %v3943 = vpop.f32.mrb[0].mxu0
        %v3944 = vadd.f32 %v3783, %v3943
        %v3945 = vpop.f32.mrb[0].mxu0
        %3946 = vdwg.mxu0
        %v3995 = vunpack.c.l.b16 %v3381
        %v3996 = vunpack.c.l.b16 %v3382
        %v3997 = vunpack.c.l.b16 %v3383
        %v3998 = vunpack.c.l.b16 %v3384
        %v3999 = vunpack.c.l.b16 %v3385
        %v4000 = vunpack.c.l.b16 %v3386
        %v4001 = vunpack.c.l.b16 %v3387
        %v4002 = vunpack.c.l.b16 %v3388
        %v4003 = vunpack.c.l.b16 %v3389
        %v4004 = vunpack.c.l.b16 %v3390
        %v4005 = vunpack.c.l.b16 %v3391
        %v4006 = vunpack.c.l.b16 %v3392
        %v4007 = vunpack.c.l.b16 %v3393
        %v4008 = vunpack.c.l.b16 %v3394
        %v4009 = vunpack.c.l.b16 %v3395
        %v4010 = vunpack.c.l.b16 %v3396
        %v4011 = vunpack.c.l.b16 %v3397
        %v4012 = vunpack.c.l.b16 %v3398
        %v4013 = vunpack.c.l.b16 %v3399
        %v4014 = vunpack.c.l.b16 %v3400
        %v4015 = vunpack.c.l.b16 %v3401
        %v4016 = vunpack.c.l.b16 %v3402
        %v4017 = vunpack.c.l.b16 %v3403
        %v4018 = vunpack.c.l.b16 %v3404
        %v4019 = vunpack.c.l.b16 %v3405
        %v4020 = vunpack.c.l.b16 %v3406
        %v4021 = vunpack.c.l.b16 %v3407
        %v4022 = vunpack.c.l.b16 %v3408
        %v4023 = vunpack.c.l.b16 %v3409
        %v4024 = vunpack.c.l.b16 %v3410
        %v4025 = vunpack.c.l.b16 %v3411
        %v4026 = vunpack.c.l.b16 %v3412
        %v4027 = vunpack.c.l.b16 %v3413
        %v4028 = vunpack.c.l.b16 %v3414
        %v4029 = vunpack.c.l.b16 %v3415
        %v4030 = vunpack.c.l.b16 %v3416
        %v4031 = vunpack.c.l.b16 %v3417
        %v4032 = vunpack.c.l.b16 %v3418
        %v4033 = vunpack.c.l.b16 %v3419
        %v4034 = vunpack.c.l.b16 %v3420
        %v4035 = vunpack.c.l.b16 %v3421
        %v4036 = vunpack.c.l.b16 %v3422
        %v4037 = vunpack.c.l.b16 %v3423
        %v4038 = vunpack.c.l.b16 %v3424
        %v4039 = vunpack.c.l.b16 %v3425
        %v4040 = vunpack.c.l.b16 %v3426
        %v4041 = vunpack.c.l.b16 %v3427
        %v4042 = vunpack.c.l.b16 %v3428
        %v4043 = vpack.c.b16 %v3996, %v3995
        %v4044 = vpack.c.b16 %v3998, %v3997
        %v4045 = vpack.c.b16 %v4000, %v3999
        %v4046 = vpack.c.b16 %v4002, %v4001
        %v4047 = vpack.c.b16 %v4004, %v4003
        %v4048 = vpack.c.b16 %v4006, %v4005
        %v4049 = vpack.c.b16 %v4008, %v4007
        %v4050 = vpack.c.b16 %v4010, %v4009
        %v4051 = vpack.c.b16 %v4012, %v4011
        %v4052 = vpack.c.b16 %v4014, %v4013
        %v4053 = vpack.c.b16 %v4016, %v4015
        %v4054 = vpack.c.b16 %v4018, %v4017
        %v4055 = vpack.c.b16 %v4020, %v4019
        %v4056 = vpack.c.b16 %v4022, %v4021
        %v4057 = vpack.c.b16 %v4024, %v4023
        %v4058 = vpack.c.b16 %v4026, %v4025
        %v4059 = vpack.c.b16 %v4028, %v4027
        %v4060 = vpack.c.b16 %v4030, %v4029
        %v4061 = vpack.c.b16 %v4032, %v4031
        %v4062 = vpack.c.b16 %v4034, %v4033
        %v4063 = vpack.c.b16 %v4036, %v4035
        %v4064 = vpack.c.b16 %v4038, %v4037
        %v4065 = vpack.c.b16 %v4040, %v4039
        %v4066 = vpack.c.b16 %v4042, %v4041
        %4091 = vmatprep.subr.bf16.mxu0 0
        %4092 = vmatpush1.bf16.msra.mxu0 %v4043
        %4093 = vmatprep.subr.bf16.mxu0 0
        %4094 = vmatpush1.bf16.msra.mxu0 %v4044
        %4095 = vmatprep.subr.bf16.mxu0 0
        %4096 = vmatpush1.bf16.msra.mxu0 %v4045
        %4097 = vmatprep.subr.bf16.mxu0 0
        %4098 = vmatpush1.bf16.msra.mxu0 %v4046
        %4099 = vmatprep.subr.bf16.mxu0 0
        %4100 = vmatpush1.bf16.msra.mxu0 %v4047
        %4101 = vmatprep.subr.bf16.mxu0 0
        %4102 = vmatpush1.bf16.msra.mxu0 %v4048
        %4103 = vmatprep.subr.bf16.mxu0 0
        %4104 = vmatpush1.bf16.msra.mxu0 %v4049
        %4105 = vmatprep.subr.bf16.mxu0 0
        %4106 = vmatpush1.bf16.msra.mxu0 %v4050
        %4107 = vmatprep.subr.bf16.mxu0 0
        %4108 = vmatpush1.bf16.msra.mxu0 %v4051
        %4109 = vmatprep.subr.bf16.mxu0 0
        %4110 = vmatpush1.bf16.msra.mxu0 %v4052
        %4111 = vmatprep.subr.bf16.mxu0 0
        %4112 = vmatpush1.bf16.msra.mxu0 %v4053
        %4113 = vmatprep.subr.bf16.mxu0 0
        %4114 = vmatpush1.bf16.msra.mxu0 %v4054
        %4115 = vmatprep.subr.bf16.mxu0 0
        %4116 = vmatpush1.bf16.msra.mxu0 %v4055
        %4117 = vmatprep.subr.bf16.mxu0 0
        %4118 = vmatpush1.bf16.msra.mxu0 %v4056
        %4119 = vmatprep.subr.bf16.mxu0 0
        %4120 = vmatpush1.bf16.msra.mxu0 %v4057
        %4121 = vmatprep.subr.bf16.mxu0 0
        %4122 = vmatpush1.bf16.msra.mxu0 %v4058
        %4123 = vmatprep.mubr.bf16.mxu0 %v3334
        %4124 = vmatmul.mubr.bf16.gmra.mrb[0].mxu0 %v3333
        %v4125 = vpop.f32.mrb[0].mxu0
        %v4126 = vadd.f32 %v3821, %v4125
        %v4127 = vpop.f32.mrb[0].mxu0
        %v4128 = vpop.f32.mrb[0].mxu0
        %v4129 = vadd.f32 %v3824, %v4128
        %v4130 = vpop.f32.mrb[0].mxu0
        %4131 = vmatprep.mubr.bf16.mxu0 %v3337
        %4132 = vmatmul.mubr.bf16.gmra.mrb[0].mxu0 %v3336
        %v4133 = vpop.f32.mrb[0].mxu0
        %v4134 = vadd.f32 %v3829, %v4133
        %v4135 = vpop.f32.mrb[0].mxu0
        %v4136 = vpop.f32.mrb[0].mxu0
        %v4137 = vadd.f32 %v3832, %v4136
        %v4138 = vpop.f32.mrb[0].mxu0
        %4139 = vmatprep.mubr.bf16.mxu0 %v3340
        %4140 = vmatmul.mubr.bf16.gmra.mrb[0].mxu0 %v3339
        %v4141 = vpop.f32.mrb[0].mxu0
        %v4142 = vadd.f32 %v3837, %v4141
        %v4143 = vpop.f32.mrb[0].mxu0
        %v4144 = vpop.f32.mrb[0].mxu0
        %v4145 = vadd.f32 %v3840, %v4144
        %v4146 = vpop.f32.mrb[0].mxu0
        %4147 = vmatprep.mubr.bf16.mxu0 %v3343
        %4148 = vmatmul.mubr.bf16.gmra.mrb[0].mxu0 %v3342
        %v4149 = vpop.f32.mrb[0].mxu0
        %v4150 = vadd.f32 %v3845, %v4149
        %v4151 = vpop.f32.mrb[0].mxu0
        %v4152 = vpop.f32.mrb[0].mxu0
        %v4153 = vadd.f32 %v3848, %v4152
        %v4154 = vpop.f32.mrb[0].mxu0
        %4155 = vmatprep.mubr.bf16.mxu0 %v3346
        %4156 = vmatmul.mubr.bf16.gmra.mrb[0].mxu0 %v3345
        %v4157 = vpop.f32.mrb[0].mxu0
        %v4158 = vadd.f32 %v3853, %v4157
        %v4159 = vpop.f32.mrb[0].mxu0
        %v4160 = vpop.f32.mrb[0].mxu0
        %v4161 = vadd.f32 %v3856, %v4160
        %v4162 = vpop.f32.mrb[0].mxu0
        %4163 = vmatprep.mubr.bf16.mxu0 %v3349
        %4164 = vmatmul.mubr.bf16.gmra.mrb[0].mxu0 %v3348
        %v4165 = vpop.f32.mrb[0].mxu0
        %v4166 = vadd.f32 %v3861, %v4165
        %v4167 = vpop.f32.mrb[0].mxu0
        %v4168 = vpop.f32.mrb[0].mxu0
        %v4169 = vadd.f32 %v3864, %v4168
        %v4170 = vpop.f32.mrb[0].mxu0
        %4171 = vmatprep.mubr.bf16.mxu0 %v3352
        %4172 = vmatmul.mubr.bf16.gmra.mrb[0].mxu0 %v3351
        %v4173 = vpop.f32.mrb[0].mxu0
        %v4174 = vadd.f32 %v3869, %v4173
        %v4175 = vpop.f32.mrb[0].mxu0
        %v4176 = vpop.f32.mrb[0].mxu0
        %v4177 = vadd.f32 %v3872, %v4176
        %v4178 = vpop.f32.mrb[0].mxu0
        %4179 = vmatprep.mubr.bf16.mxu0 %v3355
        %4180 = vmatmul.mubr.bf16.gmra.mrb[0].mxu0 %v3354
        %v4181 = vpop.f32.mrb[0].mxu0
        %v4182 = vadd.f32 %v3877, %v4181
        %v4183 = vpop.f32.mrb[0].mxu0
        %v4184 = vpop.f32.mrb[0].mxu0
        %v4185 = vadd.f32 %v3880, %v4184
        %v4186 = vpop.f32.mrb[0].mxu0
        %4187 = vmatprep.mubr.bf16.mxu0 %v3358
        %4188 = vmatmul.mubr.bf16.gmra.mrb[0].mxu0 %v3357
        %v4189 = vpop.f32.mrb[0].mxu0
        %v4190 = vadd.f32 %v3885, %v4189
        %v4191 = vpop.f32.mrb[0].mxu0
        %v4192 = vpop.f32.mrb[0].mxu0
        %v4193 = vadd.f32 %v3888, %v4192
        %v4194 = vpop.f32.mrb[0].mxu0
        %4195 = vmatprep.mubr.bf16.mxu0 %v3361
        %4196 = vmatmul.mubr.bf16.gmra.mrb[0].mxu0 %v3360
        %v4197 = vpop.f32.mrb[0].mxu0
        %v4198 = vadd.f32 %v3893, %v4197
        %v4199 = vpop.f32.mrb[0].mxu0
        %v4200 = vpop.f32.mrb[0].mxu0
        %v4201 = vadd.f32 %v3896, %v4200
        %v4202 = vpop.f32.mrb[0].mxu0
        %4203 = vmatprep.mubr.bf16.mxu0 %v3364
        %4204 = vmatmul.mubr.bf16.gmra.mrb[0].mxu0 %v3363
        %v4205 = vpop.f32.mrb[0].mxu0
        %v4206 = vadd.f32 %v3901, %v4205
        %v4207 = vpop.f32.mrb[0].mxu0
        %v4208 = vpop.f32.mrb[0].mxu0
        %v4209 = vadd.f32 %v3904, %v4208
        %v4210 = vpop.f32.mrb[0].mxu0
        %4211 = vmatprep.mubr.bf16.mxu0 %v3367
        %4212 = vmatmul.mubr.bf16.gmra.mrb[0].mxu0 %v3366
        %v4213 = vpop.f32.mrb[0].mxu0
        %v4214 = vadd.f32 %v3909, %v4213
        %v4215 = vpop.f32.mrb[0].mxu0
        %v4216 = vpop.f32.mrb[0].mxu0
        %v4217 = vadd.f32 %v3912, %v4216
        %v4218 = vpop.f32.mrb[0].mxu0
        %4219 = vmatprep.mubr.bf16.mxu0 %v3370
        %4220 = vmatmul.mubr.bf16.gmra.mrb[0].mxu0 %v3369
        %v4221 = vpop.f32.mrb[0].mxu0
        %v4222 = vadd.f32 %v3917, %v4221
        %v4223 = vpop.f32.mrb[0].mxu0
        %v4224 = vpop.f32.mrb[0].mxu0
        %v4225 = vadd.f32 %v3920, %v4224
        %v4226 = vpop.f32.mrb[0].mxu0
        %4227 = vmatprep.mubr.bf16.mxu0 %v3373
        %4228 = vmatmul.mubr.bf16.gmra.mrb[0].mxu0 %v3372
        %v4229 = vpop.f32.mrb[0].mxu0
        %v4230 = vadd.f32 %v3925, %v4229
        %v4231 = vpop.f32.mrb[0].mxu0
        %v4232 = vpop.f32.mrb[0].mxu0
        %v4233 = vadd.f32 %v3928, %v4232
        %v4234 = vpop.f32.mrb[0].mxu0
        %4235 = vmatprep.mubr.bf16.mxu0 %v3376
        %4236 = vmatmul.mubr.bf16.gmra.mrb[0].mxu0 %v3375
        %v4237 = vpop.f32.mrb[0].mxu0
        %v4238 = vadd.f32 %v3933, %v4237
        %v4239 = vpop.f32.mrb[0].mxu0
        %v4240 = vpop.f32.mrb[0].mxu0
        %v4241 = vadd.f32 %v3936, %v4240
        %v4242 = vpop.f32.mrb[0].mxu0
        %4243 = vmatprep.mubr.bf16.mxu0 %v3379
        %4244 = vmatmul.mubr.bf16.gmra.mrb[0].mxu0 %v3378
        %v4245 = vpop.f32.mrb[0].mxu0
        %v4246 = vadd.f32 %v3941, %v4245
        %v4247 = vpop.f32.mrb[0].mxu0
        %v4248 = vpop.f32.mrb[0].mxu0
        %v4249 = vadd.f32 %v3944, %v4248
        %v4250 = vpop.f32.mrb[0].mxu0
        %4251 = vdwg.mxu0
        %4252 = vmatprep.subr.bf16.mxu0 0
        %4253 = vmatpush1.bf16.msra.mxu0 %v4059
        %4254 = vmatprep.subr.bf16.mxu0 0
        %4255 = vmatpush1.bf16.msra.mxu0 %v4060
        %4256 = vmatprep.subr.bf16.mxu0 0
        %4257 = vmatpush1.bf16.msra.mxu0 %v4061
        %4258 = vmatprep.subr.bf16.mxu0 0
        %4259 = vmatpush1.bf16.msra.mxu0 %v4062
        %4260 = vmatprep.subr.bf16.mxu0 0
        %4261 = vmatpush1.bf16.msra.mxu0 %v4063
        %4262 = vmatprep.subr.bf16.mxu0 0
        %4263 = vmatpush1.bf16.msra.mxu0 %v4064
        %4264 = vmatprep.subr.bf16.mxu0 0
        %4265 = vmatpush1.bf16.msra.mxu0 %v4065
        %4266 = vmatprep.subr.bf16.mxu0 0
        %4267 = vmatpush1.bf16.msra.mxu0 %v4066
        %4268 = vmatprep.subr.bf16.mxu0 0
        %4269 = vmatpush1.bf16.msra.mxu0 0
        %4270 = vmatprep.subr.bf16.mxu0 0
        %4271 = vmatpush1.bf16.msra.mxu0 0
        %4272 = vmatprep.subr.bf16.mxu0 0
        %4273 = vmatpush1.bf16.msra.mxu0 0
        %4274 = vmatprep.subr.bf16.mxu0 0
        %4275 = vmatpush1.bf16.msra.mxu0 0
        %4276 = vmatprep.subr.bf16.mxu0 0
        %4277 = vmatpush1.bf16.msra.mxu0 0
        %4278 = vmatprep.subr.bf16.mxu0 0
        %4279 = vmatpush1.bf16.msra.mxu0 0
        %4280 = vmatprep.subr.bf16.mxu0 0
        %4281 = vmatpush1.bf16.msra.mxu0 0
        %4282 = vmatprep.subr.bf16.mxu0 0
        %4283 = vmatpush1.bf16.msra.mxu0 0
        %4284 = vmatprep.mubr.bf16.mxu0 0
        %4285 = vmatmul.mubr.bf16.gmra.mrb[0].mxu0 %v3335
        %v4286 = vpop.f32.mrb[0].mxu0
        %v4287 = vadd.f32 %v4126, %v4286
        %v4288 = vpop.f32.mrb[0].mxu0
        %v4289 = vpop.f32.mrb[0].mxu0
        %v4290 = vadd.f32 %v4129, %v4289
        %v4291 = vpop.f32.mrb[0].mxu0
        %4292 = vmatprep.mubr.bf16.mxu0 0
        %4293 = vmatmul.mubr.bf16.gmra.mrb[0].mxu0 %v3338
        %v4294 = vpop.f32.mrb[0].mxu0
        %v4295 = vadd.f32 %v4134, %v4294
        %v4296 = vpop.f32.mrb[0].mxu0
        %v4297 = vpop.f32.mrb[0].mxu0
        %v4298 = vadd.f32 %v4137, %v4297
        %v4299 = vpop.f32.mrb[0].mxu0
        %4300 = vmatprep.mubr.bf16.mxu0 0
        %4301 = vmatmul.mubr.bf16.gmra.mrb[0].mxu0 %v3341
        %v4302 = vpop.f32.mrb[0].mxu0
        %v4303 = vadd.f32 %v4142, %v4302
        %v4304 = vpop.f32.mrb[0].mxu0
        %v4305 = vpop.f32.mrb[0].mxu0
        %v4306 = vadd.f32 %v4145, %v4305
        %v4307 = vpop.f32.mrb[0].mxu0
        %4308 = vmatprep.mubr.bf16.mxu0 0
        %4309 = vmatmul.mubr.bf16.gmra.mrb[0].mxu0 %v3344
        %v4310 = vpop.f32.mrb[0].mxu0
        %v4311 = vadd.f32 %v4150, %v4310
        %v4312 = vpop.f32.mrb[0].mxu0
        %v4313 = vpop.f32.mrb[0].mxu0
        %v4314 = vadd.f32 %v4153, %v4313
        %v4315 = vpop.f32.mrb[0].mxu0
        %4316 = vmatprep.mubr.bf16.mxu0 0
        %4317 = vmatmul.mubr.bf16.gmra.mrb[0].mxu0 %v3347
        %v4318 = vpop.f32.mrb[0].mxu0
        %v4319 = vadd.f32 %v4158, %v4318
        %v4320 = vpop.f32.mrb[0].mxu0
        %v4321 = vpop.f32.mrb[0].mxu0
        %v4322 = vadd.f32 %v4161, %v4321
        %v4323 = vpop.f32.mrb[0].mxu0
        %4324 = vmatprep.mubr.bf16.mxu0 0
        %4325 = vmatmul.mubr.bf16.gmra.mrb[0].mxu0 %v3350
        %v4326 = vpop.f32.mrb[0].mxu0
        %v4327 = vadd.f32 %v4166, %v4326
        %v4328 = vpop.f32.mrb[0].mxu0
        %v4329 = vpop.f32.mrb[0].mxu0
        %v4330 = vadd.f32 %v4169, %v4329
        %v4331 = vpop.f32.mrb[0].mxu0
        %4332 = vmatprep.mubr.bf16.mxu0 0
        %4333 = vmatmul.mubr.bf16.gmra.mrb[0].mxu0 %v3353
        %v4334 = vpop.f32.mrb[0].mxu0
        %v4335 = vadd.f32 %v4174, %v4334
        %v4336 = vpop.f32.mrb[0].mxu0
        %v4337 = vpop.f32.mrb[0].mxu0
        %v4338 = vadd.f32 %v4177, %v4337
        %v4339 = vpop.f32.mrb[0].mxu0
        %4340 = vmatprep.mubr.bf16.mxu0 0
        %4341 = vmatmul.mubr.bf16.gmra.mrb[0].mxu0 %v3356
        %v4342 = vpop.f32.mrb[0].mxu0
        %v4343 = vadd.f32 %v4182, %v4342
        %v4344 = vpop.f32.mrb[0].mxu0
        %v4345 = vpop.f32.mrb[0].mxu0
        %v4346 = vadd.f32 %v4185, %v4345
        %v4347 = vpop.f32.mrb[0].mxu0
        %4348 = vmatprep.mubr.bf16.mxu0 0
        %4349 = vmatmul.mubr.bf16.gmra.mrb[0].mxu0 %v3359
        %v4350 = vpop.f32.mrb[0].mxu0
        %v4351 = vadd.f32 %v4190, %v4350
        %v4352 = vpop.f32.mrb[0].mxu0
        %v4353 = vpop.f32.mrb[0].mxu0
        %v4354 = vadd.f32 %v4193, %v4353
        %v4355 = vpop.f32.mrb[0].mxu0
        %4356 = vmatprep.mubr.bf16.mxu0 0
        %4357 = vmatmul.mubr.bf16.gmra.mrb[0].mxu0 %v3362
        %v4358 = vpop.f32.mrb[0].mxu0
        %v4359 = vadd.f32 %v4198, %v4358
        %v4360 = vpop.f32.mrb[0].mxu0
        %v4361 = vpop.f32.mrb[0].mxu0
        %v4362 = vadd.f32 %v4201, %v4361
        %v4363 = vpop.f32.mrb[0].mxu0
        %4364 = vmatprep.mubr.bf16.mxu0 0
        %4365 = vmatmul.mubr.bf16.gmra.mrb[0].mxu0 %v3365
        %v4366 = vpop.f32.mrb[0].mxu0
        %v4367 = vadd.f32 %v4206, %v4366
        %v4368 = vpop.f32.mrb[0].mxu0
        %v4369 = vpop.f32.mrb[0].mxu0
        %v4370 = vadd.f32 %v4209, %v4369
        %v4371 = vpop.f32.mrb[0].mxu0
        %4372 = vmatprep.mubr.bf16.mxu0 0
        %4373 = vmatmul.mubr.bf16.gmra.mrb[0].mxu0 %v3368
        %v4374 = vpop.f32.mrb[0].mxu0
        %v4375 = vadd.f32 %v4214, %v4374
        %v4376 = vpop.f32.mrb[0].mxu0
        %v4377 = vpop.f32.mrb[0].mxu0
        %v4378 = vadd.f32 %v4217, %v4377
        %v4379 = vpop.f32.mrb[0].mxu0
        %4380 = vmatprep.mubr.bf16.mxu0 0
        %4381 = vmatmul.mubr.bf16.gmra.mrb[0].mxu0 %v3371
        %v4382 = vpop.f32.mrb[0].mxu0
        %v4383 = vadd.f32 %v4222, %v4382
        %v4384 = vpop.f32.mrb[0].mxu0
        %v4385 = vpop.f32.mrb[0].mxu0
        %v4386 = vadd.f32 %v4225, %v4385
        %v4387 = vpop.f32.mrb[0].mxu0
        %4388 = vmatprep.mubr.bf16.mxu0 0
        %4389 = vmatmul.mubr.bf16.gmra.mrb[0].mxu0 %v3374
        %v4390 = vpop.f32.mrb[0].mxu0
        %v4391 = vadd.f32 %v4230, %v4390
        %v4392 = vpop.f32.mrb[0].mxu0
        %v4393 = vpop.f32.mrb[0].mxu0
        %v4394 = vadd.f32 %v4233, %v4393
        %v4395 = vpop.f32.mrb[0].mxu0
        %4396 = vmatprep.mubr.bf16.mxu0 0
        %4397 = vmatmul.mubr.bf16.gmra.mrb[0].mxu0 %v3377
        %v4398 = vpop.f32.mrb[0].mxu0
        %v4399 = vadd.f32 %v4238, %v4398
        %v4400 = vpop.f32.mrb[0].mxu0
        %v4401 = vpop.f32.mrb[0].mxu0
        %v4402 = vadd.f32 %v4241, %v4401
        %v4403 = vpop.f32.mrb[0].mxu0
        %4404 = vmatprep.mubr.bf16.mxu0 0
        %4405 = vmatmul.mubr.bf16.gmra.mrb[0].mxu0 %v3380
        %v4406 = vpop.f32.mrb[0].mxu0
        %v4407 = vadd.f32 %v4246, %v4406
        %v4408 = vpop.f32.mrb[0].mxu0
        %v4409 = vpop.f32.mrb[0].mxu0
        %v4410 = vadd.f32 %v4249, %v4409
        %v4411 = vpop.f32.mrb[0].mxu0
        %4412 = vdwg.mxu0
        %v4413 = vld [vmem:[#allocation2 + $0x30] sm:$0xff]
        %v4414 = vld [vmem:[#allocation2 + $0x38] sm:$0xff]
        %v4415 = vld [vmem:[#allocation2 + $0x40] sm:$0xff]
        %v4416 = vld [vmem:[#allocation2 + $0x48] sm:$0xff]
        %v4417 = vld [vmem:[#allocation2 + $0x50] sm:$0xff]
        %v4418 = vld [vmem:[#allocation2 + $0x58] sm:$0xff]
        %v4419 = vld [vmem:[#allocation2 + $0x60] sm:$0xff]
        %v4420 = vld [vmem:[#allocation2 + $0x68] sm:$0xff]
        %v4421 = vld [vmem:[#allocation2 + $0x70] sm:$0xff]
        %v4422 = vld [vmem:[#allocation2 + $0x78] sm:$0xff]
        %v4423 = vld [vmem:[#allocation2 + $0x80] sm:$0xff]
        %v4424 = vld [vmem:[#allocation2 + $0x88] sm:$0xff]
        %v4425 = vld [vmem:[#allocation2 + $0x90] sm:$0xff]
        %v4426 = vld [vmem:[#allocation2 + $0x98] sm:$0xff]
        %v4427 = vld [vmem:[#allocation2 + $0xa0] sm:$0xff]
        %v4428 = vld [vmem:[#allocation2 + $0xa8] sm:$0xff]
        %v4429 = vld [vmem:[#allocation2 + $0xb0] sm:$0xff]
        %v4430 = vld [vmem:[#allocation2 + $0xb8] sm:$0xff]
        %v4431 = vld [vmem:[#allocation2 + $0xc0] sm:$0xff]
        %v4432 = vld [vmem:[#allocation2 + $0xc8] sm:$0xff]
        %v4433 = vld [vmem:[#allocation2 + $0xd0] sm:$0xff]
        %v4434 = vld [vmem:[#allocation2 + $0xd8] sm:$0xff]
        %v4435 = vld [vmem:[#allocation2 + $0xe0] sm:$0xff]
        %v4436 = vld [vmem:[#allocation2 + $0xe8] sm:$0xff]
        %v4437 = vld [vmem:[#allocation2 + $0xf0] sm:$0xff]
        %v4438 = vld [vmem:[#allocation2 + $0xf8] sm:$0xff]
        %v4439 = vld [vmem:[#allocation2 + $0x100] sm:$0xff]
        %v4440 = vld [vmem:[#allocation2 + $0x108] sm:$0xff]
        %v4441 = vld [vmem:[#allocation2 + $0x110] sm:$0xff]
        %v4442 = vld [vmem:[#allocation2 + $0x118] sm:$0xff]
        %v4443 = vld [vmem:[#allocation2 + $0x120] sm:$0xff]
        %v4444 = vld [vmem:[#allocation2 + $0x128] sm:$0xff]
        %v4445 = vld [vmem:[#allocation2 + $0x130] sm:$0xff]
        %v4446 = vld [vmem:[#allocation2 + $0x138] sm:$0xff]
        %v4447 = vld [vmem:[#allocation2 + $0x140] sm:$0xff]
        %v4448 = vld [vmem:[#allocation2 + $0x148] sm:$0xff]
        %v4449 = vld [vmem:[#allocation2 + $0x150] sm:$0xff]
        %v4450 = vld [vmem:[#allocation2 + $0x158] sm:$0xff]
        %v4451 = vld [vmem:[#allocation2 + $0x160] sm:$0xff]
        %v4452 = vld [vmem:[#allocation2 + $0x168] sm:$0xff]
        %v4453 = vld [vmem:[#allocation2 + $0x170] sm:$0xff]
        %v4454 = vld [vmem:[#allocation2 + $0x178] sm:$0xff]
        %v4455 = vld [vmem:[#allocation2 + $0x180] sm:$0xff]
        %v4456 = vld [vmem:[#allocation2 + $0x188] sm:$0xff]
        %v4457 = vld [vmem:[#allocation2 + $0x190] sm:$0xff]
        %v4458 = vld [vmem:[#allocation2 + $0x198] sm:$0xff]
        %v4459 = vld [vmem:[#allocation2 + $0x1a0] sm:$0xff]
        %v4460 = vld [vmem:[#allocation2 + $0x1a8] sm:$0xff]
        %s4461 = scalar_lea.vmem [#allocation6], 384
        %v4462 = vld [vmem:[%s4461] sm:$0xf]
        %v4463 = vld [vmem:[%s4461 + $0x4] sm:$0xf]
        %v4464 = vld [vmem:[%s4461 + $0x8] sm:$0xf]
        %v4465 = vld [vmem:[%s4461 + $0xc] sm:$0xf]
        %v4466 = vld [vmem:[%s4461 + $0x10] sm:$0xf]
        %v4467 = vld [vmem:[%s4461 + $0x14] sm:$0xf]
        %v4468 = vld [vmem:[%s4461 + $0x18] sm:$0xf]
        %v4469 = vld [vmem:[%s4461 + $0x1c] sm:$0xf]
        %v4470 = vld [vmem:[%s4461 + $0x20] sm:$0xf]
        %v4471 = vld [vmem:[%s4461 + $0x24] sm:$0xf]
        %v4472 = vld [vmem:[%s4461 + $0x28] sm:$0xf]
        %v4473 = vld [vmem:[%s4461 + $0x2c] sm:$0xf]
        %v4474 = vld [vmem:[%s4461 + $0x30] sm:$0xf]
        %v4475 = vld [vmem:[%s4461 + $0x34] sm:$0xf]
        %v4476 = vld [vmem:[%s4461 + $0x38] sm:$0xf]
        %v4477 = vld [vmem:[%s4461 + $0x3c] sm:$0xf]
        %v4478 = vld [vmem:[%s4461 + $0x40] sm:$0xf]
        %v4479 = vld [vmem:[%s4461 + $0x44] sm:$0xf]
        %v4480 = vld [vmem:[%s4461 + $0x48] sm:$0xf]
        %v4481 = vld [vmem:[%s4461 + $0x4c] sm:$0xf]
        %v4482 = vld [vmem:[%s4461 + $0x50] sm:$0xf]
        %v4483 = vld [vmem:[%s4461 + $0x54] sm:$0xf]
        %v4484 = vld [vmem:[%s4461 + $0x58] sm:$0xf]
        %v4485 = vld [vmem:[%s4461 + $0x5c] sm:$0xf]
        %v4486 = vld [vmem:[%s4461 + $0x60] sm:$0xf]
        %v4487 = vld [vmem:[%s4461 + $0x64] sm:$0xf]
        %v4488 = vld [vmem:[%s4461 + $0x68] sm:$0xf]
        %v4489 = vld [vmem:[%s4461 + $0x6c] sm:$0xf]
        %v4490 = vld [vmem:[%s4461 + $0x70] sm:$0xf]
        %v4491 = vld [vmem:[%s4461 + $0x74] sm:$0xf]
        %v4492 = vld [vmem:[%s4461 + $0x78] sm:$0xf]
        %v4493 = vld [vmem:[%s4461 + $0x7c] sm:$0xf]
        %v4494 = vld [vmem:[%s4461 + $0x80] sm:$0xf]
        %v4495 = vld [vmem:[%s4461 + $0x84] sm:$0xf]
        %v4496 = vld [vmem:[%s4461 + $0x88] sm:$0xf]
        %v4497 = vld [vmem:[%s4461 + $0x8c] sm:$0xf]
        %v4498 = vld [vmem:[%s4461 + $0x90] sm:$0xf]
        %v4499 = vld [vmem:[%s4461 + $0x94] sm:$0xf]
        %v4500 = vld [vmem:[%s4461 + $0x98] sm:$0xf]
        %v4501 = vld [vmem:[%s4461 + $0x9c] sm:$0xf]
        %v4502 = vld [vmem:[%s4461 + $0xa0] sm:$0xf]
        %v4503 = vld [vmem:[%s4461 + $0xa4] sm:$0xf]
        %v4504 = vld [vmem:[%s4461 + $0xa8] sm:$0xf]
        %v4505 = vld [vmem:[%s4461 + $0xac] sm:$0xf]
        %v4506 = vld [vmem:[%s4461 + $0xb0] sm:$0xf]
        %v4507 = vld [vmem:[%s4461 + $0xb4] sm:$0xf]
        %v4508 = vld [vmem:[%s4461 + $0xb8] sm:$0xf]
        %v4509 = vld [vmem:[%s4461 + $0xbc] sm:$0xf]
        %v4558 = vunpack.c.l.b16 %v4462
        %v4559 = vunpack.c.l.b16 %v4463
        %v4560 = vunpack.c.l.b16 %v4464
        %v4561 = vunpack.c.l.b16 %v4465
        %v4562 = vunpack.c.l.b16 %v4466
        %v4563 = vunpack.c.l.b16 %v4467
        %v4564 = vunpack.c.l.b16 %v4468
        %v4565 = vunpack.c.l.b16 %v4469
        %v4566 = vunpack.c.l.b16 %v4470
        %v4567 = vunpack.c.l.b16 %v4471
        %v4568 = vunpack.c.l.b16 %v4472
        %v4569 = vunpack.c.l.b16 %v4473
        %v4570 = vunpack.c.l.b16 %v4474
        %v4571 = vunpack.c.l.b16 %v4475
        %v4572 = vunpack.c.l.b16 %v4476
        %v4573 = vunpack.c.l.b16 %v4477
        %v4574 = vunpack.c.l.b16 %v4478
        %v4575 = vunpack.c.l.b16 %v4479
        %v4576 = vunpack.c.l.b16 %v4480
        %v4577 = vunpack.c.l.b16 %v4481
        %v4578 = vunpack.c.l.b16 %v4482
        %v4579 = vunpack.c.l.b16 %v4483
        %v4580 = vunpack.c.l.b16 %v4484
        %v4581 = vunpack.c.l.b16 %v4485
        %v4582 = vunpack.c.l.b16 %v4486
        %v4583 = vunpack.c.l.b16 %v4487
        %v4584 = vunpack.c.l.b16 %v4488
        %v4585 = vunpack.c.l.b16 %v4489
        %v4586 = vunpack.c.l.b16 %v4490
        %v4587 = vunpack.c.l.b16 %v4491
        %v4588 = vunpack.c.l.b16 %v4492
        %v4589 = vunpack.c.l.b16 %v4493
        %v4590 = vunpack.c.l.b16 %v4494
        %v4591 = vunpack.c.l.b16 %v4495
        %v4592 = vunpack.c.l.b16 %v4496
        %v4593 = vunpack.c.l.b16 %v4497
        %v4594 = vunpack.c.l.b16 %v4498
        %v4595 = vunpack.c.l.b16 %v4499
        %v4596 = vunpack.c.l.b16 %v4500
        %v4597 = vunpack.c.l.b16 %v4501
        %v4598 = vunpack.c.l.b16 %v4502
        %v4599 = vunpack.c.l.b16 %v4503
        %v4600 = vunpack.c.l.b16 %v4504
        %v4601 = vunpack.c.l.b16 %v4505
        %v4602 = vunpack.c.l.b16 %v4506
        %v4603 = vunpack.c.l.b16 %v4507
        %v4604 = vunpack.c.l.b16 %v4508
        %v4605 = vunpack.c.l.b16 %v4509
        %v4606 = vpack.c.b16 %v4559, %v4558
        %v4607 = vpack.c.b16 %v4561, %v4560
        %v4608 = vpack.c.b16 %v4563, %v4562
        %v4609 = vpack.c.b16 %v4565, %v4564
        %v4610 = vpack.c.b16 %v4567, %v4566
        %v4611 = vpack.c.b16 %v4569, %v4568
        %v4612 = vpack.c.b16 %v4571, %v4570
        %v4613 = vpack.c.b16 %v4573, %v4572
        %v4614 = vpack.c.b16 %v4575, %v4574
        %v4615 = vpack.c.b16 %v4577, %v4576
        %v4616 = vpack.c.b16 %v4579, %v4578
        %v4617 = vpack.c.b16 %v4581, %v4580
        %v4618 = vpack.c.b16 %v4583, %v4582
        %v4619 = vpack.c.b16 %v4585, %v4584
        %v4620 = vpack.c.b16 %v4587, %v4586
        %v4621 = vpack.c.b16 %v4589, %v4588
        %v4622 = vpack.c.b16 %v4591, %v4590
        %v4623 = vpack.c.b16 %v4593, %v4592
        %v4624 = vpack.c.b16 %v4595, %v4594
        %v4625 = vpack.c.b16 %v4597, %v4596
        %v4626 = vpack.c.b16 %v4599, %v4598
        %v4627 = vpack.c.b16 %v4601, %v4600
        %v4628 = vpack.c.b16 %v4603, %v4602
        %v4629 = vpack.c.b16 %v4605, %v4604
        %4654 = vmatprep.subr.bf16.mxu0 0
        %4655 = vmatpush1.bf16.msra.mxu0 %v4606
        %4656 = vmatprep.subr.bf16.mxu0 0
        %4657 = vmatpush1.bf16.msra.mxu0 %v4607
        %4658 = vmatprep.subr.bf16.mxu0 0
        %4659 = vmatpush1.bf16.msra.mxu0 %v4608
        %4660 = vmatprep.subr.bf16.mxu0 0
        %4661 = vmatpush1.bf16.msra.mxu0 %v4609
        %4662 = vmatprep.subr.bf16.mxu0 0
        %4663 = vmatpush1.bf16.msra.mxu0 %v4610
        %4664 = vmatprep.subr.bf16.mxu0 0
        %4665 = vmatpush1.bf16.msra.mxu0 %v4611
        %4666 = vmatprep.subr.bf16.mxu0 0
        %4667 = vmatpush1.bf16.msra.mxu0 %v4612
        %4668 = vmatprep.subr.bf16.mxu0 0
        %4669 = vmatpush1.bf16.msra.mxu0 %v4613
        %4670 = vmatprep.subr.bf16.mxu0 0
        %4671 = vmatpush1.bf16.msra.mxu0 %v4614
        %4672 = vmatprep.subr.bf16.mxu0 0
        %4673 = vmatpush1.bf16.msra.mxu0 %v4615
        %4674 = vmatprep.subr.bf16.mxu0 0
        %4675 = vmatpush1.bf16.msra.mxu0 %v4616
        %4676 = vmatprep.subr.bf16.mxu0 0
        %4677 = vmatpush1.bf16.msra.mxu0 %v4617
        %4678 = vmatprep.subr.bf16.mxu0 0
        %4679 = vmatpush1.bf16.msra.mxu0 %v4618
        %4680 = vmatprep.subr.bf16.mxu0 0
        %4681 = vmatpush1.bf16.msra.mxu0 %v4619
        %4682 = vmatprep.subr.bf16.mxu0 0
        %4683 = vmatpush1.bf16.msra.mxu0 %v4620
        %4684 = vmatprep.subr.bf16.mxu0 0
        %4685 = vmatpush1.bf16.msra.mxu0 %v4621
        %4686 = vmatprep.mubr.bf16.mxu0 %v4414
        %4687 = vmatmul.mubr.bf16.gmra.mrb[0].mxu0 %v4413
        %v4688 = vpop.f32.mrb[0].mxu0
        %v4689 = vadd.f32 0.0, %v4688
        %v4690 = vpop.f32.mrb[0].mxu0
        %v4691 = vpop.f32.mrb[0].mxu0
        %v4692 = vadd.f32 0.0, %v4691
        %v4693 = vpop.f32.mrb[0].mxu0
        %4694 = vmatprep.mubr.bf16.mxu0 %v4417
        %4695 = vmatmul.mubr.bf16.gmra.mrb[0].mxu0 %v4416
        %v4696 = vpop.f32.mrb[0].mxu0
        %v4697 = vadd.f32 0.0, %v4696
        %v4698 = vpop.f32.mrb[0].mxu0
        %v4699 = vpop.f32.mrb[0].mxu0
        %v4700 = vadd.f32 0.0, %v4699
        %v4701 = vpop.f32.mrb[0].mxu0
        %4702 = vmatprep.mubr.bf16.mxu0 %v4420
        %4703 = vmatmul.mubr.bf16.gmra.mrb[0].mxu0 %v4419
        %v4704 = vpop.f32.mrb[0].mxu0
        %v4705 = vadd.f32 0.0, %v4704
        %v4706 = vpop.f32.mrb[0].mxu0
        %v4707 = vpop.f32.mrb[0].mxu0
        %v4708 = vadd.f32 0.0, %v4707
        %v4709 = vpop.f32.mrb[0].mxu0
        %4710 = vmatprep.mubr.bf16.mxu0 %v4423
        %4711 = vmatmul.mubr.bf16.gmra.mrb[0].mxu0 %v4422
        %v4712 = vpop.f32.mrb[0].mxu0
        %v4713 = vadd.f32 0.0, %v4712
        %v4714 = vpop.f32.mrb[0].mxu0
        %v4715 = vpop.f32.mrb[0].mxu0
        %v4716 = vadd.f32 0.0, %v4715
        %v4717 = vpop.f32.mrb[0].mxu0
        %4718 = vmatprep.mubr.bf16.mxu0 %v4426
        %4719 = vmatmul.mubr.bf16.gmra.mrb[0].mxu0 %v4425
        %v4720 = vpop.f32.mrb[0].mxu0
        %v4721 = vadd.f32 0.0, %v4720
        %v4722 = vpop.f32.mrb[0].mxu0
        %v4723 = vpop.f32.mrb[0].mxu0
        %v4724 = vadd.f32 0.0, %v4723
        %v4725 = vpop.f32.mrb[0].mxu0
        %4726 = vmatprep.mubr.bf16.mxu0 %v4429
        %4727 = vmatmul.mubr.bf16.gmra.mrb[0].mxu0 %v4428
        %v4728 = vpop.f32.mrb[0].mxu0
        %v4729 = vadd.f32 0.0, %v4728
        %v4730 = vpop.f32.mrb[0].mxu0
        %v4731 = vpop.f32.mrb[0].mxu0
        %v4732 = vadd.f32 0.0, %v4731
        %v4733 = vpop.f32.mrb[0].mxu0
        %4734 = vmatprep.mubr.bf16.mxu0 %v4432
        %4735 = vmatmul.mubr.bf16.gmra.mrb[0].mxu0 %v4431
        %v4736 = vpop.f32.mrb[0].mxu0
        %v4737 = vadd.f32 0.0, %v4736
        %v4738 = vpop.f32.mrb[0].mxu0
        %v4739 = vpop.f32.mrb[0].mxu0
        %v4740 = vadd.f32 0.0, %v4739
        %v4741 = vpop.f32.mrb[0].mxu0
        %4742 = vmatprep.mubr.bf16.mxu0 %v4435
        %4743 = vmatmul.mubr.bf16.gmra.mrb[0].mxu0 %v4434
        %v4744 = vpop.f32.mrb[0].mxu0
        %v4745 = vadd.f32 0.0, %v4744
        %v4746 = vpop.f32.mrb[0].mxu0
        %v4747 = vpop.f32.mrb[0].mxu0
        %v4748 = vadd.f32 0.0, %v4747
        %v4749 = vpop.f32.mrb[0].mxu0
        %4750 = vmatprep.mubr.bf16.mxu0 %v4438
        %4751 = vmatmul.mubr.bf16.gmra.mrb[0].mxu0 %v4437
        %v4752 = vpop.f32.mrb[0].mxu0
        %v4753 = vadd.f32 0.0, %v4752
        %v4754 = vpop.f32.mrb[0].mxu0
        %v4755 = vpop.f32.mrb[0].mxu0
        %v4756 = vadd.f32 0.0, %v4755
        %v4757 = vpop.f32.mrb[0].mxu0
        %4758 = vmatprep.mubr.bf16.mxu0 %v4441
        %4759 = vmatmul.mubr.bf16.gmra.mrb[0].mxu0 %v4440
        %v4760 = vpop.f32.mrb[0].mxu0
        %v4761 = vadd.f32 0.0, %v4760
        %v4762 = vpop.f32.mrb[0].mxu0
        %v4763 = vpop.f32.mrb[0].mxu0
        %v4764 = vadd.f32 0.0, %v4763
        %v4765 = vpop.f32.mrb[0].mxu0
        %4766 = vmatprep.mubr.bf16.mxu0 %v4444
        %4767 = vmatmul.mubr.bf16.gmra.mrb[0].mxu0 %v4443
        %v4768 = vpop.f32.mrb[0].mxu0
        %v4769 = vadd.f32 0.0, %v4768
        %v4770 = vpop.f32.mrb[0].mxu0
        %v4771 = vpop.f32.mrb[0].mxu0
        %v4772 = vadd.f32 0.0, %v4771
        %v4773 = vpop.f32.mrb[0].mxu0
        %4774 = vmatprep.mubr.bf16.mxu0 %v4447
        %4775 = vmatmul.mubr.bf16.gmra.mrb[0].mxu0 %v4446
        %v4776 = vpop.f32.mrb[0].mxu0
        %v4777 = vadd.f32 0.0, %v4776
        %v4778 = vpop.f32.mrb[0].mxu0
        %v4779 = vpop.f32.mrb[0].mxu0
        %v4780 = vadd.f32 0.0, %v4779
        %v4781 = vpop.f32.mrb[0].mxu0
        %4782 = vmatprep.mubr.bf16.mxu0 %v4450
        %4783 = vmatmul.mubr.bf16.gmra.mrb[0].mxu0 %v4449
        %v4784 = vpop.f32.mrb[0].mxu0
        %v4785 = vadd.f32 0.0, %v4784
        %v4786 = vpop.f32.mrb[0].mxu0
        %v4787 = vpop.f32.mrb[0].mxu0
        %v4788 = vadd.f32 0.0, %v4787
        %v4789 = vpop.f32.mrb[0].mxu0
        %4790 = vmatprep.mubr.bf16.mxu0 %v4453
        %4791 = vmatmul.mubr.bf16.gmra.mrb[0].mxu0 %v4452
        %v4792 = vpop.f32.mrb[0].mxu0
        %v4793 = vadd.f32 0.0, %v4792
        %v4794 = vpop.f32.mrb[0].mxu0
        %v4795 = vpop.f32.mrb[0].mxu0
        %v4796 = vadd.f32 0.0, %v4795
        %v4797 = vpop.f32.mrb[0].mxu0
        %4798 = vmatprep.mubr.bf16.mxu0 %v4456
        %4799 = vmatmul.mubr.bf16.gmra.mrb[0].mxu0 %v4455
        %v4800 = vpop.f32.mrb[0].mxu0
        %v4801 = vadd.f32 0.0, %v4800
        %v4802 = vpop.f32.mrb[0].mxu0
        %v4803 = vpop.f32.mrb[0].mxu0
        %v4804 = vadd.f32 0.0, %v4803
        %v4805 = vpop.f32.mrb[0].mxu0
        %4806 = vmatprep.mubr.bf16.mxu0 %v4459
        %4807 = vmatmul.mubr.bf16.gmra.mrb[0].mxu0 %v4458
        %v4808 = vpop.f32.mrb[0].mxu0
        %v4809 = vadd.f32 0.0, %v4808
        %v4810 = vpop.f32.mrb[0].mxu0
        %v4811 = vpop.f32.mrb[0].mxu0
        %v4812 = vadd.f32 0.0, %v4811
        %v4813 = vpop.f32.mrb[0].mxu0
        %4814 = vdwg.mxu0
        %4815 = vmatprep.subr.bf16.mxu0 0
        %4816 = vmatpush1.bf16.msra.mxu0 %v4622
        %4817 = vmatprep.subr.bf16.mxu0 0
        %4818 = vmatpush1.bf16.msra.mxu0 %v4623
        %4819 = vmatprep.subr.bf16.mxu0 0
        %4820 = vmatpush1.bf16.msra.mxu0 %v4624
        %4821 = vmatprep.subr.bf16.mxu0 0
        %4822 = vmatpush1.bf16.msra.mxu0 %v4625
        %4823 = vmatprep.subr.bf16.mxu0 0
        %4824 = vmatpush1.bf16.msra.mxu0 %v4626
        %4825 = vmatprep.subr.bf16.mxu0 0
        %4826 = vmatpush1.bf16.msra.mxu0 %v4627
        %4827 = vmatprep.subr.bf16.mxu0 0
        %4828 = vmatpush1.bf16.msra.mxu0 %v4628
        %4829 = vmatprep.subr.bf16.mxu0 0
        %4830 = vmatpush1.bf16.msra.mxu0 %v4629
        %4831 = vmatprep.subr.bf16.mxu0 0
        %4832 = vmatpush1.bf16.msra.mxu0 0
        %4833 = vmatprep.subr.bf16.mxu0 0
        %4834 = vmatpush1.bf16.msra.mxu0 0
        %4835 = vmatprep.subr.bf16.mxu0 0
        %4836 = vmatpush1.bf16.msra.mxu0 0
        %4837 = vmatprep.subr.bf16.mxu0 0
        %4838 = vmatpush1.bf16.msra.mxu0 0
        %4839 = vmatprep.subr.bf16.mxu0 0
        %4840 = vmatpush1.bf16.msra.mxu0 0
        %4841 = vmatprep.subr.bf16.mxu0 0
        %4842 = vmatpush1.bf16.msra.mxu0 0
        %4843 = vmatprep.subr.bf16.mxu0 0
        %4844 = vmatpush1.bf16.msra.mxu0 0
        %4845 = vmatprep.subr.bf16.mxu0 0
        %4846 = vmatpush1.bf16.msra.mxu0 0
        %4847 = vmatprep.mubr.bf16.mxu0 0
        %4848 = vmatmul.mubr.bf16.gmra.mrb[0].mxu0 %v4415
        %v4849 = vpop.f32.mrb[0].mxu0
        %v4850 = vadd.f32 %v4689, %v4849
        %v4851 = vpop.f32.mrb[0].mxu0
        %v4852 = vpop.f32.mrb[0].mxu0
        %v4853 = vadd.f32 %v4692, %v4852
        %v4854 = vpop.f32.mrb[0].mxu0
        %4855 = vmatprep.mubr.bf16.mxu0 0
        %4856 = vmatmul.mubr.bf16.gmra.mrb[0].mxu0 %v4418
        %v4857 = vpop.f32.mrb[0].mxu0
        %v4858 = vadd.f32 %v4697, %v4857
        %v4859 = vpop.f32.mrb[0].mxu0
        %v4860 = vpop.f32.mrb[0].mxu0
        %v4861 = vadd.f32 %v4700, %v4860
        %v4862 = vpop.f32.mrb[0].mxu0
        %4863 = vmatprep.mubr.bf16.mxu0 0
        %4864 = vmatmul.mubr.bf16.gmra.mrb[0].mxu0 %v4421
        %v4865 = vpop.f32.mrb[0].mxu0
        %v4866 = vadd.f32 %v4705, %v4865
        %v4867 = vpop.f32.mrb[0].mxu0
        %v4868 = vpop.f32.mrb[0].mxu0
        %v4869 = vadd.f32 %v4708, %v4868
        %v4870 = vpop.f32.mrb[0].mxu0
        %4871 = vmatprep.mubr.bf16.mxu0 0
        %4872 = vmatmul.mubr.bf16.gmra.mrb[0].mxu0 %v4424
        %v4873 = vpop.f32.mrb[0].mxu0
        %v4874 = vadd.f32 %v4713, %v4873
        %v4875 = vpop.f32.mrb[0].mxu0
        %v4876 = vpop.f32.mrb[0].mxu0
        %v4877 = vadd.f32 %v4716, %v4876
        %v4878 = vpop.f32.mrb[0].mxu0
        %4879 = vmatprep.mubr.bf16.mxu0 0
        %4880 = vmatmul.mubr.bf16.gmra.mrb[0].mxu0 %v4427
        %v4881 = vpop.f32.mrb[0].mxu0
        %v4882 = vadd.f32 %v4721, %v4881
        %v4883 = vpop.f32.mrb[0].mxu0
        %v4884 = vpop.f32.mrb[0].mxu0
        %v4885 = vadd.f32 %v4724, %v4884
        %v4886 = vpop.f32.mrb[0].mxu0
        %4887 = vmatprep.mubr.bf16.mxu0 0
        %4888 = vmatmul.mubr.bf16.gmra.mrb[0].mxu0 %v4430
        %v4889 = vpop.f32.mrb[0].mxu0
        %v4890 = vadd.f32 %v4729, %v4889
        %v4891 = vpop.f32.mrb[0].mxu0
        %v4892 = vpop.f32.mrb[0].mxu0
        %v4893 = vadd.f32 %v4732, %v4892
        %v4894 = vpop.f32.mrb[0].mxu0
        %4895 = vmatprep.mubr.bf16.mxu0 0
        %4896 = vmatmul.mubr.bf16.gmra.mrb[0].mxu0 %v4433
        %v4897 = vpop.f32.mrb[0].mxu0
        %v4898 = vadd.f32 %v4737, %v4897
        %v4899 = vpop.f32.mrb[0].mxu0
        %v4900 = vpop.f32.mrb[0].mxu0
        %v4901 = vadd.f32 %v4740, %v4900
        %v4902 = vpop.f32.mrb[0].mxu0
        %4903 = vmatprep.mubr.bf16.mxu0 0
        %4904 = vmatmul.mubr.bf16.gmra.mrb[0].mxu0 %v4436
        %v4905 = vpop.f32.mrb[0].mxu0
        %v4906 = vadd.f32 %v4745, %v4905
        %v4907 = vpop.f32.mrb[0].mxu0
        %v4908 = vpop.f32.mrb[0].mxu0
        %v4909 = vadd.f32 %v4748, %v4908
        %v4910 = vpop.f32.mrb[0].mxu0
        %4911 = vmatprep.mubr.bf16.mxu0 0
        %4912 = vmatmul.mubr.bf16.gmra.mrb[0].mxu0 %v4439
        %v4913 = vpop.f32.mrb[0].mxu0
        %v4914 = vadd.f32 %v4753, %v4913
        %v4915 = vpop.f32.mrb[0].mxu0
        %v4916 = vpop.f32.mrb[0].mxu0
        %v4917 = vadd.f32 %v4756, %v4916
        %v4918 = vpop.f32.mrb[0].mxu0
        %4919 = vmatprep.mubr.bf16.mxu0 0
        %4920 = vmatmul.mubr.bf16.gmra.mrb[0].mxu0 %v4442
        %v4921 = vpop.f32.mrb[0].mxu0
        %v4922 = vadd.f32 %v4761, %v4921
        %v4923 = vpop.f32.mrb[0].mxu0
        %v4924 = vpop.f32.mrb[0].mxu0
        %v4925 = vadd.f32 %v4764, %v4924
        %v4926 = vpop.f32.mrb[0].mxu0
        %4927 = vmatprep.mubr.bf16.mxu0 0
        %4928 = vmatmul.mubr.bf16.gmra.mrb[0].mxu0 %v4445
        %v4929 = vpop.f32.mrb[0].mxu0
        %v4930 = vadd.f32 %v4769, %v4929
        %v4931 = vpop.f32.mrb[0].mxu0
        %v4932 = vpop.f32.mrb[0].mxu0
        %v4933 = vadd.f32 %v4772, %v4932
        %v4934 = vpop.f32.mrb[0].mxu0
        %4935 = vmatprep.mubr.bf16.mxu0 0
        %4936 = vmatmul.mubr.bf16.gmra.mrb[0].mxu0 %v4448
        %v4937 = vpop.f32.mrb[0].mxu0
        %v4938 = vadd.f32 %v4777, %v4937
        %v4939 = vpop.f32.mrb[0].mxu0
        %v4940 = vpop.f32.mrb[0].mxu0
        %v4941 = vadd.f32 %v4780, %v4940
        %v4942 = vpop.f32.mrb[0].mxu0
        %4943 = vmatprep.mubr.bf16.mxu0 0
        %4944 = vmatmul.mubr.bf16.gmra.mrb[0].mxu0 %v4451
        %v4945 = vpop.f32.mrb[0].mxu0
        %v4946 = vadd.f32 %v4785, %v4945
        %v4947 = vpop.f32.mrb[0].mxu0
        %v4948 = vpop.f32.mrb[0].mxu0
        %v4949 = vadd.f32 %v4788, %v4948
        %v4950 = vpop.f32.mrb[0].mxu0
        %4951 = vmatprep.mubr.bf16.mxu0 0
        %4952 = vmatmul.mubr.bf16.gmra.mrb[0].mxu0 %v4454
        %v4953 = vpop.f32.mrb[0].mxu0
        %v4954 = vadd.f32 %v4793, %v4953
        %v4955 = vpop.f32.mrb[0].mxu0
        %v4956 = vpop.f32.mrb[0].mxu0
        %v4957 = vadd.f32 %v4796, %v4956
        %v4958 = vpop.f32.mrb[0].mxu0
        %4959 = vmatprep.mubr.bf16.mxu0 0
        %4960 = vmatmul.mubr.bf16.gmra.mrb[0].mxu0 %v4457
        %v4961 = vpop.f32.mrb[0].mxu0
        %v4962 = vadd.f32 %v4801, %v4961
        %v4963 = vpop.f32.mrb[0].mxu0
        %v4964 = vpop.f32.mrb[0].mxu0
        %v4965 = vadd.f32 %v4804, %v4964
        %v4966 = vpop.f32.mrb[0].mxu0
        %4967 = vmatprep.mubr.bf16.mxu0 0
        %4968 = vmatmul.mubr.bf16.gmra.mrb[0].mxu0 %v4460
        %v4969 = vpop.f32.mrb[0].mxu0
        %v4970 = vadd.f32 %v4809, %v4969
        %v4971 = vpop.f32.mrb[0].mxu0
        %v4972 = vpop.f32.mrb[0].mxu0
        %v4973 = vadd.f32 %v4812, %v4972
        %v4974 = vpop.f32.mrb[0].mxu0
        %4975 = vdwg.mxu0
        %v4976 = vadd.f32 %v4287, %v4850
        %v4977 = vadd.f32 %v4290, %v4853
        %v4978 = vadd.f32 %v4295, %v4858
        %v4979 = vadd.f32 %v4298, %v4861
        %v4980 = vadd.f32 %v4303, %v4866
        %v4981 = vadd.f32 %v4306, %v4869
        %v4982 = vadd.f32 %v4311, %v4874
        %v4983 = vadd.f32 %v4314, %v4877
        %v4984 = vadd.f32 %v4319, %v4882
        %v4985 = vadd.f32 %v4322, %v4885
        %v4986 = vadd.f32 %v4327, %v4890
        %v4987 = vadd.f32 %v4330, %v4893
        %v4988 = vadd.f32 %v4335, %v4898
        %v4989 = vadd.f32 %v4338, %v4901
        %v4990 = vadd.f32 %v4343, %v4906
        %v4991 = vadd.f32 %v4346, %v4909
        %v4992 = vadd.f32 %v4351, %v4914
        %v4993 = vadd.f32 %v4354, %v4917
        %v4994 = vadd.f32 %v4359, %v4922
        %v4995 = vadd.f32 %v4362, %v4925
        %v4996 = vadd.f32 %v4367, %v4930
        %v4997 = vadd.f32 %v4370, %v4933
        %v4998 = vadd.f32 %v4375, %v4938
        %v4999 = vadd.f32 %v4378, %v4941
        %v5000 = vadd.f32 %v4383, %v4946
        %v5001 = vadd.f32 %v4386, %v4949
        %v5002 = vadd.f32 %v4391, %v4954
        %v5003 = vadd.f32 %v4394, %v4957
        %v5004 = vadd.f32 %v4399, %v4962
        %v5005 = vadd.f32 %v4402, %v4965
        %v5006 = vadd.f32 %v4407, %v4970
        %v5007 = vadd.f32 %v4410, %v4973
        %v5008 = vadd.f32 %v4976, %v4977
        %v5009 = vadd.f32 %v5008, %v4978
        %v5010 = vadd.f32 %v5009, %v4979
        %v5011 = vadd.f32 %v5010, %v4980
        %v5012 = vadd.f32 %v5011, %v4981
        %v5013 = vadd.f32 %v5012, %v4982
        %v5014 = vadd.f32 %v5013, %v4983
        %v5015 = vadd.f32 %v5014, %v4984
        %v5016 = vadd.f32 %v5015, %v4985
        %v5017 = vadd.f32 %v5016, %v4986
        %v5018 = vadd.f32 %v5017, %v4987
        %v5019 = vadd.f32 %v5018, %v4988
        %v5020 = vadd.f32 %v5019, %v4989
        %v5021 = vadd.f32 %v5020, %v4990
        %v5022 = vadd.f32 %v5021, %v4991
        %v5023 = vadd.f32 %v5022, %v4992
        %v5024 = vadd.f32 %v5023, %v4993
        %v5025 = vadd.f32 %v5024, %v4994
        %v5026 = vadd.f32 %v5025, %v4995
        %v5027 = vadd.f32 %v5026, %v4996
        %v5028 = vadd.f32 %v5027, %v4997
        %v5029 = vadd.f32 %v5028, %v4998
        %v5030 = vadd.f32 %v5029, %v4999
        %v5031 = vadd.f32 %v5030, %v5000
        %v5032 = vadd.f32 %v5031, %v5001
        %v5033 = vadd.f32 %v5032, %v5002
        %v5034 = vadd.f32 %v5033, %v5003
        %v5035 = vadd.f32 %v5034, %v5004
        %v5036 = vadd.f32 %v5035, %v5005
        %v5037 = vadd.f32 %v5036, %v5006
        %v5038 = vadd.f32 %v5037, %v5007
        %v5039 = vrot.slane %v5038, 4
        %v5040 = vadd.f32 %v5038, %v5039
        %v5041 = vrot.slane %v5040, 2
        %v5042 = vadd.f32 %v5040, %v5041
        %v5043 = vrot.slane %v5042, 1
        %v5044 = vadd.f32 %v5042, %v5043
        %v5045 = vmul.f32 %v5044, 0.00390625
        %v5046 = vmul.f32 %v4976, %v4976
        %v5047 = vmul.f32 %v4977, %v4977
        %v5048 = vmul.f32 %v4978, %v4978
        %v5049 = vmul.f32 %v4979, %v4979
        %v5050 = vmul.f32 %v4980, %v4980
        %v5051 = vmul.f32 %v4981, %v4981
        %v5052 = vmul.f32 %v4982, %v4982
        %v5053 = vmul.f32 %v4983, %v4983
        %v5054 = vmul.f32 %v4984, %v4984
        %v5055 = vmul.f32 %v4985, %v4985
        %v5056 = vmul.f32 %v4986, %v4986
        %v5057 = vmul.f32 %v4987, %v4987
        %v5058 = vmul.f32 %v4988, %v4988
        %v5059 = vmul.f32 %v4989, %v4989
        %v5060 = vmul.f32 %v4990, %v4990
        %v5061 = vmul.f32 %v4991, %v4991
        %v5062 = vmul.f32 %v4992, %v4992
        %v5063 = vmul.f32 %v4993, %v4993
        %v5064 = vmul.f32 %v4994, %v4994
        %v5065 = vmul.f32 %v4995, %v4995
        %v5066 = vmul.f32 %v4996, %v4996
        %v5067 = vmul.f32 %v4997, %v4997
        %v5068 = vmul.f32 %v4998, %v4998
        %v5069 = vmul.f32 %v4999, %v4999
        %v5070 = vmul.f32 %v5000, %v5000
        %v5071 = vmul.f32 %v5001, %v5001
        %v5072 = vmul.f32 %v5002, %v5002
        %v5073 = vmul.f32 %v5003, %v5003
        %v5074 = vmul.f32 %v5004, %v5004
        %v5075 = vmul.f32 %v5005, %v5005
        %v5076 = vmul.f32 %v5006, %v5006
        %v5077 = vmul.f32 %v5007, %v5007
        %v5078 = vadd.f32 %v5046, %v5047
        %v5079 = vadd.f32 %v5078, %v5048
        %v5080 = vadd.f32 %v5079, %v5049
        %v5081 = vadd.f32 %v5080, %v5050
        %v5082 = vadd.f32 %v5081, %v5051
        %v5083 = vadd.f32 %v5082, %v5052
        %v5084 = vadd.f32 %v5083, %v5053
        %v5085 = vadd.f32 %v5084, %v5054
        %v5086 = vadd.f32 %v5085, %v5055
        %v5087 = vadd.f32 %v5086, %v5056
        %v5088 = vadd.f32 %v5087, %v5057
        %v5089 = vadd.f32 %v5088, %v5058
        %v5090 = vadd.f32 %v5089, %v5059
        %v5091 = vadd.f32 %v5090, %v5060
        %v5092 = vadd.f32 %v5091, %v5061
        %v5093 = vadd.f32 %v5092, %v5062
        %v5094 = vadd.f32 %v5093, %v5063
        %v5095 = vadd.f32 %v5094, %v5064
        %v5096 = vadd.f32 %v5095, %v5065
        %v5097 = vadd.f32 %v5096, %v5066
        %v5098 = vadd.f32 %v5097, %v5067
        %v5099 = vadd.f32 %v5098, %v5068
        %v5100 = vadd.f32 %v5099, %v5069
        %v5101 = vadd.f32 %v5100, %v5070
        %v5102 = vadd.f32 %v5101, %v5071
        %v5103 = vadd.f32 %v5102, %v5072
        %v5104 = vadd.f32 %v5103, %v5073
        %v5105 = vadd.f32 %v5104, %v5074
        %v5106 = vadd.f32 %v5105, %v5075
        %v5107 = vadd.f32 %v5106, %v5076
        %v5108 = vadd.f32 %v5107, %v5077
        %v5109 = vrot.slane %v5108, 4
        %v5110 = vadd.f32 %v5108, %v5109
        %v5111 = vrot.slane %v5110, 2
        %v5112 = vadd.f32 %v5110, %v5111
        %v5113 = vrot.slane %v5112, 1
        %v5114 = vadd.f32 %v5112, %v5113
        %v5115 = vmul.f32 %v5114, 0.00390625
        %v5116 = vmul.f32 %v5045, %v5045
        %v5117 = vsub.f32 %v5115, %v5116
        %v5118 = vsub.f32 %v4976, %v5045
        %v5119 = vsub.f32 %v4977, %v5045
        %v5120 = vsub.f32 %v4978, %v5045
        %v5121 = vsub.f32 %v4979, %v5045
        %v5122 = vsub.f32 %v4980, %v5045
        %v5123 = vsub.f32 %v4981, %v5045
        %v5124 = vsub.f32 %v4982, %v5045
        %v5125 = vsub.f32 %v4983, %v5045
        %v5126 = vsub.f32 %v4984, %v5045
        %v5127 = vsub.f32 %v4985, %v5045
        %v5128 = vsub.f32 %v4986, %v5045
        %v5129 = vsub.f32 %v4987, %v5045
        %v5130 = vsub.f32 %v4988, %v5045
        %v5131 = vsub.f32 %v4989, %v5045
        %v5132 = vsub.f32 %v4990, %v5045
        %v5133 = vsub.f32 %v4991, %v5045
        %v5134 = vsub.f32 %v4992, %v5045
        %v5135 = vsub.f32 %v4993, %v5045
        %v5136 = vsub.f32 %v4994, %v5045
        %v5137 = vsub.f32 %v4995, %v5045
        %v5138 = vsub.f32 %v4996, %v5045
        %v5139 = vsub.f32 %v4997, %v5045
        %v5140 = vsub.f32 %v4998, %v5045
        %v5141 = vsub.f32 %v4999, %v5045
        %v5142 = vsub.f32 %v5000, %v5045
        %v5143 = vsub.f32 %v5001, %v5045
        %v5144 = vsub.f32 %v5002, %v5045
        %v5145 = vsub.f32 %v5003, %v5045
        %v5146 = vsub.f32 %v5004, %v5045
        %v5147 = vsub.f32 %v5005, %v5045
        %v5148 = vsub.f32 %v5006, %v5045
        %v5149 = vsub.f32 %v5007, %v5045
        %v5150 = vadd.f32 %v5117, 1e-05
        %v5151 = vrsqrt.pop %v5150
        %v5152 = vmul.f32 %v5118, %v5151
        %v5153 = vmul.f32 %v5119, %v5151
        %v5154 = vmul.f32 %v5120, %v5151
        %v5155 = vmul.f32 %v5121, %v5151
        %v5156 = vmul.f32 %v5122, %v5151
        %v5157 = vmul.f32 %v5123, %v5151
        %v5158 = vmul.f32 %v5124, %v5151
        %v5159 = vmul.f32 %v5125, %v5151
        %v5160 = vmul.f32 %v5126, %v5151
        %v5161 = vmul.f32 %v5127, %v5151
        %v5162 = vmul.f32 %v5128, %v5151
        %v5163 = vmul.f32 %v5129, %v5151
        %v5164 = vmul.f32 %v5130, %v5151
        %v5165 = vmul.f32 %v5131, %v5151
        %v5166 = vmul.f32 %v5132, %v5151
        %v5167 = vmul.f32 %v5133, %v5151
        %v5168 = vmul.f32 %v5134, %v5151
        %v5169 = vmul.f32 %v5135, %v5151
        %v5170 = vmul.f32 %v5136, %v5151
        %v5171 = vmul.f32 %v5137, %v5151
        %v5172 = vmul.f32 %v5138, %v5151
        %v5173 = vmul.f32 %v5139, %v5151
        %v5174 = vmul.f32 %v5140, %v5151
        %v5175 = vmul.f32 %v5141, %v5151
        %v5176 = vmul.f32 %v5142, %v5151
        %v5177 = vmul.f32 %v5143, %v5151
        %v5178 = vmul.f32 %v5144, %v5151
        %v5179 = vmul.f32 %v5145, %v5151
        %v5180 = vmul.f32 %v5146, %v5151
        %v5181 = vmul.f32 %v5147, %v5151
        %v5182 = vmul.f32 %v5148, %v5151
        %v5183 = vmul.f32 %v5149, %v5151
        %v5184 = vadd.f32 %v5152, %v324
        %v5185 = vadd.f32 %v5153, %v325
        %v5186 = vadd.f32 %v5154, %v326
        %v5187 = vadd.f32 %v5155, %v327
        %v5188 = vadd.f32 %v5156, %v328
        %v5189 = vadd.f32 %v5157, %v329
        %v5190 = vadd.f32 %v5158, %v330
        %v5191 = vadd.f32 %v5159, %v331
        %v5192 = vadd.f32 %v5160, %v332
        %v5193 = vadd.f32 %v5161, %v333
        %v5194 = vadd.f32 %v5162, %v334
        %v5195 = vadd.f32 %v5163, %v335
        %v5196 = vadd.f32 %v5164, %v336
        %v5197 = vadd.f32 %v5165, %v337
        %v5198 = vadd.f32 %v5166, %v338
        %v5199 = vadd.f32 %v5167, %v339
        %v5200 = vadd.f32 %v5168, %v340
        %v5201 = vadd.f32 %v5169, %v341
        %v5202 = vadd.f32 %v5170, %v342
        %v5203 = vadd.f32 %v5171, %v343
        %v5204 = vadd.f32 %v5172, %v344
        %v5205 = vadd.f32 %v5173, %v345
        %v5206 = vadd.f32 %v5174, %v346
        %v5207 = vadd.f32 %v5175, %v347
        %v5208 = vadd.f32 %v5176, %v348
        %v5209 = vadd.f32 %v5177, %v349
        %v5210 = vadd.f32 %v5178, %v350
        %v5211 = vadd.f32 %v5179, %v351
        %v5212 = vadd.f32 %v5180, %v352
        %v5213 = vadd.f32 %v5181, %v353
        %v5214 = vadd.f32 %v5182, %v354
        %v5215 = vadd.f32 %v5183, %v355
        %5216 = vst [vmem:[%s247] sm:$0xff] %v5184
        %5217 = vst [vmem:[%s247 + $0x8] sm:$0xff] %v5185
        %5218 = vst [vmem:[%s247 + $0x10] sm:$0xff] %v5186
        %5219 = vst [vmem:[%s247 + $0x18] sm:$0xff] %v5187
        %5220 = vst [vmem:[%s247 + $0x20] sm:$0xff] %v5188
        %5221 = vst [vmem:[%s247 + $0x28] sm:$0xff] %v5189
        %5222 = vst [vmem:[%s247 + $0x30] sm:$0xff] %v5190
        %5223 = vst [vmem:[%s247 + $0x38] sm:$0xff] %v5191
        %5224 = vst [vmem:[%s247 + $0x40] sm:$0xff] %v5192
        %5225 = vst [vmem:[%s247 + $0x48] sm:$0xff] %v5193
        %5226 = vst [vmem:[%s247 + $0x50] sm:$0xff] %v5194
        %5227 = vst [vmem:[%s247 + $0x58] sm:$0xff] %v5195
        %5228 = vst [vmem:[%s247 + $0x60] sm:$0xff] %v5196
        %5229 = vst [vmem:[%s247 + $0x68] sm:$0xff] %v5197
        %5230 = vst [vmem:[%s247 + $0x70] sm:$0xff] %v5198
        %5231 = vst [vmem:[%s247 + $0x78] sm:$0xff] %v5199
        %5232 = vst [vmem:[%s247 + $0x80] sm:$0xff] %v5200
        %5233 = vst [vmem:[%s247 + $0x88] sm:$0xff] %v5201
        %5234 = vst [vmem:[%s247 + $0x90] sm:$0xff] %v5202
        %5235 = vst [vmem:[%s247 + $0x98] sm:$0xff] %v5203
        %5236 = vst [vmem:[%s247 + $0xa0] sm:$0xff] %v5204
        %5237 = vst [vmem:[%s247 + $0xa8] sm:$0xff] %v5205
        %5238 = vst [vmem:[%s247 + $0xb0] sm:$0xff] %v5206
        %5239 = vst [vmem:[%s247 + $0xb8] sm:$0xff] %v5207
        %5240 = vst [vmem:[%s247 + $0xc0] sm:$0xff] %v5208
        %5241 = vst [vmem:[%s247 + $0xc8] sm:$0xff] %v5209
        %5242 = vst [vmem:[%s247 + $0xd0] sm:$0xff] %v5210
        %5243 = vst [vmem:[%s247 + $0xd8] sm:$0xff] %v5211
        %5244 = vst [vmem:[%s247 + $0xe0] sm:$0xff] %v5212
        %5245 = vst [vmem:[%s247 + $0xe8] sm:$0xff] %v5213
        %5246 = vst [vmem:[%s247 + $0xf0] sm:$0xff] %v5214
        %5247 = vst [vmem:[%s247 + $0xf8] sm:$0xff] %v5215
        %s5248 = sand.u32 %s139, 1
        %s5249 = scalar_lea.sflag [#allocation5], %s5248
        %s5250 = sand.u32 %s139, 1
        %s5251 = smul.addr %s5250, 256
        %s5252 = scalar_lea.vmem [#allocation8], %s5251
        // Predicated region
        $region49: #{tpu_custom_call.1} parent=39 // pred_check
          %p5253 = pneg %p149
        $region50: #{tpu_custom_call.1} parent=39 // pred_check_branch
          %5255 = sbr.rel (%p5253) target = $region52
        $region51: #{tpu_custom_call.1} parent=39 // pred_region
          %s5257 = ssub.s32 4096, 4096
          %5258 = vsyncadd %s5249, %s5257
          %s5259 = smul.addr %s21, 32
          %s5260 = smul.addr %s5259, 128
          %s5261 = scalar_lea.hbm %s5, %s5260
          %s5262 = sshll.u32 %s5252, 4
          %s5263 = int_to_ptr.vmem [resolvable:$true] %s5262
          %5268 = dma.vmem_to_hbm [thread:$0]  %s5263, 4096, %s5261, %s5249, 128, 128, 8
        $region52: #{tpu_custom_call.1} parent=39 // pred_fallthru
          _
      $region40: #{tpu_custom_call.1} parent=5 // pred_fallthru
        _
      %p5269 = scmp.le.s32.totalorder 2, %s16
      // Predicated region
      $region53: #{tpu_custom_call.1} parent=5 // pred_check
        %p5270 = pneg %p5269
      $region54: #{tpu_custom_call.1} parent=5 // pred_check_branch
        %5272 = sbr.rel (%p5270) target = $region56
      $region55: #{tpu_custom_call.1} parent=5 // pred_region
        %s5273 = ssub.s32 %s16, 2
        // Predicated region
        $region57: #{tpu_custom_call.1} parent=55 // pred_check
          %p5274 = pneg %p155
        $region58: #{tpu_custom_call.1} parent=55 // pred_check_branch
          %5276 = sbr.rel (%p5274) target = $region60
        $region59: #{tpu_custom_call.1} parent=55 // pred_region
          %s5277 = sand.u32 %s140, 1
          %s5278 = scalar_lea.sflag [#allocation5], %s5277
          %s5279 = sand.u32 %s140, 1
          %s5280 = smul.addr %s5279, 256
          %s5281 = scalar_lea.vmem [#allocation8], %s5280
          %5282 = dma.done %s5278, 4096
        $region60: #{tpu_custom_call.1} parent=55 // pred_fallthru
          _
      $region56: #{tpu_custom_call.1} parent=5 // pred_fallthru
        _
    $region6: #{tpu_custom_call.1} parent=1 // loop_footer
      %s20 = sadd.s32 1, %s16
    $region7: #{tpu_custom_call.1} parent=1 // loop_footer_branch
      %15 = sbr.rel target = $region3
    $region8: #{tpu_custom_call.1} parent=1 // loop_exit
      _
    %5283 = vsyncpa [#allocation4], 1
    %s5284 = scalar_lea.sflag [#allocation4], 1
    %5285 = vsyncpa %s5284, 1
    %5286 = vsyncpa [#allocation7], 1
    %5287 = vsyncpa [#allocation5], 1
    %s5288 = scalar_lea.sflag [#allocation5], 1
    %5289 = vsyncpa %s5288, 1

</llo_original>
